<compile_context>
chip_gen: v6e
topology: v6e:2x2x1
jax: 0.10.0
libtpu: 0.0.40
codegen_flags: <defaults>
</compile_context>

<pallas_src>
import functools

import jax
import jax.numpy as jnp
import numpy as np
from jax.experimental import pallas as pl
from jax.experimental.pallas import tpu as pltpu

HIDDEN = 64  # every DynamicEdgeConv outputs 64 channels

_BIG = 1e30                                                         # cross-graph sentinel
_BIG_BITS = int(np.asarray(1e29, np.float32).view(np.int32).item())  # validity threshold
_SEL_BITS = (1 << 31) - 1                                            # > bits(1e30): "already selected"


# ----------------------------------------------------------------------------- kernels
def _edge_conv_kernel(brow_ref, bcol_ref, sqr_ref, xa_ref, xb_ref,
                      w1q_ref, w1r_ref, w2_ref, b2_ref, out_ref,
                      *, k, tm, idx_bits):
    """One DynamicEdgeConv for a TM-row tile of query nodes:
       kNN (exact f32 distances, same-graph only) + MLP([x_i, x_j - x_i]) + max-agg."""
    f32, bf16, i32 = jnp.float32, jnp.bfloat16, jnp.int32
    xa = xa_ref[...]                                    # [TM, C+1] = [x_i | 1]
    xb = xb_ref[...]                                    # [N,  C+1] = [-2 x_j | ||x_j||^2]
    n = xb.shape[0]

    # First edge-MLP layer with eval-mode BN folded into the (augmented) weights:
    #   h_pre = x_i @ W1q' + b1' + x_j @ W1r'
    q = jnp.dot(xa, w1q_ref[...], preferred_element_type=f32)                 # [TM, 64]
    r = jnp.dot(xb, w1r_ref[...], preferred_element_type=f32).astype(bf16)    # [N, 64]

    # Exact squared Euclidean distance (>= 0), cross-graph candidates masked out.
    dist = jax.lax.dot_general(xa, xb, (((1,), (1,)), ((), ())),
                               preferred_element_type=f32) + sqr_ref[...]     # [TM, N]
    dist = jnp.where(brow_ref[...] == bcol_ref[...], dist, f32(_BIG))

    # Pack (distance, column) into one order-preserving int32 key: for non-negative f32
    # the bit pattern is monotonic, so a single min-reduce gives both min and argmin.
    col = jax.lax.broadcasted_iota(i32, (tm, n), 1)
    key = (pltpu.bitcast(dist, i32) & i32(~((1 << idx_bits) - 1))) | col

    w2 = w2_ref[...]                                    # [64, 64] bf16
    b2 = b2_ref[...]                                    # [1, 64]  f32
    acc = None
    # TODO(synk): for k >> 8 switch to lax.fori_loop(unroll=2..4) with (acc, key) carry.
    for j in range(k):  # iterative selection of the k nearest neighbours
        minkey = jnp.min(key, axis=1, keepdims=True)                          # [TM, 1]
        eq = key == minkey                              # unique (column is in the key)
        onehot = eq.astype(f32).astype(bf16)                                  # [TM, N]
        rj = jnp.dot(onehot, r, preferred_element_type=f32)                   # gather W1r'.x_j
        h = jnp.maximum(q + rj, 0.0).astype(bf16)                             # Lin1+BN+ReLU
        h2 = jnp.dot(h, w2, preferred_element_type=f32) + b2                  # Lin2
        if j == 0:
            acc = h2                                    # the self-neighbour always exists
        else:
            valid = minkey < i32(_BIG_BITS)             # graph ran out of same-graph nodes
            acc = jnp.where(valid, jnp.maximum(acc, h2), acc)
        key = jnp.where(eq, i32(_SEL_BITS), key)        # exclude the chosen neighbour
    out_ref[...] = acc


def _head_kernel(x_ref, w1_ref, b1_ref, w2_ref, b2_ref, w3_ref, b3_ref,
                 w4_ref, b4_ref, out_ref):
    """MLP([192, 1024, 256, 128, out_pad], norm=None) + log_softmax, per row tile.
       Weights are bf16 MXU operands; padded logits carry bias -1e30 (no softmax mass)."""
    f32, bf16 = jnp.float32, jnp.bfloat16
    h = x_ref[...].astype(bf16)
    h = jnp.maximum(jnp.dot(h, w1_ref[...], preferred_element_type=f32)
                    + b1_ref[...], 0.0).astype(bf16)
    h = jnp.maximum(jnp.dot(h, w2_ref[...], preferred_element_type=f32)
                    + b2_ref[...], 0.0).astype(bf16)
    h = jnp.maximum(jnp.dot(h, w3_ref[...], preferred_element_type=f32)
                    + b3_ref[...], 0.0).astype(bf16)
    o = jnp.dot(h, w4_ref[...], preferred_element_type=f32) + b4_ref[...]
    m = jnp.max(o, axis=1, keepdims=True)
    lse = jnp.log(jnp.sum(jnp.exp(o - m), axis=1, keepdims=True))
    out_ref[...] = o - m - lse


# ----------------------------------------------------------------------------- tiling
def _vmem_capacity_bytes():
    try:
        return int(pltpu.get_tpu_info().vmem_capacity_bytes)
    except Exception:
        return 64 * 1024 * 1024   # v7x per-TensorCore VMEM (most restrictive chip)


def _mosaic_params(est_vmem_bytes):
    cap = _vmem_capacity_bytes()
    limit = min(max(32 * 1024 * 1024, int(est_vmem_bytes * 1.25)), int(cap * 0.9))
    return pltpu.CompilerParams(dimension_semantics=("parallel",),
                                vmem_limit_bytes=limit)


def _pick_row_tile(n, per_row_bytes, resident_bytes, row_tile=None, target=256):
    """Largest row tile (multiple of 8 dividing n) that fits the VMEM budget, preferring
    >= 2 grid programs so the 'parallel' row axis can span both v7x TensorCores."""
    if row_tile is not None:
        assert n % row_tile == 0 and (row_tile % 8 == 0 or row_tile == n)
        return row_tile
    budget = int(_vmem_capacity_bytes() * 0.4) - resident_bytes
    cap = min(target, n // 2 if n >= 16 else n,
              max(8, budget // max(per_row_bytes, 1)))
    for tm in range(max(cap, 1), 0, -1):
        if n % tm == 0 and (tm % 8 == 0 or tm == n):
            return tm
    return n   # no aligned divisor of n: single full tile (correct, VMEM-heavy)


# ----------------------------------------------------------------------------- wrappers
def dynamic_edge_conv(x, brow, bcol, params, k, row_tile=None):
    n, c = x.shape
    assert k >= 1
    w1, b1, bn_scale, bn_bias, w2, b2 = params
    w1a, w1b = w1[:c], w1[c:]                       # split [2C,64] -> two [C,64]
    # Fold eval-mode BatchNorm into the first linear; augment with the bias row so
    # q = [x|1] @ W1q' and r = [-2x|sq] @ W1r' need no extra adds in-kernel.
    w1q = jnp.concatenate([(w1a - w1b) * bn_scale, b1 * bn_scale + bn_bias], axis=0)
    w1r = jnp.concatenate([w1b * bn_scale * (-0.5),
                           jnp.zeros((1, HIDDEN), jnp.float32)], axis=0)
    w2b = w2.astype(jnp.bfloat16)

    sq = jnp.sum(x * x, axis=1, keepdims=True)                       # [N, 1]
    xa = jnp.concatenate([x, jnp.ones_like(sq)], axis=1)             # [N, C+1] = [x | 1]
    xb = jnp.concatenate([-2.0 * x, sq], axis=1)                     # [N, C+1]
    c1 = c + 1

    idx_bits = max(1, (n - 1).bit_length())
    assert idx_bits <= 20, "packed kNN key supports up to 2^20 nodes per call"

    per_row = 4 * n * 4 + 4 * (2 * c1 + 10 * HIDDEN)   # dist/key/col/onehot + activations
    resident = 4 * n * (2 * c1 + 1) + 6 * n * HIDDEN   # xb (x2 buffers) + bcol + r
    tm = _pick_row_tile(n, per_row, resident, row_tile)
    grid = (n // tm,)

    kernel = functools.partial(_edge_conv_kernel, k=k, tm=tm, idx_bits=idx_bits)
    return pl.pallas_call(
        kernel,
        out_shape=jax.ShapeDtypeStruct((n, HIDDEN), jnp.float32),
        grid_spec=pltpu.PrefetchScalarGridSpec(
            num_scalar_prefetch=0, grid=grid,
            in_specs=[pl.BlockSpec((tm, 1), lambda i: (i, 0)),           # graph id (rows)
                      pl.BlockSpec((1, n), lambda i: (0, 0)),            # graph id (cols)
                      pl.BlockSpec((tm, 1), lambda i: (i, 0)),           # ||x_i||^2
                      pl.BlockSpec((tm, c1), lambda i: (i, 0)),          # [x_i | 1]
                      pl.BlockSpec((n, c1), lambda i: (0, 0)),           # [-2 x_j | sq_j]
                      pl.BlockSpec((c1, HIDDEN), lambda i: (0, 0)),      # W1q' (+ bias row)
                      pl.BlockSpec((c1, HIDDEN), lambda i: (0, 0)),      # W1r'
                      pl.BlockSpec((HIDDEN, HIDDEN), lambda i: (0, 0)),  # W2 (bf16)
                      pl.BlockSpec((1, HIDDEN), lambda i: (0, 0))],      # b2
            out_specs=pl.BlockSpec((tm, HIDDEN), lambda i: (i, 0))),
        compiler_params=_mosaic_params(resident + per_row * tm),
    )(brow, bcol, sq, xa, xb, w1q, w1r, w2b, b2)


def mlp_head(x, params, row_tile=None):
    n, cin = x.shape
    (w1, b1), (w2, b2), (w3, b3), (w4, b4) = params
    out_c = w4.shape[1]
    pad_c = max(128, -(-out_c // 128) * 128)
    # Zero-pad the final layer to a lane-dense 128-wide output; padded logits get bias
    # -1e30 so they carry no softmax mass, then slice back to out_c in the wrapper.
    w4p = jnp.concatenate([w4, jnp.zeros((w4.shape[0], pad_c - out_c), w4.dtype)], axis=1)
    b4p = jnp.concatenate([b4, jnp.full((1, pad_c - out_c), -_BIG, jnp.float32)], axis=1)
    ws = [w.astype(jnp.bfloat16) for w in (w1, w2, w3, w4p)]

    dims = (cin, 1024, 256, 128, pad_c)
    resident = 4 * sum(a * b for a, b in zip(dims[:-1], dims[1:]))   # bf16 weights x2 buf
    per_row = 8 * sum(dims)
    tm = _pick_row_tile(n, per_row, resident, row_tile)

    def full(shape):
        return pl.BlockSpec(tuple(shape), lambda i: (0, 0))

    out = pl.pallas_call(
        _head_kernel,
        out_shape=jax.ShapeDtypeStruct((n, pad_c), jnp.float32),
        grid_spec=pltpu.PrefetchScalarGridSpec(
            num_scalar_prefetch=0, grid=(n // tm,),
            in_specs=[pl.BlockSpec((tm, cin), lambda i: (i, 0)),
                      full(ws[0].shape), full(b1.shape),
                      full(ws[1].shape), full(b2.shape),
                      full(ws[2].shape), full(b3.shape),
                      full(ws[3].shape), full(b4p.shape)],
            out_specs=pl.BlockSpec((tm, pad_c), lambda i: (i, 0))),
        compiler_params=_mosaic_params(resident + per_row * tm),
    )(x, ws[0], b1, ws[1], b2, ws[2], b3, ws[3], b4p)
    return out[:, :out_c]


def dgcnn_forward(params, feats, pos, batch, k, row_tile=None, head_row_tile=None):
    feats = feats.astype(jnp.float32)
    pos = pos.astype(jnp.float32)
    x0 = jnp.concatenate([feats, pos], axis=-1)                  # [N, in_channels]
    bf = batch.astype(jnp.float32)
    brow = bf[:, None]                                           # [N, 1]
    bcol = bf[None, :]                                           # [1, N]
    x1 = dynamic_edge_conv(x0, brow, bcol, params["conv1"], k, row_tile)   # [N, 64]
    x2 = dynamic_edge_conv(x1, brow, bcol, params["conv2"], k, row_tile)   # [N, 64]
    x3 = dynamic_edge_conv(x2, brow, bcol, params["conv3"], k, row_tile)   # [N, 64]
    xcat = jnp.concatenate([x1, x2, x3], axis=1)                 # [N, 192]
    return mlp_head(xcat, params["mlp"], head_row_tile)          # [N, out_channels]


# ----------------------------------------------------------------------------- params
def _init_linear(key, fan_in, fan_out):
    # PyTorch nn.Linear default init: U(-1/sqrt(fan_in), 1/sqrt(fan_in)); W stored [in, out].
    k1, k2 = jax.random.split(key)
    bound = 1.0 / jnp.sqrt(jnp.float32(fan_in))
    w = jax.random.uniform(k1, (fan_in, fan_out), jnp.float32, -bound, bound)
    b = jax.random.uniform(k2, (1, fan_out), jnp.float32, -bound, bound)
    return w, b


def _init_edge_mlp(key, in_dim):
    # MLP([2*in_dim, 64, 64]): Lin -> BN -> ReLU -> Lin (plain last)
    k1, k2 = jax.random.split(key)
    w1, b1 = _init_linear(k1, 2 * in_dim, HIDDEN)
    w2, b2 = _init_linear(k2, HIDDEN, HIDDEN)
    # fresh BatchNorm1d (eval mode): gamma=1, beta=0, mean=0, var=1, eps=1e-5
    gamma = jnp.ones((1, HIDDEN), jnp.float32)
    beta = jnp.zeros((1, HIDDEN), jnp.float32)
    mean = jnp.zeros((1, HIDDEN), jnp.float32)
    var = jnp.ones((1, HIDDEN), jnp.float32)
    scale = gamma / jnp.sqrt(var + 1e-5)
    bias = beta - mean * scale
    return (w1, b1, scale, bias, w2, b2)


def init_dgcnn_params(key, in_channels, out_channels):
    ks = jax.random.split(key, 7)
    return {
        "conv1": _init_edge_mlp(ks[0], in_channels),
        "conv2": _init_edge_mlp(ks[1], HIDDEN),
        "conv3": _init_edge_mlp(ks[2], HIDDEN),
        "mlp": (
            _init_linear(ks[3], 3 * HIDDEN, 1024),
            _init_linear(ks[4], 1024, 256),
            _init_linear(ks[5], 256, 128),
            _init_linear(ks[6], 128, out_channels),
        ),
    }


# ----------------------------------------------------------------------------- main
if __name__ == "__main__":
    key = jax.random.PRNGKey(0)
    k_feat, k_pos, k_param = jax.random.split(key, 3)

    N = 64                      # 2 graphs of 32 nodes each
    feat_dim, pos_dim = 3, 3
    in_channels = feat_dim + pos_dim
    out_channels = 8
    k_nn = 4

    feats = jax.random.normal(k_feat, (N, feat_dim), jnp.float32)
    pos = jax.random.normal(k_pos, (N, pos_dim), jnp.float32)
    batch = jnp.repeat(jnp.arange(2, dtype=jnp.int32), N // 2)

    params = init_dgcnn_params(k_param, in_channels, out_channels)

    # default VMEM-aware tile picker -> 32-row tiles (2 grid programs) at this demo size
    fwd = jax.jit(functools.partial(dgcnn_forward, k=k_nn))
    out = jax.block_until_ready(fwd(params, feats, pos, batch))

    assert out.shape == (N, out_channels), out.shape
    assert bool(jnp.all(jnp.isfinite(out)))
    # log_softmax rows must exponentiate-sum to 1
    assert bool(jnp.allclose(jnp.sum(jnp.exp(out), axis=1), 1.0, atol=1e-3))

    print("KERNEL_OK")
</pallas_src>

<mosaic_0001>
module attributes {stable_mosaic.version = 11 : i64} {
  func.func @_edge_conv_kernel(%arg0: i32, %arg1: memref<32x1xf32, #tpu.memory_space<vmem>>, %arg2: memref<1x64xf32, #tpu.memory_space<vmem>>, %arg3: memref<32x1xf32, #tpu.memory_space<vmem>>, %arg4: memref<32x7xf32, #tpu.memory_space<vmem>>, %arg5: memref<64x7xf32, #tpu.memory_space<vmem>>, %arg6: memref<7x64xf32, #tpu.memory_space<vmem>>, %arg7: memref<7x64xf32, #tpu.memory_space<vmem>>, %arg8: memref<64x64xbf16, #tpu.memory_space<vmem>>, %arg9: memref<1x64xf32, #tpu.memory_space<vmem>>, %arg10: memref<32x64xf32, #tpu.memory_space<vmem>>) attributes {dimension_semantics = [#tpu.dimension_semantics<parallel>], iteration_bounds = array<i64: 2>, scalar_prefetch = 0 : i64, scratch_operands = 0 : i64, tpu.core_type = #tpu.core_type<tc>, window_params = [{transform_indices = @transform_0, window_bounds = array<i64: 32, 1>}, {pipeline_mode = #tpu.pipeline_mode<synchronous>, transform_indices = @transform_1, window_bounds = array<i64: 1, 64>}, {transform_indices = @transform_2, window_bounds = array<i64: 32, 1>}, {transform_indices = @transform_3, window_bounds = array<i64: 32, 7>}, {pipeline_mode = #tpu.pipeline_mode<synchronous>, transform_indices = @transform_4, window_bounds = array<i64: 64, 7>}, {pipeline_mode = #tpu.pipeline_mode<synchronous>, transform_indices = @transform_5, window_bounds = array<i64: 7, 64>}, {pipeline_mode = #tpu.pipeline_mode<synchronous>, transform_indices = @transform_6, window_bounds = array<i64: 7, 64>}, {pipeline_mode = #tpu.pipeline_mode<synchronous>, transform_indices = @transform_7, window_bounds = array<i64: 64, 64>}, {pipeline_mode = #tpu.pipeline_mode<synchronous>, transform_indices = @transform_8, window_bounds = array<i64: 1, 64>}, {transform_indices = @transform_9, window_bounds = array<i64: 32, 64>}]} {
    %c0 = arith.constant 0 : index
    %c0_0 = arith.constant 0 : index
    %0 = vector.load %arg4[%c0, %c0_0] : memref<32x7xf32, #tpu.memory_space<vmem>>, vector<32x7xf32>
    %c0_1 = arith.constant 0 : index
    %c0_2 = arith.constant 0 : index
    %1 = vector.load %arg5[%c0_1, %c0_2] : memref<64x7xf32, #tpu.memory_space<vmem>>, vector<64x7xf32>
    %c0_3 = arith.constant 0 : index
    %c0_4 = arith.constant 0 : index
    %2 = vector.load %arg6[%c0_3, %c0_4] : memref<7x64xf32, #tpu.memory_space<vmem>>, vector<7x64xf32>
    %cst = arith.constant dense<0.000000e+00> : vector<32x64xf32>
    %3 = tpu.matmul %0, %2, %cst {dimension_numbers = #tpu.dot_dimension_numbers<[1], [0], [0], [1], [0, 0, 1, 1], [], []>} : vector<32x7xf32>, vector<7x64xf32>, vector<32x64xf32> -> vector<32x64xf32>
    %c0_5 = arith.constant 0 : index
    %c0_6 = arith.constant 0 : index
    %4 = vector.load %arg7[%c0_5, %c0_6] : memref<7x64xf32, #tpu.memory_space<vmem>>, vector<7x64xf32>
    %cst_7 = arith.constant dense<0.000000e+00> : vector<64x64xf32>
    %5 = tpu.matmul %1, %4, %cst_7 {dimension_numbers = #tpu.dot_dimension_numbers<[1], [0], [0], [1], [0, 0, 1, 1], [], []>} : vector<64x7xf32>, vector<7x64xf32>, vector<64x64xf32> -> vector<64x64xf32>
    %6 = arith.truncf %5 : vector<64x64xf32> to vector<64x64xbf16>
    %cst_8 = arith.constant dense<0.000000e+00> : vector<32x64xf32>
    %7 = tpu.matmul %0, %1, %cst_8 {dimension_numbers = #tpu.dot_dimension_numbers<[1], [1], [0], [0], [0, 0, 1, 0], [], []>} : vector<32x7xf32>, vector<64x7xf32>, vector<32x64xf32> -> vector<32x64xf32>
    %c0_9 = arith.constant 0 : index
    %c0_10 = arith.constant 0 : index
    %8 = vector.load %arg3[%c0_9, %c0_10] : memref<32x1xf32, #tpu.memory_space<vmem>>, vector<32x1xf32>
    %9 = vector.broadcast %8 : vector<32x1xf32> to vector<32x64xf32>
    %10 = arith.addf %7, %9 : vector<32x64xf32>
    %c0_11 = arith.constant 0 : index
    %c0_12 = arith.constant 0 : index
    %11 = vector.load %arg1[%c0_11, %c0_12] : memref<32x1xf32, #tpu.memory_space<vmem>>, vector<32x1xf32>
    %c0_13 = arith.constant 0 : index
    %c0_14 = arith.constant 0 : index
    %12 = vector.load %arg2[%c0_13, %c0_14] : memref<1x64xf32, #tpu.memory_space<vmem>>, vector<1x64xf32>
    %13 = vector.broadcast %11 : vector<32x1xf32> to vector<32x64xf32>
    %14 = vector.broadcast %12 : vector<1x64xf32> to vector<32x64xf32>
    %15 = arith.cmpf oeq, %13, %14 : vector<32x64xf32>
    %cst_15 = arith.constant 1.000000e+30 : f32
    %16 = vector.broadcast %cst_15 : f32 to vector<32x64xf32>
    %17 = arith.select %15, %10, %16 : vector<32x64xi1>, vector<32x64xf32>
    %18 = tpu.iota {dimensions = array<i32: 1>} : vector<32x64xi32>
    %19 = tpu.bitcast %17 : vector<32x64xf32> -> vector<32x64xi32>
    %c-64_i32 = arith.constant -64 : i32
    %20 = vector.broadcast %c-64_i32 : i32 to vector<32x64xi32>
    %21 = arith.andi %19, %20 : vector<32x64xi32>
    %22 = arith.ori %21, %18 : vector<32x64xi32>
    %c0_16 = arith.constant 0 : index
    %c0_17 = arith.constant 0 : index
    %23 = vector.load %arg8[%c0_16, %c0_17] : memref<64x64xbf16, #tpu.memory_space<vmem>>, vector<64x64xbf16>
    %c0_18 = arith.constant 0 : index
    %c0_19 = arith.constant 0 : index
    %24 = vector.load %arg9[%c0_18, %c0_19] : memref<1x64xf32, #tpu.memory_space<vmem>>, vector<1x64xf32>
    %cst_20 = arith.constant dense<2147483647> : vector<32xi32>
    %25 = vector.multi_reduction <minsi>, %22, %cst_20 [1] : vector<32x64xi32> to vector<32xi32>
    %26 = vector.shape_cast %25 : vector<32xi32> to vector<32x1xi32>
    %27 = vector.broadcast %26 : vector<32x1xi32> to vector<32x64xi32>
    %28 = arith.cmpi eq, %22, %27 : vector<32x64xi32>
    %29 = arith.extui %28 : vector<32x64xi1> to vector<32x64xi32>
    %30 = arith.sitofp %29 : vector<32x64xi32> to vector<32x64xf32>
    %31 = arith.truncf %30 : vector<32x64xf32> to vector<32x64xbf16>
    %cst_21 = arith.constant dense<0.000000e+00> : vector<32x64xf32>
    %32 = tpu.matmul %31, %6, %cst_21 {dimension_numbers = #tpu.dot_dimension_numbers<[1], [0], [0], [1], [0, 0, 1, 1], [], []>} : vector<32x64xbf16>, vector<64x64xbf16>, vector<32x64xf32> -> vector<32x64xf32>
    %33 = arith.addf %3, %32 : vector<32x64xf32>
    %cst_22 = arith.constant 0.000000e+00 : f32
    %34 = vector.broadcast %cst_22 : f32 to vector<32x64xf32>
    %35 = arith.maximumf %33, %34 : vector<32x64xf32>
    %36 = arith.truncf %35 : vector<32x64xf32> to vector<32x64xbf16>
    %cst_23 = arith.constant dense<0.000000e+00> : vector<32x64xf32>
    %37 = tpu.matmul %36, %23, %cst_23 {dimension_numbers = #tpu.dot_dimension_numbers<[1], [0], [0], [1], [0, 0, 1, 1], [], []>} : vector<32x64xbf16>, vector<64x64xbf16>, vector<32x64xf32> -> vector<32x64xf32>
    %38 = vector.broadcast %24 : vector<1x64xf32> to vector<32x64xf32>
    %39 = arith.addf %37, %38 : vector<32x64xf32>
    %c2147483647_i32 = arith.constant 2147483647 : i32
    %40 = vector.broadcast %c2147483647_i32 : i32 to vector<32x64xi32>
    %41 = arith.select %28, %40, %22 : vector<32x64xi1>, vector<32x64xi32>
    %cst_24 = arith.constant dense<2147483647> : vector<32xi32>
    %42 = vector.multi_reduction <minsi>, %41, %cst_24 [1] : vector<32x64xi32> to vector<32xi32>
    %43 = vector.shape_cast %42 : vector<32xi32> to vector<32x1xi32>
    %44 = vector.broadcast %43 : vector<32x1xi32> to vector<32x64xi32>
    %45 = arith.cmpi eq, %41, %44 : vector<32x64xi32>
    %46 = arith.extui %45 : vector<32x64xi1> to vector<32x64xi32>
    %47 = arith.sitofp %46 : vector<32x64xi32> to vector<32x64xf32>
    %48 = arith.truncf %47 : vector<32x64xf32> to vector<32x64xbf16>
    %cst_25 = arith.constant dense<0.000000e+00> : vector<32x64xf32>
    %49 = tpu.matmul %48, %6, %cst_25 {dimension_numbers = #tpu.dot_dimension_numbers<[1], [0], [0], [1], [0, 0, 1, 1], [], []>} : vector<32x64xbf16>, vector<64x64xbf16>, vector<32x64xf32> -> vector<32x64xf32>
    %50 = arith.addf %3, %49 : vector<32x64xf32>
    %cst_26 = arith.constant 0.000000e+00 : f32
    %51 = vector.broadcast %cst_26 : f32 to vector<32x64xf32>
    %52 = arith.maximumf %50, %51 : vector<32x64xf32>
    %53 = arith.truncf %52 : vector<32x64xf32> to vector<32x64xbf16>
    %cst_27 = arith.constant dense<0.000000e+00> : vector<32x64xf32>
    %54 = tpu.matmul %53, %23, %cst_27 {dimension_numbers = #tpu.dot_dimension_numbers<[1], [0], [0], [1], [0, 0, 1, 1], [], []>} : vector<32x64xbf16>, vector<64x64xbf16>, vector<32x64xf32> -> vector<32x64xf32>
    %55 = vector.broadcast %24 : vector<1x64xf32> to vector<32x64xf32>
    %56 = arith.addf %54, %55 : vector<32x64xf32>
    %c1872858888_i32 = arith.constant 1872858888 : i32
    %57 = vector.broadcast %c1872858888_i32 : i32 to vector<32x1xi32>
    %58 = arith.cmpi slt, %43, %57 : vector<32x1xi32>
    %59 = arith.maximumf %39, %56 : vector<32x64xf32>
    %60 = vector.shape_cast %58 : vector<32x1xi1> to vector<32x1xi1>
    %61 = vector.broadcast %60 : vector<32x1xi1> to vector<32x64xi1>
    %62 = arith.select %61, %59, %39 : vector<32x64xi1>, vector<32x64xf32>
    %c2147483647_i32_28 = arith.constant 2147483647 : i32
    %63 = vector.broadcast %c2147483647_i32_28 : i32 to vector<32x64xi32>
    %64 = arith.select %45, %63, %41 : vector<32x64xi1>, vector<32x64xi32>
    %cst_29 = arith.constant dense<2147483647> : vector<32xi32>
    %65 = vector.multi_reduction <minsi>, %64, %cst_29 [1] : vector<32x64xi32> to vector<32xi32>
    %66 = vector.shape_cast %65 : vector<32xi32> to vector<32x1xi32>
    %67 = vector.broadcast %66 : vector<32x1xi32> to vector<32x64xi32>
    %68 = arith.cmpi eq, %64, %67 : vector<32x64xi32>
    %69 = arith.extui %68 : vector<32x64xi1> to vector<32x64xi32>
    %70 = arith.sitofp %69 : vector<32x64xi32> to vector<32x64xf32>
    %71 = arith.truncf %70 : vector<32x64xf32> to vector<32x64xbf16>
    %cst_30 = arith.constant dense<0.000000e+00> : vector<32x64xf32>
    %72 = tpu.matmul %71, %6, %cst_30 {dimension_numbers = #tpu.dot_dimension_numbers<[1], [0], [0], [1], [0, 0, 1, 1], [], []>} : vector<32x64xbf16>, vector<64x64xbf16>, vector<32x64xf32> -> vector<32x64xf32>
    %73 = arith.addf %3, %72 : vector<32x64xf32>
    %cst_31 = arith.constant 0.000000e+00 : f32
    %74 = vector.broadcast %cst_31 : f32 to vector<32x64xf32>
    %75 = arith.maximumf %73, %74 : vector<32x64xf32>
    %76 = arith.truncf %75 : vector<32x64xf32> to vector<32x64xbf16>
    %cst_32 = arith.constant dense<0.000000e+00> : vector<32x64xf32>
    %77 = tpu.matmul %76, %23, %cst_32 {dimension_numbers = #tpu.dot_dimension_numbers<[1], [0], [0], [1], [0, 0, 1, 1], [], []>} : vector<32x64xbf16>, vector<64x64xbf16>, vector<32x64xf32> -> vector<32x64xf32>
    %78 = vector.broadcast %24 : vector<1x64xf32> to vector<32x64xf32>
    %79 = arith.addf %77, %78 : vector<32x64xf32>
    %c1872858888_i32_33 = arith.constant 1872858888 : i32
    %80 = vector.broadcast %c1872858888_i32_33 : i32 to vector<32x1xi32>
    %81 = arith.cmpi slt, %66, %80 : vector<32x1xi32>
    %82 = arith.maximumf %62, %79 : vector<32x64xf32>
    %83 = vector.shape_cast %81 : vector<32x1xi1> to vector<32x1xi1>
    %84 = vector.broadcast %83 : vector<32x1xi1> to vector<32x64xi1>
    %85 = arith.select %84, %82, %62 : vector<32x64xi1>, vector<32x64xf32>
    %c2147483647_i32_34 = arith.constant 2147483647 : i32
    %86 = vector.broadcast %c2147483647_i32_34 : i32 to vector<32x64xi32>
    %87 = arith.select %68, %86, %64 : vector<32x64xi1>, vector<32x64xi32>
    %cst_35 = arith.constant dense<2147483647> : vector<32xi32>
    %88 = vector.multi_reduction <minsi>, %87, %cst_35 [1] : vector<32x64xi32> to vector<32xi32>
    %89 = vector.shape_cast %88 : vector<32xi32> to vector<32x1xi32>
    %90 = vector.broadcast %89 : vector<32x1xi32> to vector<32x64xi32>
    %91 = arith.cmpi eq, %87, %90 : vector<32x64xi32>
    %92 = arith.extui %91 : vector<32x64xi1> to vector<32x64xi32>
    %93 = arith.sitofp %92 : vector<32x64xi32> to vector<32x64xf32>
    %94 = arith.truncf %93 : vector<32x64xf32> to vector<32x64xbf16>
    %cst_36 = arith.constant dense<0.000000e+00> : vector<32x64xf32>
    %95 = tpu.matmul %94, %6, %cst_36 {dimension_numbers = #tpu.dot_dimension_numbers<[1], [0], [0], [1], [0, 0, 1, 1], [], []>} : vector<32x64xbf16>, vector<64x64xbf16>, vector<32x64xf32> -> vector<32x64xf32>
    %96 = arith.addf %3, %95 : vector<32x64xf32>
    %cst_37 = arith.constant 0.000000e+00 : f32
    %97 = vector.broadcast %cst_37 : f32 to vector<32x64xf32>
    %98 = arith.maximumf %96, %97 : vector<32x64xf32>
    %99 = arith.truncf %98 : vector<32x64xf32> to vector<32x64xbf16>
    %cst_38 = arith.constant dense<0.000000e+00> : vector<32x64xf32>
    %100 = tpu.matmul %99, %23, %cst_38 {dimension_numbers = #tpu.dot_dimension_numbers<[1], [0], [0], [1], [0, 0, 1, 1], [], []>} : vector<32x64xbf16>, vector<64x64xbf16>, vector<32x64xf32> -> vector<32x64xf32>
    %101 = vector.broadcast %24 : vector<1x64xf32> to vector<32x64xf32>
    %102 = arith.addf %100, %101 : vector<32x64xf32>
    %c1872858888_i32_39 = arith.constant 1872858888 : i32
    %103 = vector.broadcast %c1872858888_i32_39 : i32 to vector<32x1xi32>
    %104 = arith.cmpi slt, %89, %103 : vector<32x1xi32>
    %105 = arith.maximumf %85, %102 : vector<32x64xf32>
    %106 = vector.shape_cast %104 : vector<32x1xi1> to vector<32x1xi1>
    %107 = vector.broadcast %106 : vector<32x1xi1> to vector<32x64xi1>
    %108 = arith.select %107, %105, %85 : vector<32x64xi1>, vector<32x64xf32>
    %c0_40 = arith.constant 0 : index
    %c0_41 = arith.constant 0 : index
    %109 = vector.load %arg10[%c0_40, %c0_41] : memref<32x64xf32, #tpu.memory_space<vmem>>, vector<32x64xf32>
    tpu.vector_store %arg10[%c0_40, %c0_41], %108 {strides = array<i32>} : memref<32x64xf32, #tpu.memory_space<vmem>>, vector<32x64xf32>,
    return
  }
  func.func @transform_0(%arg0: i32) -> (i32, i32) {
    %c0_i32 = arith.constant 0 : i32
    %c0_i32_0 = arith.constant 0 : i32
    return %arg0, %c0_i32 : i32, i32
  }
  func.func @transform_1(%arg0: i32) -> (i32, i32) {
    %c0_i32 = arith.constant 0 : i32
    %c0_i32_0 = arith.constant 0 : i32
    %c0_i32_1 = arith.constant 0 : i32
    return %c0_i32, %c0_i32_0 : i32, i32
  }
  func.func @transform_2(%arg0: i32) -> (i32, i32) {
    %c0_i32 = arith.constant 0 : i32
    %c0_i32_0 = arith.constant 0 : i32
    return %arg0, %c0_i32 : i32, i32
  }
  func.func @transform_3(%arg0: i32) -> (i32, i32) {
    %c0_i32 = arith.constant 0 : i32
    %c0_i32_0 = arith.constant 0 : i32
    return %arg0, %c0_i32 : i32, i32
  }
  func.func @transform_4(%arg0: i32) -> (i32, i32) {
    %c0_i32 = arith.constant 0 : i32
    %c0_i32_0 = arith.constant 0 : i32
    %c0_i32_1 = arith.constant 0 : i32
    return %c0_i32, %c0_i32_0 : i32, i32
  }
  func.func @transform_5(%arg0: i32) -> (i32, i32) {
    %c0_i32 = arith.constant 0 : i32
    %c0_i32_0 = arith.constant 0 : i32
    %c0_i32_1 = arith.constant 0 : i32
    return %c0_i32, %c0_i32_0 : i32, i32
  }
  func.func @transform_6(%arg0: i32) -> (i32, i32) {
    %c0_i32 = arith.constant 0 : i32
    %c0_i32_0 = arith.constant 0 : i32
    %c0_i32_1 = arith.constant 0 : i32
    return %c0_i32, %c0_i32_0 : i32, i32
  }
  func.func @transform_7(%arg0: i32) -> (i32, i32) {
    %c0_i32 = arith.constant 0 : i32
    %c0_i32_0 = arith.constant 0 : i32
    %c0_i32_1 = arith.constant 0 : i32
    return %c0_i32, %c0_i32_0 : i32, i32
  }
  func.func @transform_8(%arg0: i32) -> (i32, i32) {
    %c0_i32 = arith.constant 0 : i32
    %c0_i32_0 = arith.constant 0 : i32
    %c0_i32_1 = arith.constant 0 : i32
    return %c0_i32, %c0_i32_0 : i32, i32
  }
  func.func @transform_9(%arg0: i32) -> (i32, i32) {
    %c0_i32 = arith.constant 0 : i32
    %c0_i32_0 = arith.constant 0 : i32
    return %arg0, %c0_i32 : i32, i32
  }
}

module attributes {stable_mosaic.version = 11 : i64} {
  func.func @_edge_conv_kernel(%arg0: i32, %arg1: memref<32x1xf32, #tpu.memory_space<vmem>>, %arg2: memref<1x64xf32, #tpu.memory_space<vmem>>, %arg3: memref<32x1xf32, #tpu.memory_space<vmem>>, %arg4: memref<32x65xf32, #tpu.memory_space<vmem>>, %arg5: memref<64x65xf32, #tpu.memory_space<vmem>>, %arg6: memref<65x64xf32, #tpu.memory_space<vmem>>, %arg7: memref<65x64xf32, #tpu.memory_space<vmem>>, %arg8: memref<64x64xbf16, #tpu.memory_space<vmem>>, %arg9: memref<1x64xf32, #tpu.memory_space<vmem>>, %arg10: memref<32x64xf32, #tpu.memory_space<vmem>>) attributes {dimension_semantics = [#tpu.dimension_semantics<parallel>], iteration_bounds = array<i64: 2>, scalar_prefetch = 0 : i64, scratch_operands = 0 : i64, tpu.core_type = #tpu.core_type<tc>, window_params = [{transform_indices = @transform_0, window_bounds = array<i64: 32, 1>}, {pipeline_mode = #tpu.pipeline_mode<synchronous>, transform_indices = @transform_1, window_bounds = array<i64: 1, 64>}, {transform_indices = @transform_2, window_bounds = array<i64: 32, 1>}, {transform_indices = @transform_3, window_bounds = array<i64: 32, 65>}, {pipeline_mode = #tpu.pipeline_mode<synchronous>, transform_indices = @transform_4, window_bounds = array<i64: 64, 65>}, {pipeline_mode = #tpu.pipeline_mode<synchronous>, transform_indices = @transform_5, window_bounds = array<i64: 65, 64>}, {pipeline_mode = #tpu.pipeline_mode<synchronous>, transform_indices = @transform_6, window_bounds = array<i64: 65, 64>}, {pipeline_mode = #tpu.pipeline_mode<synchronous>, transform_indices = @transform_7, window_bounds = array<i64: 64, 64>}, {pipeline_mode = #tpu.pipeline_mode<synchronous>, transform_indices = @transform_8, window_bounds = array<i64: 1, 64>}, {transform_indices = @transform_9, window_bounds = array<i64: 32, 64>}]} {
    %c0 = arith.constant 0 : index
    %c0_0 = arith.constant 0 : index
    %0 = vector.load %arg4[%c0, %c0_0] : memref<32x65xf32, #tpu.memory_space<vmem>>, vector<32x65xf32>
    %c0_1 = arith.constant 0 : index
    %c0_2 = arith.constant 0 : index
    %1 = vector.load %arg5[%c0_1, %c0_2] : memref<64x65xf32, #tpu.memory_space<vmem>>, vector<64x65xf32>
    %c0_3 = arith.constant 0 : index
    %c0_4 = arith.constant 0 : index
    %2 = vector.load %arg6[%c0_3, %c0_4] : memref<65x64xf32, #tpu.memory_space<vmem>>, vector<65x64xf32>
    %cst = arith.constant dense<0.000000e+00> : vector<32x64xf32>
    %3 = tpu.matmul %0, %2, %cst {dimension_numbers = #tpu.dot_dimension_numbers<[1], [0], [0], [1], [0, 0, 1, 1], [], []>} : vector<32x65xf32>, vector<65x64xf32>, vector<32x64xf32> -> vector<32x64xf32>
    %c0_5 = arith.constant 0 : index
    %c0_6 = arith.constant 0 : index
    %4 = vector.load %arg7[%c0_5, %c0_6] : memref<65x64xf32, #tpu.memory_space<vmem>>, vector<65x64xf32>
    %cst_7 = arith.constant dense<0.000000e+00> : vector<64x64xf32>
    %5 = tpu.matmul %1, %4, %cst_7 {dimension_numbers = #tpu.dot_dimension_numbers<[1], [0], [0], [1], [0, 0, 1, 1], [], []>} : vector<64x65xf32>, vector<65x64xf32>, vector<64x64xf32> -> vector<64x64xf32>
    %6 = arith.truncf %5 : vector<64x64xf32> to vector<64x64xbf16>
    %cst_8 = arith.constant dense<0.000000e+00> : vector<32x64xf32>
    %7 = tpu.matmul %0, %1, %cst_8 {dimension_numbers = #tpu.dot_dimension_numbers<[1], [1], [0], [0], [0, 0, 1, 0], [], []>} : vector<32x65xf32>, vector<64x65xf32>, vector<32x64xf32> -> vector<32x64xf32>
    %c0_9 = arith.constant 0 : index
    %c0_10 = arith.constant 0 : index
    %8 = vector.load %arg3[%c0_9, %c0_10] : memref<32x1xf32, #tpu.memory_space<vmem>>, vector<32x1xf32>
    %9 = vector.broadcast %8 : vector<32x1xf32> to vector<32x64xf32>
    %10 = arith.addf %7, %9 : vector<32x64xf32>
    %c0_11 = arith.constant 0 : index
    %c0_12 = arith.constant 0 : index
    %11 = vector.load %arg1[%c0_11, %c0_12] : memref<32x1xf32, #tpu.memory_space<vmem>>, vector<32x1xf32>
    %c0_13 = arith.constant 0 : index
    %c0_14 = arith.constant 0 : index
    %12 = vector.load %arg2[%c0_13, %c0_14] : memref<1x64xf32, #tpu.memory_space<vmem>>, vector<1x64xf32>
    %13 = vector.broadcast %11 : vector<32x1xf32> to vector<32x64xf32>
    %14 = vector.broadcast %12 : vector<1x64xf32> to vector<32x64xf32>
    %15 = arith.cmpf oeq, %13, %14 : vector<32x64xf32>
    %cst_15 = arith.constant 1.000000e+30 : f32
    %16 = vector.broadcast %cst_15 : f32 to vector<32x64xf32>
    %17 = arith.select %15, %10, %16 : vector<32x64xi1>, vector<32x64xf32>
    %18 = tpu.iota {dimensions = array<i32: 1>} : vector<32x64xi32>
    %19 = tpu.bitcast %17 : vector<32x64xf32> -> vector<32x64xi32>
    %c-64_i32 = arith.constant -64 : i32
    %20 = vector.broadcast %c-64_i32 : i32 to vector<32x64xi32>
    %21 = arith.andi %19, %20 : vector<32x64xi32>
    %22 = arith.ori %21, %18 : vector<32x64xi32>
    %c0_16 = arith.constant 0 : index
    %c0_17 = arith.constant 0 : index
    %23 = vector.load %arg8[%c0_16, %c0_17] : memref<64x64xbf16, #tpu.memory_space<vmem>>, vector<64x64xbf16>
    %c0_18 = arith.constant 0 : index
    %c0_19 = arith.constant 0 : index
    %24 = vector.load %arg9[%c0_18, %c0_19] : memref<1x64xf32, #tpu.memory_space<vmem>>, vector<1x64xf32>
    %cst_20 = arith.constant dense<2147483647> : vector<32xi32>
    %25 = vector.multi_reduction <minsi>, %22, %cst_20 [1] : vector<32x64xi32> to vector<32xi32>
    %26 = vector.shape_cast %25 : vector<32xi32> to vector<32x1xi32>
    %27 = vector.broadcast %26 : vector<32x1xi32> to vector<32x64xi32>
    %28 = arith.cmpi eq, %22, %27 : vector<32x64xi32>
    %29 = arith.extui %28 : vector<32x64xi1> to vector<32x64xi32>
    %30 = arith.sitofp %29 : vector<32x64xi32> to vector<32x64xf32>
    %31 = arith.truncf %30 : vector<32x64xf32> to vector<32x64xbf16>
    %cst_21 = arith.constant dense<0.000000e+00> : vector<32x64xf32>
    %32 = tpu.matmul %31, %6, %cst_21 {dimension_numbers = #tpu.dot_dimension_numbers<[1], [0], [0], [1], [0, 0, 1, 1], [], []>} : vector<32x64xbf16>, vector<64x64xbf16>, vector<32x64xf32> -> vector<32x64xf32>
    %33 = arith.addf %3, %32 : vector<32x64xf32>
    %cst_22 = arith.constant 0.000000e+00 : f32
    %34 = vector.broadcast %cst_22 : f32 to vector<32x64xf32>
    %35 = arith.maximumf %33, %34 : vector<32x64xf32>
    %36 = arith.truncf %35 : vector<32x64xf32> to vector<32x64xbf16>
    %cst_23 = arith.constant dense<0.000000e+00> : vector<32x64xf32>
    %37 = tpu.matmul %36, %23, %cst_23 {dimension_numbers = #tpu.dot_dimension_numbers<[1], [0], [0], [1], [0, 0, 1, 1], [], []>} : vector<32x64xbf16>, vector<64x64xbf16>, vector<32x64xf32> -> vector<32x64xf32>
    %38 = vector.broadcast %24 : vector<1x64xf32> to vector<32x64xf32>
    %39 = arith.addf %37, %38 : vector<32x64xf32>
    %c2147483647_i32 = arith.constant 2147483647 : i32
    %40 = vector.broadcast %c2147483647_i32 : i32 to vector<32x64xi32>
    %41 = arith.select %28, %40, %22 : vector<32x64xi1>, vector<32x64xi32>
    %cst_24 = arith.constant dense<2147483647> : vector<32xi32>
    %42 = vector.multi_reduction <minsi>, %41, %cst_24 [1] : vector<32x64xi32> to vector<32xi32>
    %43 = vector.shape_cast %42 : vector<32xi32> to vector<32x1xi32>
    %44 = vector.broadcast %43 : vector<32x1xi32> to vector<32x64xi32>
    %45 = arith.cmpi eq, %41, %44 : vector<32x64xi32>
    %46 = arith.extui %45 : vector<32x64xi1> to vector<32x64xi32>
    %47 = arith.sitofp %46 : vector<32x64xi32> to vector<32x64xf32>
    %48 = arith.truncf %47 : vector<32x64xf32> to vector<32x64xbf16>
    %cst_25 = arith.constant dense<0.000000e+00> : vector<32x64xf32>
    %49 = tpu.matmul %48, %6, %cst_25 {dimension_numbers = #tpu.dot_dimension_numbers<[1], [0], [0], [1], [0, 0, 1, 1], [], []>} : vector<32x64xbf16>, vector<64x64xbf16>, vector<32x64xf32> -> vector<32x64xf32>
    %50 = arith.addf %3, %49 : vector<32x64xf32>
    %cst_26 = arith.constant 0.000000e+00 : f32
    %51 = vector.broadcast %cst_26 : f32 to vector<32x64xf32>
    %52 = arith.maximumf %50, %51 : vector<32x64xf32>
    %53 = arith.truncf %52 : vector<32x64xf32> to vector<32x64xbf16>
    %cst_27 = arith.constant dense<0.000000e+00> : vector<32x64xf32>
    %54 = tpu.matmul %53, %23, %cst_27 {dimension_numbers = #tpu.dot_dimension_numbers<[1], [0], [0], [1], [0, 0, 1, 1], [], []>} : vector<32x64xbf16>, vector<64x64xbf16>, vector<32x64xf32> -> vector<32x64xf32>
    %55 = vector.broadcast %24 : vector<1x64xf32> to vector<32x64xf32>
    %56 = arith.addf %54, %55 : vector<32x64xf32>
    %c1872858888_i32 = arith.constant 1872858888 : i32
    %57 = vector.broadcast %c1872858888_i32 : i32 to vector<32x1xi32>
    %58 = arith.cmpi slt, %43, %57 : vector<32x1xi32>
    %59 = arith.maximumf %39, %56 : vector<32x64xf32>
    %60 = vector.shape_cast %58 : vector<32x1xi1> to vector<32x1xi1>
    %61 = vector.broadcast %60 : vector<32x1xi1> to vector<32x64xi1>
    %62 = arith.select %61, %59, %39 : vector<32x64xi1>, vector<32x64xf32>
    %c2147483647_i32_28 = arith.constant 2147483647 : i32
    %63 = vector.broadcast %c2147483647_i32_28 : i32 to vector<32x64xi32>
    %64 = arith.select %45, %63, %41 : vector<32x64xi1>, vector<32x64xi32>
    %cst_29 = arith.constant dense<2147483647> : vector<32xi32>
    %65 = vector.multi_reduction <minsi>, %64, %cst_29 [1] : vector<32x64xi32> to vector<32xi32>
    %66 = vector.shape_cast %65 : vector<32xi32> to vector<32x1xi32>
    %67 = vector.broadcast %66 : vector<32x1xi32> to vector<32x64xi32>
    %68 = arith.cmpi eq, %64, %67 : vector<32x64xi32>
    %69 = arith.extui %68 : vector<32x64xi1> to vector<32x64xi32>
    %70 = arith.sitofp %69 : vector<32x64xi32> to vector<32x64xf32>
    %71 = arith.truncf %70 : vector<32x64xf32> to vector<32x64xbf16>
    %cst_30 = arith.constant dense<0.000000e+00> : vector<32x64xf32>
    %72 = tpu.matmul %71, %6, %cst_30 {dimension_numbers = #tpu.dot_dimension_numbers<[1], [0], [0], [1], [0, 0, 1, 1], [], []>} : vector<32x64xbf16>, vector<64x64xbf16>, vector<32x64xf32> -> vector<32x64xf32>
    %73 = arith.addf %3, %72 : vector<32x64xf32>
    %cst_31 = arith.constant 0.000000e+00 : f32
    %74 = vector.broadcast %cst_31 : f32 to vector<32x64xf32>
    %75 = arith.maximumf %73, %74 : vector<32x64xf32>
    %76 = arith.truncf %75 : vector<32x64xf32> to vector<32x64xbf16>
    %cst_32 = arith.constant dense<0.000000e+00> : vector<32x64xf32>
    %77 = tpu.matmul %76, %23, %cst_32 {dimension_numbers = #tpu.dot_dimension_numbers<[1], [0], [0], [1], [0, 0, 1, 1], [], []>} : vector<32x64xbf16>, vector<64x64xbf16>, vector<32x64xf32> -> vector<32x64xf32>
    %78 = vector.broadcast %24 : vector<1x64xf32> to vector<32x64xf32>
    %79 = arith.addf %77, %78 : vector<32x64xf32>
    %c1872858888_i32_33 = arith.constant 1872858888 : i32
    %80 = vector.broadcast %c1872858888_i32_33 : i32 to vector<32x1xi32>
    %81 = arith.cmpi slt, %66, %80 : vector<32x1xi32>
    %82 = arith.maximumf %62, %79 : vector<32x64xf32>
    %83 = vector.shape_cast %81 : vector<32x1xi1> to vector<32x1xi1>
    %84 = vector.broadcast %83 : vector<32x1xi1> to vector<32x64xi1>
    %85 = arith.select %84, %82, %62 : vector<32x64xi1>, vector<32x64xf32>
    %c2147483647_i32_34 = arith.constant 2147483647 : i32
    %86 = vector.broadcast %c2147483647_i32_34 : i32 to vector<32x64xi32>
    %87 = arith.select %68, %86, %64 : vector<32x64xi1>, vector<32x64xi32>
    %cst_35 = arith.constant dense<2147483647> : vector<32xi32>
    %88 = vector.multi_reduction <minsi>, %87, %cst_35 [1] : vector<32x64xi32> to vector<32xi32>
    %89 = vector.shape_cast %88 : vector<32xi32> to vector<32x1xi32>
    %90 = vector.broadcast %89 : vector<32x1xi32> to vector<32x64xi32>
    %91 = arith.cmpi eq, %87, %90 : vector<32x64xi32>
    %92 = arith.extui %91 : vector<32x64xi1> to vector<32x64xi32>
    %93 = arith.sitofp %92 : vector<32x64xi32> to vector<32x64xf32>
    %94 = arith.truncf %93 : vector<32x64xf32> to vector<32x64xbf16>
    %cst_36 = arith.constant dense<0.000000e+00> : vector<32x64xf32>
    %95 = tpu.matmul %94, %6, %cst_36 {dimension_numbers = #tpu.dot_dimension_numbers<[1], [0], [0], [1], [0, 0, 1, 1], [], []>} : vector<32x64xbf16>, vector<64x64xbf16>, vector<32x64xf32> -> vector<32x64xf32>
    %96 = arith.addf %3, %95 : vector<32x64xf32>
    %cst_37 = arith.constant 0.000000e+00 : f32
    %97 = vector.broadcast %cst_37 : f32 to vector<32x64xf32>
    %98 = arith.maximumf %96, %97 : vector<32x64xf32>
    %99 = arith.truncf %98 : vector<32x64xf32> to vector<32x64xbf16>
    %cst_38 = arith.constant dense<0.000000e+00> : vector<32x64xf32>
    %100 = tpu.matmul %99, %23, %cst_38 {dimension_numbers = #tpu.dot_dimension_numbers<[1], [0], [0], [1], [0, 0, 1, 1], [], []>} : vector<32x64xbf16>, vector<64x64xbf16>, vector<32x64xf32> -> vector<32x64xf32>
    %101 = vector.broadcast %24 : vector<1x64xf32> to vector<32x64xf32>
    %102 = arith.addf %100, %101 : vector<32x64xf32>
    %c1872858888_i32_39 = arith.constant 1872858888 : i32
    %103 = vector.broadcast %c1872858888_i32_39 : i32 to vector<32x1xi32>
    %104 = arith.cmpi slt, %89, %103 : vector<32x1xi32>
    %105 = arith.maximumf %85, %102 : vector<32x64xf32>
    %106 = vector.shape_cast %104 : vector<32x1xi1> to vector<32x1xi1>
    %107 = vector.broadcast %106 : vector<32x1xi1> to vector<32x64xi1>
    %108 = arith.select %107, %105, %85 : vector<32x64xi1>, vector<32x64xf32>
    %c0_40 = arith.constant 0 : index
    %c0_41 = arith.constant 0 : index
    %109 = vector.load %arg10[%c0_40, %c0_41] : memref<32x64xf32, #tpu.memory_space<vmem>>, vector<32x64xf32>
    tpu.vector_store %arg10[%c0_40, %c0_41], %108 {strides = array<i32>} : memref<32x64xf32, #tpu.memory_space<vmem>>, vector<32x64xf32>,
    return
  }
  func.func @transform_0(%arg0: i32) -> (i32, i32) {
    %c0_i32 = arith.constant 0 : i32
    %c0_i32_0 = arith.constant 0 : i32
    return %arg0, %c0_i32 : i32, i32
  }
  func.func @transform_1(%arg0: i32) -> (i32, i32) {
    %c0_i32 = arith.constant 0 : i32
    %c0_i32_0 = arith.constant 0 : i32
    %c0_i32_1 = arith.constant 0 : i32
    return %c0_i32, %c0_i32_0 : i32, i32
  }
  func.func @transform_2(%arg0: i32) -> (i32, i32) {
    %c0_i32 = arith.constant 0 : i32
    %c0_i32_0 = arith.constant 0 : i32
    return %arg0, %c0_i32 : i32, i32
  }
  func.func @transform_3(%arg0: i32) -> (i32, i32) {
    %c0_i32 = arith.constant 0 : i32
    %c0_i32_0 = arith.constant 0 : i32
    return %arg0, %c0_i32 : i32, i32
  }
  func.func @transform_4(%arg0: i32) -> (i32, i32) {
    %c0_i32 = arith.constant 0 : i32
    %c0_i32_0 = arith.constant 0 : i32
    %c0_i32_1 = arith.constant 0 : i32
    return %c0_i32, %c0_i32_0 : i32, i32
  }
  func.func @transform_5(%arg0: i32) -> (i32, i32) {
    %c0_i32 = arith.constant 0 : i32
    %c0_i32_0 = arith.constant 0 : i32
    %c0_i32_1 = arith.constant 0 : i32
    return %c0_i32, %c0_i32_0 : i32, i32
  }
  func.func @transform_6(%arg0: i32) -> (i32, i32) {
    %c0_i32 = arith.constant 0 : i32
    %c0_i32_0 = arith.constant 0 : i32
    %c0_i32_1 = arith.constant 0 : i32
    return %c0_i32, %c0_i32_0 : i32, i32
  }
  func.func @transform_7(%arg0: i32) -> (i32, i32) {
    %c0_i32 = arith.constant 0 : i32
    %c0_i32_0 = arith.constant 0 : i32
    %c0_i32_1 = arith.constant 0 : i32
    return %c0_i32, %c0_i32_0 : i32, i32
  }
  func.func @transform_8(%arg0: i32) -> (i32, i32) {
    %c0_i32 = arith.constant 0 : i32
    %c0_i32_0 = arith.constant 0 : i32
    %c0_i32_1 = arith.constant 0 : i32
    return %c0_i32, %c0_i32_0 : i32, i32
  }
  func.func @transform_9(%arg0: i32) -> (i32, i32) {
    %c0_i32 = arith.constant 0 : i32
    %c0_i32_0 = arith.constant 0 : i32
    return %arg0, %c0_i32 : i32, i32
  }
}

module attributes {stable_mosaic.version = 11 : i64} {
  func.func @_head_kernel(%arg0: i32, %arg1: memref<32x192xf32, #tpu.memory_space<vmem>>, %arg2: memref<192x1024xbf16, #tpu.memory_space<vmem>>, %arg3: memref<1x1024xf32, #tpu.memory_space<vmem>>, %arg4: memref<1024x256xbf16, #tpu.memory_space<vmem>>, %arg5: memref<1x256xf32, #tpu.memory_space<vmem>>, %arg6: memref<256x128xbf16, #tpu.memory_space<vmem>>, %arg7: memref<1x128xf32, #tpu.memory_space<vmem>>, %arg8: memref<128x128xbf16, #tpu.memory_space<vmem>>, %arg9: memref<1x128xf32, #tpu.memory_space<vmem>>, %arg10: memref<32x128xf32, #tpu.memory_space<vmem>>) attributes {dimension_semantics = [#tpu.dimension_semantics<parallel>], iteration_bounds = array<i64: 2>, scalar_prefetch = 0 : i64, scratch_operands = 0 : i64, tpu.core_type = #tpu.core_type<tc>, window_params = [{transform_indices = @transform_0, window_bounds = array<i64: 32, 192>}, {pipeline_mode = #tpu.pipeline_mode<synchronous>, transform_indices = @transform_1, window_bounds = array<i64: 192, 1024>}, {pipeline_mode = #tpu.pipeline_mode<synchronous>, transform_indices = @transform_2, window_bounds = array<i64: 1, 1024>}, {pipeline_mode = #tpu.pipeline_mode<synchronous>, transform_indices = @transform_3, window_bounds = array<i64: 1024, 256>}, {pipeline_mode = #tpu.pipeline_mode<synchronous>, transform_indices = @transform_4, window_bounds = array<i64: 1, 256>}, {pipeline_mode = #tpu.pipeline_mode<synchronous>, transform_indices = @transform_5, window_bounds = array<i64: 256, 128>}, {pipeline_mode = #tpu.pipeline_mode<synchronous>, transform_indices = @transform_6, window_bounds = array<i64: 1, 128>}, {pipeline_mode = #tpu.pipeline_mode<synchronous>, transform_indices = @transform_7, window_bounds = array<i64: 128, 128>}, {pipeline_mode = #tpu.pipeline_mode<synchronous>, transform_indices = @transform_8, window_bounds = array<i64: 1, 128>}, {transform_indices = @transform_9, window_bounds = array<i64: 32, 128>}]} {
    %c0 = arith.constant 0 : index
    %c0_0 = arith.constant 0 : index
    %0 = vector.load %arg1[%c0, %c0_0] : memref<32x192xf32, #tpu.memory_space<vmem>>, vector<32x192xf32>
    %1 = arith.truncf %0 : vector<32x192xf32> to vector<32x192xbf16>
    %c0_1 = arith.constant 0 : index
    %c0_2 = arith.constant 0 : index
    %2 = vector.load %arg2[%c0_1, %c0_2] : memref<192x1024xbf16, #tpu.memory_space<vmem>>, vector<192x1024xbf16>
    %cst = arith.constant dense<0.000000e+00> : vector<32x1024xf32>
    %3 = tpu.matmul %1, %2, %cst {dimension_numbers = #tpu.dot_dimension_numbers<[1], [0], [0], [1], [0, 0, 1, 1], [], []>} : vector<32x192xbf16>, vector<192x1024xbf16>, vector<32x1024xf32> -> vector<32x1024xf32>
    %c0_3 = arith.constant 0 : index
    %c0_4 = arith.constant 0 : index
    %4 = vector.load %arg3[%c0_3, %c0_4] : memref<1x1024xf32, #tpu.memory_space<vmem>>, vector<1x1024xf32>
    %5 = vector.broadcast %4 : vector<1x1024xf32> to vector<32x1024xf32>
    %6 = arith.addf %3, %5 : vector<32x1024xf32>
    %cst_5 = arith.constant 0.000000e+00 : f32
    %7 = vector.broadcast %cst_5 : f32 to vector<32x1024xf32>
    %8 = arith.maximumf %6, %7 : vector<32x1024xf32>
    %9 = arith.truncf %8 : vector<32x1024xf32> to vector<32x1024xbf16>
    %c0_6 = arith.constant 0 : index
    %c0_7 = arith.constant 0 : index
    %10 = vector.load %arg4[%c0_6, %c0_7] : memref<1024x256xbf16, #tpu.memory_space<vmem>>, vector<1024x256xbf16>
    %cst_8 = arith.constant dense<0.000000e+00> : vector<32x256xf32>
    %11 = tpu.matmul %9, %10, %cst_8 {dimension_numbers = #tpu.dot_dimension_numbers<[1], [0], [0], [1], [0, 0, 1, 1], [], []>} : vector<32x1024xbf16>, vector<1024x256xbf16>, vector<32x256xf32> -> vector<32x256xf32>
    %c0_9 = arith.constant 0 : index
    %c0_10 = arith.constant 0 : index
    %12 = vector.load %arg5[%c0_9, %c0_10] : memref<1x256xf32, #tpu.memory_space<vmem>>, vector<1x256xf32>
    %13 = vector.broadcast %12 : vector<1x256xf32> to vector<32x256xf32>
    %14 = arith.addf %11, %13 : vector<32x256xf32>
    %cst_11 = arith.constant 0.000000e+00 : f32
    %15 = vector.broadcast %cst_11 : f32 to vector<32x256xf32>
    %16 = arith.maximumf %14, %15 : vector<32x256xf32>
    %17 = arith.truncf %16 : vector<32x256xf32> to vector<32x256xbf16>
    %c0_12 = arith.constant 0 : index
    %c0_13 = arith.constant 0 : index
    %18 = vector.load %arg6[%c0_12, %c0_13] : memref<256x128xbf16, #tpu.memory_space<vmem>>, vector<256x128xbf16>
    %cst_14 = arith.constant dense<0.000000e+00> : vector<32x128xf32>
    %19 = tpu.matmul %17, %18, %cst_14 {dimension_numbers = #tpu.dot_dimension_numbers<[1], [0], [0], [1], [0, 0, 1, 1], [], []>} : vector<32x256xbf16>, vector<256x128xbf16>, vector<32x128xf32> -> vector<32x128xf32>
    %c0_15 = arith.constant 0 : index
    %c0_16 = arith.constant 0 : index
    %20 = vector.load %arg7[%c0_15, %c0_16] : memref<1x128xf32, #tpu.memory_space<vmem>>, vector<1x128xf32>
    %21 = vector.broadcast %20 : vector<1x128xf32> to vector<32x128xf32>
    %22 = arith.addf %19, %21 : vector<32x128xf32>
    %cst_17 = arith.constant 0.000000e+00 : f32
    %23 = vector.broadcast %cst_17 : f32 to vector<32x128xf32>
    %24 = arith.maximumf %22, %23 : vector<32x128xf32>
    %25 = arith.truncf %24 : vector<32x128xf32> to vector<32x128xbf16>
    %c0_18 = arith.constant 0 : index
    %c0_19 = arith.constant 0 : index
    %26 = vector.load %arg8[%c0_18, %c0_19] : memref<128x128xbf16, #tpu.memory_space<vmem>>, vector<128x128xbf16>
    %cst_20 = arith.constant dense<0.000000e+00> : vector<32x128xf32>
    %27 = tpu.matmul %25, %26, %cst_20 {dimension_numbers = #tpu.dot_dimension_numbers<[1], [0], [0], [1], [0, 0, 1, 1], [], []>} : vector<32x128xbf16>, vector<128x128xbf16>, vector<32x128xf32> -> vector<32x128xf32>
    %c0_21 = arith.constant 0 : index
    %c0_22 = arith.constant 0 : index
    %28 = vector.load %arg9[%c0_21, %c0_22] : memref<1x128xf32, #tpu.memory_space<vmem>>, vector<1x128xf32>
    %29 = vector.broadcast %28 : vector<1x128xf32> to vector<32x128xf32>
    %30 = arith.addf %27, %29 : vector<32x128xf32>
    %cst_23 = arith.constant dense<0xFF800000> : vector<32xf32>
    %31 = vector.multi_reduction <maximumf>, %30, %cst_23 [1] : vector<32x128xf32> to vector<32xf32>
    %32 = vector.shape_cast %31 : vector<32xf32> to vector<32x1xf32>
    %33 = vector.broadcast %32 : vector<32x1xf32> to vector<32x128xf32>
    %34 = arith.subf %30, %33 : vector<32x128xf32>
    %35 = math.exp %34 : vector<32x128xf32>
    %cst_24 = arith.constant dense<0.000000e+00> : vector<32xf32>
    %36 = vector.multi_reduction <add>, %35, %cst_24 [1] : vector<32x128xf32> to vector<32xf32>
    %37 = vector.shape_cast %36 : vector<32xf32> to vector<32x1xf32>
    %38 = math.log %37 : vector<32x1xf32>
    %39 = vector.broadcast %32 : vector<32x1xf32> to vector<32x128xf32>
    %40 = arith.subf %30, %39 : vector<32x128xf32>
    %41 = vector.broadcast %38 : vector<32x1xf32> to vector<32x128xf32>
    %42 = arith.subf %40, %41 : vector<32x128xf32>
    %c0_25 = arith.constant 0 : index
    %c0_26 = arith.constant 0 : index
    %43 = vector.load %arg10[%c0_25, %c0_26] : memref<32x128xf32, #tpu.memory_space<vmem>>, vector<32x128xf32>
    tpu.vector_store %arg10[%c0_25, %c0_26], %42 {strides = array<i32>} : memref<32x128xf32, #tpu.memory_space<vmem>>, vector<32x128xf32>,
    return
  }
  func.func @transform_0(%arg0: i32) -> (i32, i32) {
    %c0_i32 = arith.constant 0 : i32
    %c0_i32_0 = arith.constant 0 : i32
    return %arg0, %c0_i32 : i32, i32
  }
  func.func @transform_1(%arg0: i32) -> (i32, i32) {
    %c0_i32 = arith.constant 0 : i32
    %c0_i32_0 = arith.constant 0 : i32
    %c0_i32_1 = arith.constant 0 : i32
    return %c0_i32, %c0_i32_0 : i32, i32
  }
  func.func @transform_2(%arg0: i32) -> (i32, i32) {
    %c0_i32 = arith.constant 0 : i32
    %c0_i32_0 = arith.constant 0 : i32
    %c0_i32_1 = arith.constant 0 : i32
    return %c0_i32, %c0_i32_0 : i32, i32
  }
  func.func @transform_3(%arg0: i32) -> (i32, i32) {
    %c0_i32 = arith.constant 0 : i32
    %c0_i32_0 = arith.constant 0 : i32
    %c0_i32_1 = arith.constant 0 : i32
    return %c0_i32, %c0_i32_0 : i32, i32
  }
  func.func @transform_4(%arg0: i32) -> (i32, i32) {
    %c0_i32 = arith.constant 0 : i32
    %c0_i32_0 = arith.constant 0 : i32
    %c0_i32_1 = arith.constant 0 : i32
    return %c0_i32, %c0_i32_0 : i32, i32
  }
  func.func @transform_5(%arg0: i32) -> (i32, i32) {
    %c0_i32 = arith.constant 0 : i32
    %c0_i32_0 = arith.constant 0 : i32
    %c0_i32_1 = arith.constant 0 : i32
    return %c0_i32, %c0_i32_0 : i32, i32
  }
  func.func @transform_6(%arg0: i32) -> (i32, i32) {
    %c0_i32 = arith.constant 0 : i32
    %c0_i32_0 = arith.constant 0 : i32
    %c0_i32_1 = arith.constant 0 : i32
    return %c0_i32, %c0_i32_0 : i32, i32
  }
  func.func @transform_7(%arg0: i32) -> (i32, i32) {
    %c0_i32 = arith.constant 0 : i32
    %c0_i32_0 = arith.constant 0 : i32
    %c0_i32_1 = arith.constant 0 : i32
    return %c0_i32, %c0_i32_0 : i32, i32
  }
  func.func @transform_8(%arg0: i32) -> (i32, i32) {
    %c0_i32 = arith.constant 0 : i32
    %c0_i32_0 = arith.constant 0 : i32
    %c0_i32_1 = arith.constant 0 : i32
    return %c0_i32, %c0_i32_0 : i32, i32
  }
  func.func @transform_9(%arg0: i32) -> (i32, i32) {
    %c0_i32 = arith.constant 0 : i32
    %c0_i32_0 = arith.constant 0 : i32
    return %arg0, %c0_i32 : i32, i32
  }
}

</mosaic_0001>

<llo_original>
// kernel: dgcnn_forward.5
$region0: #{dgcnn_forward.5}
  #allocation0 [shape = 'u32[]', space=smem, size = 0x4, offset = 0x4, fixed_abs, tag = 'smem constant byte address 0x4 - core index']
  #allocation1 [shape = 'u32[144,128]{1,0:T(1,128)}', space=vmem, size = 0x12000, scoped, tag = 'internal scratch']
  %s0 = inlined_call_operand.vmem [shape: f32[64,1], index: 0, kind: input, shape index: {}]
  %s1 = inlined_call_operand.vmem [shape: f32[1,64], index: 1, kind: input, shape index: {}]
  %s2 = inlined_call_operand.vmem [shape: f32[64,1], index: 2, kind: input, shape index: {}]
  %s3 = inlined_call_operand.vmem [shape: f32[64,65], index: 3, kind: input, shape index: {}]
  %s4 = inlined_call_operand.vmem [shape: f32[64,65], index: 4, kind: input, shape index: {}]
  %s5 = inlined_call_operand.vmem [shape: f32[65,64], index: 5, kind: input, shape index: {}]
  %s6 = inlined_call_operand.vmem [shape: f32[65,64], index: 6, kind: input, shape index: {}]
  %s7 = inlined_call_operand.vmem [shape: bf16[64,64], index: 7, kind: input, shape index: {}]
  %s8 = inlined_call_operand.vmem [shape: f32[1,64], index: 8, kind: input, shape index: {}]
  %s9 = inlined_call_operand.vmem [shape: f32[64,64], index: 9, kind: output, shape index: {}]
  %s10 = sld [smem:[#allocation0]]
  $region69: #{dgcnn_forward.5} parent=0
    _
  %s12 = ssub.s32 1, %s10
  %s13 = scalar_select 0, %s12, %s10
  loop: start=0, step=1, limit=4
  $region2: #{dgcnn_forward.5} parent=0 // loop_pre_header
    _
  $region3: #{dgcnn_forward.5} parent=0 // loop_header
    %s15 = sphi 0, %s19
    %p16 = scmp.ge.s32.totalorder %s15, 4
    %s25 = sphi 0, %s27
    %s28 = sphi 0, %s25
    %s29 = sphi 0, %s28
    %s45 = sphi 0, %s29
    %s49 = sphi 0, %s49
    %s51 = sphi 0, %s49
    %s52 = sphi 0, %s51
    %s66 = sphi 0, %s52
    %s72 = sphi 0, %s74
    %s75 = sphi 0, %s72
    %s76 = sphi 0, %s75
    %s92 = sphi 0, %s76
    %s98 = sphi 0, %s100
    %s101 = sphi 0, %s98
    %s102 = sphi 0, %s101
    %s118 = sphi 0, %s102
    %s122 = sphi 0, %s122
    %s124 = sphi 0, %s122
    %s125 = sphi 0, %s124
    %s139 = sphi 0, %s125
    %s143 = sphi 0, %s143
    %s145 = sphi 0, %s143
    %s146 = sphi 0, %s145
    %s160 = sphi 0, %s146
    %s164 = sphi 0, %s164
    %s166 = sphi 0, %s164
    %s167 = sphi 0, %s166
    %s181 = sphi 0, %s167
    %s185 = sphi 0, %s185
    %s187 = sphi 0, %s185
    %s188 = sphi 0, %s187
    %s202 = sphi 0, %s188
    %s206 = sphi 0, %s206
    %s208 = sphi 0, %s206
    %s209 = sphi 0, %s208
    %s223 = sphi 0, %s209
    %s229 = sphi 0, %s231
    %s232 = sphi 0, %s229
    %s233 = sphi 0, %s232
    %s249 = sphi 0, %s233
  $region4: #{dgcnn_forward.5} parent=0 // loop_header_branch
    %18 = sbr.rel (%p16) target = $region8
  $region5: #{dgcnn_forward.5} parent=0 // loop_body
    %s20 = ssub.s32 %s15, 1
    %s21 = ssub.s32 %s15, 2
    %s22 = sadd.s32 %s15, 1
    %s23 = ssub.s32 %s15, %s22
    %p24 = scmp.eq.s32.totalorder %s23, 0
    %s26 = sadd.s32 %s25, 1
    %s27 = scalar_select %p24, %s25, %s26
    %p30 = pneg %p24
    %p31 = scmp.eq.s32.totalorder %s15, 1
    %p32 = por %p30, %p31
    %p33 = scmp.ne.s32.totalorder %s25, %s28
    %p34 = scmp.eq.s32.totalorder %s15, 0
    %p35 = por %p33, %p34
    %p36 = scmp.ne.s32.totalorder %s25, %s28
    %p37 = scmp.eq.s32.totalorder %s20, 1
    %p38 = por %p36, %p37
    %p39 = scmp.ne.s32.totalorder %s28, %s29
    %p40 = scmp.eq.s32.totalorder %s20, 0
    %p41 = por %p39, %p40
    %p42 = scmp.ne.s32.totalorder %s28, %s29
    %p43 = scmp.eq.s32.totalorder %s21, 1
    %p44 = por %p42, %p43
    %p46 = scmp.ne.s32.totalorder %s29, %s45
    %p47 = scmp.eq.s32.totalorder %s21, 0
    %p48 = por %p46, %p47
    %s50 = sadd.s32 %s49, 1
    %p53 = scmp.eq.s32.totalorder %s15, 1
    %p54 = scmp.ne.s32.totalorder %s49, %s51
    %p55 = scmp.eq.s32.totalorder %s15, 0
    %p56 = por %p54, %p55
    %p57 = scmp.ne.s32.totalorder %s49, %s51
    %p58 = scmp.eq.s32.totalorder %s20, 1
    %p59 = por %p57, %p58
    %p60 = scmp.ne.s32.totalorder %s51, %s52
    %p61 = scmp.eq.s32.totalorder %s20, 0
    %p62 = por %p60, %p61
    %p63 = scmp.ne.s32.totalorder %s51, %s52
    %p64 = scmp.eq.s32.totalorder %s21, 1
    %p65 = por %p63, %p64
    %p67 = scmp.ne.s32.totalorder %s52, %s66
    %p68 = scmp.eq.s32.totalorder %s21, 0
    %p69 = por %p67, %p68
    %s70 = ssub.s32 %s15, %s22
    %p71 = scmp.eq.s32.totalorder %s70, 0
    %s73 = sadd.s32 %s72, 1
    %s74 = scalar_select %p71, %s72, %s73
    %p77 = pneg %p71
    %p78 = scmp.eq.s32.totalorder %s15, 1
    %p79 = por %p77, %p78
    %p80 = scmp.ne.s32.totalorder %s72, %s75
    %p81 = scmp.eq.s32.totalorder %s15, 0
    %p82 = por %p80, %p81
    %p83 = scmp.ne.s32.totalorder %s72, %s75
    %p84 = scmp.eq.s32.totalorder %s20, 1
    %p85 = por %p83, %p84
    %p86 = scmp.ne.s32.totalorder %s75, %s76
    %p87 = scmp.eq.s32.totalorder %s20, 0
    %p88 = por %p86, %p87
    %p89 = scmp.ne.s32.totalorder %s75, %s76
    %p90 = scmp.eq.s32.totalorder %s21, 1
    %p91 = por %p89, %p90
    %p93 = scmp.ne.s32.totalorder %s76, %s92
    %p94 = scmp.eq.s32.totalorder %s21, 0
    %p95 = por %p93, %p94
    %s96 = ssub.s32 %s15, %s22
    %p97 = scmp.eq.s32.totalorder %s96, 0
    %s99 = sadd.s32 %s98, 1
    %s100 = scalar_select %p97, %s98, %s99
    %p103 = pneg %p97
    %p104 = scmp.eq.s32.totalorder %s15, 1
    %p105 = por %p103, %p104
    %p106 = scmp.ne.s32.totalorder %s98, %s101
    %p107 = scmp.eq.s32.totalorder %s15, 0
    %p108 = por %p106, %p107
    %p109 = scmp.ne.s32.totalorder %s98, %s101
    %p110 = scmp.eq.s32.totalorder %s20, 1
    %p111 = por %p109, %p110
    %p112 = scmp.ne.s32.totalorder %s101, %s102
    %p113 = scmp.eq.s32.totalorder %s20, 0
    %p114 = por %p112, %p113
    %p115 = scmp.ne.s32.totalorder %s101, %s102
    %p116 = scmp.eq.s32.totalorder %s21, 1
    %p117 = por %p115, %p116
    %p119 = scmp.ne.s32.totalorder %s102, %s118
    %p120 = scmp.eq.s32.totalorder %s21, 0
    %p121 = por %p119, %p120
    %s123 = sadd.s32 %s122, 1
    %p126 = scmp.eq.s32.totalorder %s15, 1
    %p127 = scmp.ne.s32.totalorder %s122, %s124
    %p128 = scmp.eq.s32.totalorder %s15, 0
    %p129 = por %p127, %p128
    %p130 = scmp.ne.s32.totalorder %s122, %s124
    %p131 = scmp.eq.s32.totalorder %s20, 1
    %p132 = por %p130, %p131
    %p133 = scmp.ne.s32.totalorder %s124, %s125
    %p134 = scmp.eq.s32.totalorder %s20, 0
    %p135 = por %p133, %p134
    %p136 = scmp.ne.s32.totalorder %s124, %s125
    %p137 = scmp.eq.s32.totalorder %s21, 1
    %p138 = por %p136, %p137
    %p140 = scmp.ne.s32.totalorder %s125, %s139
    %p141 = scmp.eq.s32.totalorder %s21, 0
    %p142 = por %p140, %p141
    %s144 = sadd.s32 %s143, 1
    %p147 = scmp.eq.s32.totalorder %s15, 1
    %p148 = scmp.ne.s32.totalorder %s143, %s145
    %p149 = scmp.eq.s32.totalorder %s15, 0
    %p150 = por %p148, %p149
    %p151 = scmp.ne.s32.totalorder %s143, %s145
    %p152 = scmp.eq.s32.totalorder %s20, 1
    %p153 = por %p151, %p152
    %p154 = scmp.ne.s32.totalorder %s145, %s146
    %p155 = scmp.eq.s32.totalorder %s20, 0
    %p156 = por %p154, %p155
    %p157 = scmp.ne.s32.totalorder %s145, %s146
    %p158 = scmp.eq.s32.totalorder %s21, 1
    %p159 = por %p157, %p158
    %p161 = scmp.ne.s32.totalorder %s146, %s160
    %p162 = scmp.eq.s32.totalorder %s21, 0
    %p163 = por %p161, %p162
    %s165 = sadd.s32 %s164, 1
    %p168 = scmp.eq.s32.totalorder %s15, 1
    %p169 = scmp.ne.s32.totalorder %s164, %s166
    %p170 = scmp.eq.s32.totalorder %s15, 0
    %p171 = por %p169, %p170
    %p172 = scmp.ne.s32.totalorder %s164, %s166
    %p173 = scmp.eq.s32.totalorder %s20, 1
    %p174 = por %p172, %p173
    %p175 = scmp.ne.s32.totalorder %s166, %s167
    %p176 = scmp.eq.s32.totalorder %s20, 0
    %p177 = por %p175, %p176
    %p178 = scmp.ne.s32.totalorder %s166, %s167
    %p179 = scmp.eq.s32.totalorder %s21, 1
    %p180 = por %p178, %p179
    %p182 = scmp.ne.s32.totalorder %s167, %s181
    %p183 = scmp.eq.s32.totalorder %s21, 0
    %p184 = por %p182, %p183
    %s186 = sadd.s32 %s185, 1
    %p189 = scmp.eq.s32.totalorder %s15, 1
    %p190 = scmp.ne.s32.totalorder %s185, %s187
    %p191 = scmp.eq.s32.totalorder %s15, 0
    %p192 = por %p190, %p191
    %p193 = scmp.ne.s32.totalorder %s185, %s187
    %p194 = scmp.eq.s32.totalorder %s20, 1
    %p195 = por %p193, %p194
    %p196 = scmp.ne.s32.totalorder %s187, %s188
    %p197 = scmp.eq.s32.totalorder %s20, 0
    %p198 = por %p196, %p197
    %p199 = scmp.ne.s32.totalorder %s187, %s188
    %p200 = scmp.eq.s32.totalorder %s21, 1
    %p201 = por %p199, %p200
    %p203 = scmp.ne.s32.totalorder %s188, %s202
    %p204 = scmp.eq.s32.totalorder %s21, 0
    %p205 = por %p203, %p204
    %s207 = sadd.s32 %s206, 1
    %p210 = scmp.eq.s32.totalorder %s15, 1
    %p211 = scmp.ne.s32.totalorder %s206, %s208
    %p212 = scmp.eq.s32.totalorder %s15, 0
    %p213 = por %p211, %p212
    %p214 = scmp.ne.s32.totalorder %s206, %s208
    %p215 = scmp.eq.s32.totalorder %s20, 1
    %p216 = por %p214, %p215
    %p217 = scmp.ne.s32.totalorder %s208, %s209
    %p218 = scmp.eq.s32.totalorder %s20, 0
    %p219 = por %p217, %p218
    %p220 = scmp.ne.s32.totalorder %s208, %s209
    %p221 = scmp.eq.s32.totalorder %s21, 1
    %p222 = por %p220, %p221
    %p224 = scmp.ne.s32.totalorder %s209, %s223
    %p225 = scmp.eq.s32.totalorder %s21, 0
    %p226 = por %p224, %p225
    %s227 = ssub.s32 %s15, %s22
    %p228 = scmp.eq.s32.totalorder %s227, 0
    %s230 = sadd.s32 %s229, 1
    %s231 = scalar_select %p228, %s229, %s230
    %p234 = pneg %p228
    %p235 = scmp.eq.s32.totalorder %s15, 1
    %p236 = por %p234, %p235
    %p237 = scmp.ne.s32.totalorder %s229, %s232
    %p238 = scmp.eq.s32.totalorder %s15, 0
    %p239 = por %p237, %p238
    %p240 = scmp.ne.s32.totalorder %s229, %s232
    %p241 = scmp.eq.s32.totalorder %s20, 1
    %p242 = por %p240, %p241
    %p243 = scmp.ne.s32.totalorder %s232, %s233
    %p244 = scmp.eq.s32.totalorder %s20, 0
    %p245 = por %p243, %p244
    %p246 = scmp.ne.s32.totalorder %s232, %s233
    %p247 = scmp.eq.s32.totalorder %s21, 1
    %p248 = por %p246, %p247
    %p250 = scmp.ne.s32.totalorder %s233, %s249
    %p251 = scmp.eq.s32.totalorder %s21, 0
    %p252 = por %p250, %p251
    %p253 = scmp.le.s32.totalorder 1, %s15
    %p254 = scmp.lt.s32.totalorder %s15, 3
    %p255 = pnand %p253, %p254
    %p256 = pneg %p255
    // Predicated region
    $region9: #{dgcnn_forward.5} parent=5 // pred_check
      _
    $region10: #{dgcnn_forward.5} parent=5 // pred_check_branch
      %258 = sbr.rel (%p255) target = $region12
    $region11: #{dgcnn_forward.5} parent=5 // pred_region
      %s259 = ssub.s32 %s15, 1
      // Predicated region
      $region13: #{dgcnn_forward.5} parent=11 // pred_check
        %p260 = pneg %p62
      $region14: #{dgcnn_forward.5} parent=11 // pred_check_branch
        %262 = sbr.rel (%p260) target = $region16
      $region15: #{dgcnn_forward.5} parent=11 // pred_region
        _
      $region16: #{dgcnn_forward.5} parent=11 // pred_fallthru
        _
      // Predicated region
      $region17: #{dgcnn_forward.5} parent=11 // pred_check
        %p263 = pneg %p135
      $region18: #{dgcnn_forward.5} parent=11 // pred_check_branch
        %265 = sbr.rel (%p263) target = $region20
      $region19: #{dgcnn_forward.5} parent=11 // pred_region
        _
      $region20: #{dgcnn_forward.5} parent=11 // pred_fallthru
        _
      // Predicated region
      $region21: #{dgcnn_forward.5} parent=11 // pred_check
        %p266 = pneg %p156
      $region22: #{dgcnn_forward.5} parent=11 // pred_check_branch
        %268 = sbr.rel (%p266) target = $region24
      $region23: #{dgcnn_forward.5} parent=11 // pred_region
        _
      $region24: #{dgcnn_forward.5} parent=11 // pred_fallthru
        _
      // Predicated region
      $region25: #{dgcnn_forward.5} parent=11 // pred_check
        %p269 = pneg %p177
      $region26: #{dgcnn_forward.5} parent=11 // pred_check_branch
        %271 = sbr.rel (%p269) target = $region28
      $region27: #{dgcnn_forward.5} parent=11 // pred_region
        _
      $region28: #{dgcnn_forward.5} parent=11 // pred_fallthru
        _
      // Predicated region
      $region29: #{dgcnn_forward.5} parent=11 // pred_check
        %p272 = pneg %p198
      $region30: #{dgcnn_forward.5} parent=11 // pred_check_branch
        %274 = sbr.rel (%p272) target = $region32
      $region31: #{dgcnn_forward.5} parent=11 // pred_region
        _
      $region32: #{dgcnn_forward.5} parent=11 // pred_fallthru
        _
      // Predicated region
      $region33: #{dgcnn_forward.5} parent=11 // pred_check
        %p275 = pneg %p219
      $region34: #{dgcnn_forward.5} parent=11 // pred_check_branch
        %277 = sbr.rel (%p275) target = $region36
      $region35: #{dgcnn_forward.5} parent=11 // pred_region
        _
      $region36: #{dgcnn_forward.5} parent=11 // pred_fallthru
        _
    $region12: #{dgcnn_forward.5} parent=5 // pred_fallthru
      _
    %p278 = scmp.lt.s32.totalorder %s15, 2
    // Predicated region
    $region37: #{dgcnn_forward.5} parent=5 // pred_check
      %p279 = pneg %p278
    $region38: #{dgcnn_forward.5} parent=5 // pred_check_branch
      %281 = sbr.rel (%p279) target = $region40
    $region39: #{dgcnn_forward.5} parent=5 // pred_region
      // Predicated region
      $region41: #{dgcnn_forward.5} parent=39 // pred_check
        %p282 = pneg %p35
      $region42: #{dgcnn_forward.5} parent=39 // pred_check_branch
        %284 = sbr.rel (%p282) target = $region44
      $region43: #{dgcnn_forward.5} parent=39 // pred_region
        %s285 = smul.u32 4, %s15
        %p286 = scmp.lt.s32.totalorder %s285, 7
        %s287 = scalar_select %p286, %s285, 7
        %s288 = smul.addr %s287, 8
        %s289 = scalar_lea.vmem %s0, %s288
        %s290 = smul.u32 4, %s15
      $region44: #{dgcnn_forward.5} parent=39 // pred_fallthru
        _
      // Predicated region
      $region45: #{dgcnn_forward.5} parent=39 // pred_check
        %p291 = pneg %p82
      $region46: #{dgcnn_forward.5} parent=39 // pred_check_branch
        %293 = sbr.rel (%p291) target = $region48
      $region47: #{dgcnn_forward.5} parent=39 // pred_region
        %s294 = smul.u32 4, %s15
        %p295 = scmp.lt.s32.totalorder %s294, 7
        %s296 = scalar_select %p295, %s294, 7
        %s297 = smul.addr %s296, 8
        %s298 = scalar_lea.vmem %s2, %s297
        %s299 = smul.u32 4, %s15
      $region48: #{dgcnn_forward.5} parent=39 // pred_fallthru
        _
      // Predicated region
      $region49: #{dgcnn_forward.5} parent=39 // pred_check
        %p300 = pneg %p108
      $region50: #{dgcnn_forward.5} parent=39 // pred_check_branch
        %302 = sbr.rel (%p300) target = $region52
      $region51: #{dgcnn_forward.5} parent=39 // pred_region
        %s303 = smul.u32 4, %s15
        %p304 = scmp.lt.s32.totalorder %s303, 7
        %s305 = scalar_select %p304, %s303, 7
        %s306 = smul.addr %s305, 8
        %s307 = scalar_lea.vmem %s3, %s306
        %s308 = smul.u32 4, %s15
      $region52: #{dgcnn_forward.5} parent=39 // pred_fallthru
        _
    $region40: #{dgcnn_forward.5} parent=5 // pred_fallthru
      _
    %p309 = scmp.le.s32.totalorder 1, %s15
    %p310 = scmp.lt.s32.totalorder %s15, 3
    %p311 = pnand %p309, %p310
    %p312 = pneg %p311
    // Predicated region
    $region53: #{dgcnn_forward.5} parent=5 // pred_check
      _
    $region54: #{dgcnn_forward.5} parent=5 // pred_check_branch
      %314 = sbr.rel (%p311) target = $region56
    $region55: #{dgcnn_forward.5} parent=5 // pred_region
      %s315 = ssub.s32 %s15, 1
      %s316 = smul.u32 4, %s20
      %p317 = scmp.lt.s32.totalorder %s316, 7
      %s318 = scalar_select %p317, %s316, 7
      %s319 = smul.addr %s318, 8
      %s320 = scalar_lea.vmem %s0, %s319
      %p321 = pneg %p41
      %p322 = pneg %p38
      %p323 = pneg %p62
      %p324 = pneg %p59
      %s325 = smul.u32 4, %s20
      %p326 = scmp.lt.s32.totalorder %s325, 7
      %s327 = scalar_select %p326, %s325, 7
      %s328 = smul.addr %s327, 8
      %s329 = scalar_lea.vmem %s2, %s328
      %p330 = pneg %p88
      %p331 = pneg %p85
      %s332 = smul.u32 4, %s20
      %p333 = scmp.lt.s32.totalorder %s332, 7
      %s334 = scalar_select %p333, %s332, 7
      %s335 = smul.addr %s334, 8
      %s336 = scalar_lea.vmem %s3, %s335
      %p337 = pneg %p114
      %p338 = pneg %p111
      %p339 = pneg %p135
      %p340 = pneg %p132
      %p341 = pneg %p156
      %p342 = pneg %p153
      %p343 = pneg %p177
      %p344 = pneg %p174
      %p345 = pneg %p198
      %p346 = pneg %p195
      %p347 = pneg %p219
      %p348 = pneg %p216
      %p349 = pneg %p245
      %p350 = pneg %p242
      %s351 = smul.u32 4, %s20
      %p352 = scmp.lt.s32.totalorder %s351, 7
      %s353 = scalar_select %p352, %s351, 7
      %s354 = smul.addr %s353, 8
      %s355 = scalar_lea.vmem %s9, %s354
      %s356 = smul.u32 4, %s20
      %p357 = scmp.lt.s32.totalorder %s356, 7
      %s358 = scalar_select %p357, %s356, 7
      %s359 = smul.addr %s358, 8
      %s360 = scalar_lea.vmem %s0, %s359
      %s361 = smul.u32 4, %s20
      %s362 = smul.u32 4, %s20
      %p363 = scmp.lt.s32.totalorder %s362, 7
      %s364 = scalar_select %p363, %s362, 7
      %s365 = smul.addr %s364, 8
      %s366 = scalar_lea.vmem %s2, %s365
      %s367 = smul.u32 4, %s20
      %s368 = smul.u32 4, %s20
      %p369 = scmp.lt.s32.totalorder %s368, 7
      %s370 = scalar_select %p369, %s368, 7
      %s371 = smul.addr %s370, 8
      %s372 = scalar_lea.vmem %s3, %s371
      %s373 = smul.u32 4, %s20
      %s374 = smul.u32 4, %s20
      %p375 = scmp.lt.s32.totalorder %s374, 7
      %s376 = scalar_select %p375, %s374, 7
      %s377 = smul.addr %s376, 8
      %s378 = scalar_lea.vmem %s9, %s377
      %s379 = smul.u32 4, %s20
      %v381 = vld [vmem:[%s372] sm:$0xff]
      %v382 = vld [vmem:[%s372 + $0x8] sm:$0xff]
      %v383 = vld [vmem:[%s372 + $0x10] sm:$0xff]
      %v384 = vld [vmem:[%s372 + $0x18] sm:$0xff]
      %v385 = vld [vmem:[%s4] sm:$0xff]
      %v386 = vld [vmem:[%s4 + $0x8] sm:$0xff]
      %v387 = vld [vmem:[%s4 + $0x10] sm:$0xff]
      %v388 = vld [vmem:[%s4 + $0x18] sm:$0xff]
      %v389 = vld [vmem:[%s4 + $0x20] sm:$0xff]
      %v390 = vld [vmem:[%s4 + $0x28] sm:$0xff]
      %v391 = vld [vmem:[%s4 + $0x30] sm:$0xff]
      %v392 = vld [vmem:[%s4 + $0x38] sm:$0xff]
      %v393 = vld [vmem:[%s5] sm:$0xff]
      %v394 = vld [vmem:[%s5 + $0x8] sm:$0xff]
      %v395 = vld [vmem:[%s5 + $0x10] sm:$0xff]
      %v396 = vld [vmem:[%s5 + $0x18] sm:$0xff]
      %v397 = vld [vmem:[%s5 + $0x20] sm:$0xff]
      %v398 = vld [vmem:[%s5 + $0x28] sm:$0xff]
      %v399 = vld [vmem:[%s5 + $0x30] sm:$0xff]
      %v400 = vld [vmem:[%s5 + $0x38] sm:$0xff]
      %v401 = vld [vmem:[%s5 + $0x40] sm:$0x1]
      %vm402 = vcmask 531456
      %v404 = vsel %vm402, %v381, 0
      %v407 = vsel %vm402, %v382, 0
      %v410 = vsel %vm402, %v383, 0
      %v413 = vsel %vm402, %v384, 0
      %vm415 = vcmask 1040384
      %v417 = vsel %vm415, %v401, 0
      %419 = vmatprep.subr.mxu0 0.0
      %420 = vmatpush1.msra.mxu0 0.0
      %421 = vmatprep.subr.mxu0 0.0
      %422 = vmatpush1.msra.mxu0 0.0
      %423 = vmatprep.subr.mxu0 0.0
      %424 = vmatpush1.msra.mxu0 0.0
      %425 = vmatprep.subr.mxu0 0.0
      %426 = vmatpush1.msra.mxu0 0.0
      %427 = vmatprep.subr.mxu0 0.0
      %428 = vmatpush1.msra.mxu0 0.0
      %429 = vmatprep.subr.mxu0 0.0
      %430 = vmatpush1.msra.mxu0 0.0
      %431 = vmatprep.subr.mxu0 0.0
      %432 = vmatpush1.msra.mxu0 0.0
      %433 = vmatprep.subr.mxu0 0.0
      %434 = vmatpush1.msra.mxu0 %v417
      %435 = vmatprep.subr.mxu0 0.0
      %436 = vmatpush1.msra.mxu0 %v400
      %437 = vmatprep.subr.mxu0 0.0
      %438 = vmatpush1.msra.mxu0 %v399
      %439 = vmatprep.subr.mxu0 0.0
      %440 = vmatpush1.msra.mxu0 %v398
      %441 = vmatprep.subr.mxu0 0.0
      %442 = vmatpush1.msra.mxu0 %v397
      %443 = vmatprep.subr.mxu0 0.0
      %444 = vmatpush1.msra.mxu0 %v396
      %445 = vmatprep.subr.mxu0 0.0
      %446 = vmatpush1.msra.mxu0 %v395
      %447 = vmatprep.subr.mxu0 0.0
      %448 = vmatpush1.msra.mxu0 %v394
      %449 = vmatprep.subr.mxu0 0.0
      %450 = vmatpush1.msra.mxu0 %v393
      %451 = vmatprep.subr.mxu0 0.0
      %452 = vmatpush2.msra.mxu0 0.0
      %453 = vmatprep.subr.mxu0 0.0
      %454 = vmatpush2.msra.mxu0 0.0
      %455 = vmatprep.subr.mxu0 0.0
      %456 = vmatpush2.msra.mxu0 0.0
      %457 = vmatprep.subr.mxu0 0.0
      %458 = vmatpush2.msra.mxu0 0.0
      %459 = vmatprep.subr.mxu0 0.0
      %460 = vmatpush2.msra.mxu0 0.0
      %461 = vmatprep.subr.mxu0 0.0
      %462 = vmatpush2.msra.mxu0 0.0
      %463 = vmatprep.subr.mxu0 0.0
      %464 = vmatpush2.msra.mxu0 0.0
      %465 = vmatprep.subr.mxu0 0.0
      %466 = vmatpush2.msra.mxu0 0.0
      %467 = vmatprep.subr.mxu0 0.0
      %468 = vmatpush2.msra.mxu0 0.0
      %469 = vmatprep.subr.mxu0 0.0
      %470 = vmatpush2.msra.mxu0 0.0
      %471 = vmatprep.subr.mxu0 0.0
      %472 = vmatpush2.msra.mxu0 0.0
      %473 = vmatprep.subr.mxu0 0.0
      %474 = vmatpush2.msra.mxu0 0.0
      %475 = vmatprep.subr.mxu0 0.0
      %476 = vmatpush2.msra.mxu0 0.0
      %477 = vmatprep.subr.mxu0 0.0
      %478 = vmatpush2.msra.mxu0 0.0
      %479 = vmatprep.subr.mxu0 0.0
      %480 = vmatpush2.msra.mxu0 0.0
      %481 = vmatprep.subr.mxu0 0.0
      %482 = vmatpush2.msra.mxu0 0.0
      %483 = vmatprep.mubr.f32.mxu0 0.0
      %484 = vmatmul.mubr.f32.gmra.mxu0 %v404
      %v485 = vpop.f32.mrf.mxu0
      %v486 = vadd.f32 0.0, %v485
      %v487 = vpop.f32.mrf.mxu0
      %488 = vmatprep.mubr.f32.mxu0 0.0
      %489 = vmatmul.mubr.f32.gmra.mxu0 %v407
      %v490 = vpop.f32.mrf.mxu0
      %v491 = vadd.f32 0.0, %v490
      %v492 = vpop.f32.mrf.mxu0
      %493 = vmatprep.mubr.f32.mxu0 0.0
      %494 = vmatmul.mubr.f32.gmra.mxu0 %v410
      %v495 = vpop.f32.mrf.mxu0
      %v496 = vadd.f32 0.0, %v495
      %v497 = vpop.f32.mrf.mxu0
      %498 = vmatprep.mubr.f32.mxu0 0.0
      %499 = vmatmul.mubr.f32.gmra.mxu0 %v413
      %v500 = vpop.f32.mrf.mxu0
      %v501 = vadd.f32 0.0, %v500
      %v502 = vpop.f32.mrf.mxu0
      %503 = vdwg.mxu0
      %v504 = vld [vmem:[%s6] sm:$0xff]
      %v505 = vld [vmem:[%s6 + $0x8] sm:$0xff]
      %v506 = vld [vmem:[%s6 + $0x10] sm:$0xff]
      %v507 = vld [vmem:[%s6 + $0x18] sm:$0xff]
      %v508 = vld [vmem:[%s6 + $0x20] sm:$0xff]
      %v509 = vld [vmem:[%s6 + $0x28] sm:$0xff]
      %v510 = vld [vmem:[%s6 + $0x30] sm:$0xff]
      %v511 = vld [vmem:[%s6 + $0x38] sm:$0xff]
      %v512 = vld [vmem:[%s6 + $0x40] sm:$0x1]
      %v514 = vsel %vm402, %v385, 0
      %v517 = vsel %vm402, %v386, 0
      %v520 = vsel %vm402, %v387, 0
      %v523 = vsel %vm402, %v388, 0
      %v526 = vsel %vm402, %v389, 0
      %v529 = vsel %vm402, %v390, 0
      %v532 = vsel %vm402, %v391, 0
      %v535 = vsel %vm402, %v392, 0
      %v538 = vsel %vm415, %v512, 0
      %540 = vmatprep.subr.mxu0 0.0
      %541 = vmatpush1.msra.mxu0 0.0
      %542 = vmatprep.subr.mxu0 0.0
      %543 = vmatpush1.msra.mxu0 0.0
      %544 = vmatprep.subr.mxu0 0.0
      %545 = vmatpush1.msra.mxu0 0.0
      %546 = vmatprep.subr.mxu0 0.0
      %547 = vmatpush1.msra.mxu0 0.0
      %548 = vmatprep.subr.mxu0 0.0
      %549 = vmatpush1.msra.mxu0 0.0
      %550 = vmatprep.subr.mxu0 0.0
      %551 = vmatpush1.msra.mxu0 0.0
      %552 = vmatprep.subr.mxu0 0.0
      %553 = vmatpush1.msra.mxu0 0.0
      %554 = vmatprep.subr.mxu0 0.0
      %555 = vmatpush1.msra.mxu0 %v538
      %556 = vmatprep.subr.mxu0 0.0
      %557 = vmatpush1.msra.mxu0 %v511
      %558 = vmatprep.subr.mxu0 0.0
      %559 = vmatpush1.msra.mxu0 %v510
      %560 = vmatprep.subr.mxu0 0.0
      %561 = vmatpush1.msra.mxu0 %v509
      %562 = vmatprep.subr.mxu0 0.0
      %563 = vmatpush1.msra.mxu0 %v508
      %564 = vmatprep.subr.mxu0 0.0
      %565 = vmatpush1.msra.mxu0 %v507
      %566 = vmatprep.subr.mxu0 0.0
      %567 = vmatpush1.msra.mxu0 %v506
      %568 = vmatprep.subr.mxu0 0.0
      %569 = vmatpush1.msra.mxu0 %v505
      %570 = vmatprep.subr.mxu0 0.0
      %571 = vmatpush1.msra.mxu0 %v504
      %572 = vmatprep.subr.mxu0 0.0
      %573 = vmatpush2.msra.mxu0 0.0
      %574 = vmatprep.subr.mxu0 0.0
      %575 = vmatpush2.msra.mxu0 0.0
      %576 = vmatprep.subr.mxu0 0.0
      %577 = vmatpush2.msra.mxu0 0.0
      %578 = vmatprep.subr.mxu0 0.0
      %579 = vmatpush2.msra.mxu0 0.0
      %580 = vmatprep.subr.mxu0 0.0
      %581 = vmatpush2.msra.mxu0 0.0
      %582 = vmatprep.subr.mxu0 0.0
      %583 = vmatpush2.msra.mxu0 0.0
      %584 = vmatprep.subr.mxu0 0.0
      %585 = vmatpush2.msra.mxu0 0.0
      %586 = vmatprep.subr.mxu0 0.0
      %587 = vmatpush2.msra.mxu0 0.0
      %588 = vmatprep.subr.mxu0 0.0
      %589 = vmatpush2.msra.mxu0 0.0
      %590 = vmatprep.subr.mxu0 0.0
      %591 = vmatpush2.msra.mxu0 0.0
      %592 = vmatprep.subr.mxu0 0.0
      %593 = vmatpush2.msra.mxu0 0.0
      %594 = vmatprep.subr.mxu0 0.0
      %595 = vmatpush2.msra.mxu0 0.0
      %596 = vmatprep.subr.mxu0 0.0
      %597 = vmatpush2.msra.mxu0 0.0
      %598 = vmatprep.subr.mxu0 0.0
      %599 = vmatpush2.msra.mxu0 0.0
      %600 = vmatprep.subr.mxu0 0.0
      %601 = vmatpush2.msra.mxu0 0.0
      %602 = vmatprep.subr.mxu0 0.0
      %603 = vmatpush2.msra.mxu0 0.0
      %604 = vmatprep.mubr.f32.mxu0 0.0
      %605 = vmatmul.mubr.f32.gmra.mxu0 %v514
      %v606 = vpop.f32.mrf.mxu0
      %v607 = vadd.f32 0.0, %v606
      %v608 = vpop.f32.mrf.mxu0
      %609 = vmatprep.mubr.f32.mxu0 0.0
      %610 = vmatmul.mubr.f32.gmra.mxu0 %v517
      %v611 = vpop.f32.mrf.mxu0
      %v612 = vadd.f32 0.0, %v611
      %v613 = vpop.f32.mrf.mxu0
      %614 = vmatprep.mubr.f32.mxu0 0.0
      %615 = vmatmul.mubr.f32.gmra.mxu0 %v520
      %v616 = vpop.f32.mrf.mxu0
      %v617 = vadd.f32 0.0, %v616
      %v618 = vpop.f32.mrf.mxu0
      %619 = vmatprep.mubr.f32.mxu0 0.0
      %620 = vmatmul.mubr.f32.gmra.mxu0 %v523
      %v621 = vpop.f32.mrf.mxu0
      %v622 = vadd.f32 0.0, %v621
      %v623 = vpop.f32.mrf.mxu0
      %624 = vmatprep.mubr.f32.mxu0 0.0
      %625 = vmatmul.mubr.f32.gmra.mxu0 %v526
      %v626 = vpop.f32.mrf.mxu0
      %v627 = vadd.f32 0.0, %v626
      %v628 = vpop.f32.mrf.mxu0
      %629 = vmatprep.mubr.f32.mxu0 0.0
      %630 = vmatmul.mubr.f32.gmra.mxu0 %v529
      %v631 = vpop.f32.mrf.mxu0
      %v632 = vadd.f32 0.0, %v631
      %v633 = vpop.f32.mrf.mxu0
      %634 = vmatprep.mubr.f32.mxu0 0.0
      %635 = vmatmul.mubr.f32.gmra.mxu0 %v532
      %v636 = vpop.f32.mrf.mxu0
      %v637 = vadd.f32 0.0, %v636
      %v638 = vpop.f32.mrf.mxu0
      %639 = vmatprep.mubr.f32.mxu0 0.0
      %640 = vmatmul.mubr.f32.gmra.mxu0 %v535
      %v641 = vpop.f32.mrf.mxu0
      %v642 = vadd.f32 0.0, %v641
      %v643 = vpop.f32.mrf.mxu0
      %644 = vdwg.mxu0
      %v645 = vpack.c.bf16 %v612, %v607
      %v646 = vpack.c.bf16 %v622, %v617
      %v647 = vpack.c.bf16 %v632, %v627
      %v648 = vpack.c.bf16 %v642, %v637
      %v649 = vld [vmem:[%s366] sm:$0xff]
      %v650 = vld [vmem:[%s366 + $0x8] sm:$0xff]
      %v651 = vld [vmem:[%s366 + $0x10] sm:$0xff]
      %v652 = vld [vmem:[%s366 + $0x18] sm:$0xff]
      %654 = vset.pattern.permute.xlu0 0
      %655 = vperm.xlu0 %654, %v649
      %v656 = vpop.permute.xlu0 %655
      %659 = vset.pattern.permute.xlu0 0
      %660 = vperm.xlu0 %659, %v650
      %v661 = vpop.permute.xlu0 %660
      %664 = vset.pattern.permute.xlu0 0
      %665 = vperm.xlu0 %664, %v651
      %v666 = vpop.permute.xlu0 %665
      %669 = vset.pattern.permute.xlu0 0
      %670 = vperm.xlu0 %669, %v652
      %v671 = vpop.permute.xlu0 %670
      %673 = vmatprep.subr.mxu0 0.0
      %674 = vmatpush1.xpose.msra.mxu0 0.0
      %675 = vmatprep.subr.mxu0 0.0
      %676 = vmatpush1.xpose.msra.mxu0 0.0
      %677 = vmatprep.subr.mxu0 0.0
      %678 = vmatpush1.xpose.msra.mxu0 0.0
      %679 = vmatprep.subr.mxu0 0.0
      %680 = vmatpush1.xpose.msra.mxu0 0.0
      %681 = vmatprep.subr.mxu0 0.0
      %682 = vmatpush1.xpose.msra.mxu0 0.0
      %683 = vmatprep.subr.mxu0 0.0
      %684 = vmatpush1.xpose.msra.mxu0 0.0
      %685 = vmatprep.subr.mxu0 0.0
      %686 = vmatpush1.xpose.msra.mxu0 0.0
      %687 = vmatprep.subr.mxu0 0.0
      %688 = vmatpush1.xpose.msra.mxu0 0.0
      %689 = vmatprep.subr.mxu0 0.0
      %690 = vmatpush1.xpose.msra.mxu0 %v535
      %691 = vmatprep.subr.mxu0 0.0
      %692 = vmatpush1.xpose.msra.mxu0 %v532
      %693 = vmatprep.subr.mxu0 0.0
      %694 = vmatpush1.xpose.msra.mxu0 %v529
      %695 = vmatprep.subr.mxu0 0.0
      %696 = vmatpush1.xpose.msra.mxu0 %v526
      %697 = vmatprep.subr.mxu0 0.0
      %698 = vmatpush1.xpose.msra.mxu0 %v523
      %699 = vmatprep.subr.mxu0 0.0
      %700 = vmatpush1.xpose.msra.mxu0 %v520
      %701 = vmatprep.subr.mxu0 0.0
      %702 = vmatpush1.xpose.msra.mxu0 %v517
      %703 = vmatprep.subr.mxu0 0.0
      %704 = vmatpush1.xpose.msra.mxu0 %v514
      %705 = vmatprep.subr.mxu0 0.0
      %706 = vmatpush2.xpose.msra.mxu0 0.0
      %707 = vmatprep.subr.mxu0 0.0
      %708 = vmatpush2.xpose.msra.mxu0 0.0
      %709 = vmatprep.subr.mxu0 0.0
      %710 = vmatpush2.xpose.msra.mxu0 0.0
      %711 = vmatprep.subr.mxu0 0.0
      %712 = vmatpush2.xpose.msra.mxu0 0.0
      %713 = vmatprep.subr.mxu0 0.0
      %714 = vmatpush2.xpose.msra.mxu0 0.0
      %715 = vmatprep.subr.mxu0 0.0
      %716 = vmatpush2.xpose.msra.mxu0 0.0
      %717 = vmatprep.subr.mxu0 0.0
      %718 = vmatpush2.xpose.msra.mxu0 0.0
      %719 = vmatprep.subr.mxu0 0.0
      %720 = vmatpush2.xpose.msra.mxu0 0.0
      %721 = vmatprep.subr.mxu0 0.0
      %722 = vmatpush2.xpose.msra.mxu0 0.0
      %723 = vmatprep.subr.mxu0 0.0
      %724 = vmatpush2.xpose.msra.mxu0 0.0
      %725 = vmatprep.subr.mxu0 0.0
      %726 = vmatpush2.xpose.msra.mxu0 0.0
      %727 = vmatprep.subr.mxu0 0.0
      %728 = vmatpush2.xpose.msra.mxu0 0.0
      %729 = vmatprep.subr.mxu0 0.0
      %730 = vmatpush2.xpose.msra.mxu0 0.0
      %731 = vmatprep.subr.mxu0 0.0
      %732 = vmatpush2.xpose.msra.mxu0 0.0
      %733 = vmatprep.subr.mxu0 0.0
      %734 = vmatpush2.xpose.msra.mxu0 0.0
      %735 = vmatprep.subr.mxu0 0.0
      %736 = vmatpush2.xpose.msra.mxu0 0.0
      %737 = vmatprep.mubr.f32.mxu0 0.0
      %738 = vmatmul.mubr.f32.gmra.mxu0 %v404
      %v739 = vpop.f32.mrf.mxu0
      %v740 = vadd.f32 %v656, %v739
      %v741 = vpop.f32.mrf.mxu0
      %742 = vmatprep.mubr.f32.mxu0 0.0
      %743 = vmatmul.mubr.f32.gmra.mxu0 %v407
      %v744 = vpop.f32.mrf.mxu0
      %v745 = vadd.f32 %v661, %v744
      %v746 = vpop.f32.mrf.mxu0
      %747 = vmatprep.mubr.f32.mxu0 0.0
      %748 = vmatmul.mubr.f32.gmra.mxu0 %v410
      %v749 = vpop.f32.mrf.mxu0
      %v750 = vadd.f32 %v666, %v749
      %v751 = vpop.f32.mrf.mxu0
      %752 = vmatprep.mubr.f32.mxu0 0.0
      %753 = vmatmul.mubr.f32.gmra.mxu0 %v413
      %v754 = vpop.f32.mrf.mxu0
      %v755 = vadd.f32 %v671, %v754
      %v756 = vpop.f32.mrf.mxu0
      %757 = vdwg.mxu0
      %v758 = vld [vmem:[%s360] sm:$0xff]
      %v759 = vld [vmem:[%s360 + $0x8] sm:$0xff]
      %v760 = vld [vmem:[%s360 + $0x10] sm:$0xff]
      %v761 = vld [vmem:[%s360 + $0x18] sm:$0xff]
      %v762 = vld [vmem:[%s1] sm:$0x1]
      %764 = vset.pattern.permute.xlu0 0
      %765 = vperm.xlu0 %764, %v758
      %v766 = vpop.permute.xlu0 %765
      %769 = vset.pattern.permute.xlu0 0
      %770 = vperm.xlu0 %769, %v759
      %v771 = vpop.permute.xlu0 %770
      %774 = vset.pattern.permute.xlu0 0
      %775 = vperm.xlu0 %774, %v760
      %v776 = vpop.permute.xlu0 %775
      %779 = vset.pattern.permute.xlu0 0
      %780 = vperm.xlu0 %779, %v761
      %v781 = vpop.permute.xlu0 %780
      %v784 = vlaneseq
      %v785 = vshrl.u32 %v784, 7
      %v786 = vsub.s32 0, %v785
      %v787 = vrot.slane %v762, %v786
      %vm789 = vcmp.eq.f32.partialorder %v766, %v787
      %vm790 = vcmp.eq.f32.partialorder %v771, %v787
      %vm791 = vcmp.eq.f32.partialorder %v776, %v787
      %vm792 = vcmp.eq.f32.partialorder %v781, %v787
      %v793 = vsel %vm789, %v740, 1e+30
      %v794 = vsel %vm790, %v745, 1e+30
      %v795 = vsel %vm791, %v750, 1e+30
      %v796 = vsel %vm792, %v755, 1e+30
      %v797 = vlaneseq
      %v798 = vand.u32 %v797, 127
      %v803 = vand.u32 %v793, 4294967232
      %v804 = vand.u32 %v794, 4294967232
      %v805 = vand.u32 %v795, 4294967232
      %v806 = vand.u32 %v796, 4294967232
      %v807 = vor.u32 %v803, %v798
      %v808 = vor.u32 %v804, %v798
      %v809 = vor.u32 %v805, %v798
      %v810 = vor.u32 %v806, %v798
      %v811 = vld [vmem:[%s7] sm:$0xf]
      %v812 = vld [vmem:[%s7 + $0x4] sm:$0xf]
      %v813 = vld [vmem:[%s7 + $0x8] sm:$0xf]
      %v814 = vld [vmem:[%s7 + $0xc] sm:$0xf]
      %v815 = vld [vmem:[%s7 + $0x10] sm:$0xf]
      %v816 = vld [vmem:[%s7 + $0x14] sm:$0xf]
      %v817 = vld [vmem:[%s7 + $0x18] sm:$0xf]
      %v818 = vld [vmem:[%s7 + $0x1c] sm:$0xf]
      %v819 = vld [vmem:[%s8] sm:$0x1]
      %vm820 = vcmask 523264
      %v821 = vsel %vm820, %v807, 2147483647
      %v822 = vand.u32 %v821, 65535
      %v823 = vshra.s32 %v821, 16
      %v824 = vcvt.s32.f32 %v822
      %v825 = vcvt.s32.f32 %v823
      %826 = vmin.xlane.f32.xlu0 %v825
      %v827 = vpop.xlane.xlu0 %826
      %vm828 = vcmp.eq.f32.partialorder %v825, %v827
      %v829 = vsel %vm828, %v824, inf
      %830 = vmin.xlane.f32.xlu0 %v829
      %v831 = vpop.xlane.xlu0 %830
      %v832 = vcvt.f32.s32 %v831
      %v833 = vcvt.f32.s32 %v827
      %v834 = vshll.u32 %v833, 16
      %v835 = vadd.s32 %v834, %v832
      %v836 = vsel %vm820, %v808, 2147483647
      %v837 = vand.u32 %v836, 65535
      %v838 = vshra.s32 %v836, 16
      %v839 = vcvt.s32.f32 %v837
      %v840 = vcvt.s32.f32 %v838
      %841 = vmin.xlane.f32.xlu0 %v840
      %v842 = vpop.xlane.xlu0 %841
      %vm843 = vcmp.eq.f32.partialorder %v840, %v842
      %v844 = vsel %vm843, %v839, inf
      %845 = vmin.xlane.f32.xlu0 %v844
      %v846 = vpop.xlane.xlu0 %845
      %v847 = vcvt.f32.s32 %v846
      %v848 = vcvt.f32.s32 %v842
      %v849 = vshll.u32 %v848, 16
      %v850 = vadd.s32 %v849, %v847
      %v851 = vsel %vm820, %v809, 2147483647
      %v852 = vand.u32 %v851, 65535
      %v853 = vshra.s32 %v851, 16
      %v854 = vcvt.s32.f32 %v852
      %v855 = vcvt.s32.f32 %v853
      %856 = vmin.xlane.f32.xlu0 %v855
      %v857 = vpop.xlane.xlu0 %856
      %vm858 = vcmp.eq.f32.partialorder %v855, %v857
      %v859 = vsel %vm858, %v854, inf
      %860 = vmin.xlane.f32.xlu0 %v859
      %v861 = vpop.xlane.xlu0 %860
      %v862 = vcvt.f32.s32 %v861
      %v863 = vcvt.f32.s32 %v857
      %v864 = vshll.u32 %v863, 16
      %v865 = vadd.s32 %v864, %v862
      %v866 = vsel %vm820, %v810, 2147483647
      %v867 = vand.u32 %v866, 65535
      %v868 = vshra.s32 %v866, 16
      %v869 = vcvt.s32.f32 %v867
      %v870 = vcvt.s32.f32 %v868
      %871 = vmin.xlane.f32.xlu0 %v870
      %v872 = vpop.xlane.xlu0 %871
      %vm873 = vcmp.eq.f32.partialorder %v870, %v872
      %v874 = vsel %vm873, %v869, inf
      %875 = vmin.xlane.f32.xlu0 %v874
      %v876 = vpop.xlane.xlu0 %875
      %v877 = vcvt.f32.s32 %v876
      %v878 = vcvt.f32.s32 %v872
      %v879 = vshll.u32 %v878, 16
      %v880 = vadd.s32 %v879, %v877
      %vm881 = vcmp.eq.s32.totalorder %v807, %v835
      %vm882 = vcmp.eq.s32.totalorder %v808, %v850
      %vm883 = vcmp.eq.s32.totalorder %v809, %v865
      %vm884 = vcmp.eq.s32.totalorder %v810, %v880
      %v885 = vsel %vm881, 1, 0
      %v886 = vsel %vm882, 1, 0
      %v887 = vsel %vm883, 1, 0
      %v888 = vsel %vm884, 1, 0
      %v889 = vcvt.s32.f32 %v885
      %v890 = vcvt.s32.f32 %v886
      %v891 = vcvt.s32.f32 %v887
      %v892 = vcvt.s32.f32 %v888
      %v893 = vpack.c.bf16 %v890, %v889
      %v894 = vpack.c.bf16 %v892, %v891
      %v896 = vsel %vm820, %v893, 0
      %v899 = vsel %vm820, %v894, 0
      %901 = vmatprep.subr.bf16.mxu0 0
      %902 = vmatpush1.bf16.msra.mxu0 0
      %903 = vmatprep.subr.bf16.mxu0 0
      %904 = vmatpush1.bf16.msra.mxu0 0
      %905 = vmatprep.subr.bf16.mxu0 0
      %906 = vmatpush1.bf16.msra.mxu0 0
      %907 = vmatprep.subr.bf16.mxu0 0
      %908 = vmatpush1.bf16.msra.mxu0 0
      %909 = vmatprep.subr.bf16.mxu0 0
      %910 = vmatpush1.bf16.msra.mxu0 %v648
      %911 = vmatprep.subr.bf16.mxu0 0
      %912 = vmatpush1.bf16.msra.mxu0 %v647
      %913 = vmatprep.subr.bf16.mxu0 0
      %914 = vmatpush1.bf16.msra.mxu0 %v646
      %915 = vmatprep.subr.bf16.mxu0 0
      %916 = vmatpush1.bf16.msra.mxu0 %v645
      %917 = vmatprep.subr.bf16.mxu0 0
      %918 = vmatpush2.bf16.msra.mxu0 0
      %919 = vmatprep.subr.bf16.mxu0 0
      %920 = vmatpush2.bf16.msra.mxu0 0
      %921 = vmatprep.subr.bf16.mxu0 0
      %922 = vmatpush2.bf16.msra.mxu0 0
      %923 = vmatprep.subr.bf16.mxu0 0
      %924 = vmatpush2.bf16.msra.mxu0 0
      %925 = vmatprep.subr.bf16.mxu0 0
      %926 = vmatpush2.bf16.msra.mxu0 0
      %927 = vmatprep.subr.bf16.mxu0 0
      %928 = vmatpush2.bf16.msra.mxu0 0
      %929 = vmatprep.subr.bf16.mxu0 0
      %930 = vmatpush2.bf16.msra.mxu0 0
      %931 = vmatprep.subr.bf16.mxu0 0
      %932 = vmatpush2.bf16.msra.mxu0 0
      %933 = vmatprep.mubr.bf16.mxu0 0
      %934 = vmatmul.mubr.bf16.gmra.mxu0 %v896
      %v935 = vpop.f32.mrf.mxu0
      %v936 = vadd.f32 0.0, %v935
      %v937 = vpop.f32.mrf.mxu0
      %v938 = vpop.f32.mrf.mxu0
      %v939 = vadd.f32 0.0, %v938
      %v940 = vpop.f32.mrf.mxu0
      %941 = vmatprep.mubr.bf16.mxu0 0
      %942 = vmatmul.mubr.bf16.gmra.mxu0 %v899
      %v943 = vpop.f32.mrf.mxu0
      %v944 = vadd.f32 0.0, %v943
      %v945 = vpop.f32.mrf.mxu0
      %v946 = vpop.f32.mrf.mxu0
      %v947 = vadd.f32 0.0, %v946
      %v948 = vpop.f32.mrf.mxu0
      %949 = vdwg.mxu0
      %v950 = vadd.f32 %v486, %v936
      %v951 = vadd.f32 %v491, %v939
      %v952 = vadd.f32 %v496, %v944
      %v953 = vadd.f32 %v501, %v947
      %v954 = vmax.f32 %v950, 0.0
      %v955 = vmax.f32 %v951, 0.0
      %v956 = vmax.f32 %v952, 0.0
      %v957 = vmax.f32 %v953, 0.0
      %v958 = vpack.c.bf16 %v955, %v954
      %v959 = vpack.c.bf16 %v957, %v956
      %v961 = vlaneseq
      %v962 = vshrl.u32 %v961, 7
      %v963 = vsub.s32 0, %v962
      %v964 = vrot.slane %v819, %v963
      %v974 = vunpack.c.l.b16 %v811
      %v975 = vunpack.c.l.b16 %v812
      %v976 = vunpack.c.l.b16 %v813
      %v977 = vunpack.c.l.b16 %v814
      %v978 = vunpack.c.l.b16 %v815
      %v979 = vunpack.c.l.b16 %v816
      %v980 = vunpack.c.l.b16 %v817
      %v981 = vunpack.c.l.b16 %v818
      %v982 = vpack.c.b16 %v975, %v974
      %v983 = vpack.c.b16 %v977, %v976
      %v984 = vpack.c.b16 %v979, %v978
      %v985 = vpack.c.b16 %v981, %v980
      %v991 = vsel %vm820, %v958, 0
      %v994 = vsel %vm820, %v959, 0
      %996 = vmatprep.subr.bf16.mxu0 0
      %997 = vmatpush1.bf16.msra.mxu0 0
      %998 = vmatprep.subr.bf16.mxu0 0
      %999 = vmatpush1.bf16.msra.mxu0 0
      %1000 = vmatprep.subr.bf16.mxu0 0
      %1001 = vmatpush1.bf16.msra.mxu0 0
      %1002 = vmatprep.subr.bf16.mxu0 0
      %1003 = vmatpush1.bf16.msra.mxu0 0
      %1004 = vmatprep.subr.bf16.mxu0 0
      %1005 = vmatpush1.bf16.msra.mxu0 %v985
      %1006 = vmatprep.subr.bf16.mxu0 0
      %1007 = vmatpush1.bf16.msra.mxu0 %v984
      %1008 = vmatprep.subr.bf16.mxu0 0
      %1009 = vmatpush1.bf16.msra.mxu0 %v983
      %1010 = vmatprep.subr.bf16.mxu0 0
      %1011 = vmatpush1.bf16.msra.mxu0 %v982
      %1012 = vmatprep.subr.bf16.mxu0 0
      %1013 = vmatpush2.bf16.msra.mxu0 0
      %1014 = vmatprep.subr.bf16.mxu0 0
      %1015 = vmatpush2.bf16.msra.mxu0 0
      %1016 = vmatprep.subr.bf16.mxu0 0
      %1017 = vmatpush2.bf16.msra.mxu0 0
      %1018 = vmatprep.subr.bf16.mxu0 0
      %1019 = vmatpush2.bf16.msra.mxu0 0
      %1020 = vmatprep.subr.bf16.mxu0 0
      %1021 = vmatpush2.bf16.msra.mxu0 0
      %1022 = vmatprep.subr.bf16.mxu0 0
      %1023 = vmatpush2.bf16.msra.mxu0 0
      %1024 = vmatprep.subr.bf16.mxu0 0
      %1025 = vmatpush2.bf16.msra.mxu0 0
      %1026 = vmatprep.subr.bf16.mxu0 0
      %1027 = vmatpush2.bf16.msra.mxu0 0
      %1028 = vmatprep.mubr.bf16.mxu0 0
      %1029 = vmatmul.mubr.bf16.gmra.mxu0 %v991
      %v1030 = vpop.f32.mrf.mxu0
      %v1031 = vadd.f32 %v964, %v1030
      %v1032 = vpop.f32.mrf.mxu0
      %v1033 = vpop.f32.mrf.mxu0
      %v1034 = vadd.f32 %v964, %v1033
      %v1035 = vpop.f32.mrf.mxu0
      %1036 = vmatprep.mubr.bf16.mxu0 0
      %1037 = vmatmul.mubr.bf16.gmra.mxu0 %v994
      %v1038 = vpop.f32.mrf.mxu0
      %v1039 = vadd.f32 %v964, %v1038
      %v1040 = vpop.f32.mrf.mxu0
      %v1041 = vpop.f32.mrf.mxu0
      %v1042 = vadd.f32 %v964, %v1041
      %v1043 = vpop.f32.mrf.mxu0
      %1044 = vdwg.mxu0
      %v1045 = vsel %vm881, 2147483647, %v807
      %v1046 = vsel %vm882, 2147483647, %v808
      %v1047 = vsel %vm883, 2147483647, %v809
      %v1048 = vsel %vm884, 2147483647, %v810
      %v1049 = vsel %vm820, %v1045, 2147483647
      %v1050 = vand.u32 %v1049, 65535
      %v1051 = vshra.s32 %v1049, 16
      %v1052 = vcvt.s32.f32 %v1050
      %v1053 = vcvt.s32.f32 %v1051
      %1054 = vmin.xlane.f32.xlu0 %v1053
      %v1055 = vpop.xlane.xlu0 %1054
      %vm1056 = vcmp.eq.f32.partialorder %v1053, %v1055
      %v1057 = vsel %vm1056, %v1052, inf
      %1058 = vmin.xlane.f32.xlu0 %v1057
      %v1059 = vpop.xlane.xlu0 %1058
      %v1060 = vcvt.f32.s32 %v1059
      %v1061 = vcvt.f32.s32 %v1055
      %v1062 = vshll.u32 %v1061, 16
      %v1063 = vadd.s32 %v1062, %v1060
      %v1064 = vsel %vm820, %v1046, 2147483647
      %v1065 = vand.u32 %v1064, 65535
      %v1066 = vshra.s32 %v1064, 16
      %v1067 = vcvt.s32.f32 %v1065
      %v1068 = vcvt.s32.f32 %v1066
      %1069 = vmin.xlane.f32.xlu0 %v1068
      %v1070 = vpop.xlane.xlu0 %1069
      %vm1071 = vcmp.eq.f32.partialorder %v1068, %v1070
      %v1072 = vsel %vm1071, %v1067, inf
      %1073 = vmin.xlane.f32.xlu0 %v1072
      %v1074 = vpop.xlane.xlu0 %1073
      %v1075 = vcvt.f32.s32 %v1074
      %v1076 = vcvt.f32.s32 %v1070
      %v1077 = vshll.u32 %v1076, 16
      %v1078 = vadd.s32 %v1077, %v1075
      %v1079 = vsel %vm820, %v1047, 2147483647
      %v1080 = vand.u32 %v1079, 65535
      %v1081 = vshra.s32 %v1079, 16
      %v1082 = vcvt.s32.f32 %v1080
      %v1083 = vcvt.s32.f32 %v1081
      %1084 = vmin.xlane.f32.xlu0 %v1083
      %v1085 = vpop.xlane.xlu0 %1084
      %vm1086 = vcmp.eq.f32.partialorder %v1083, %v1085
      %v1087 = vsel %vm1086, %v1082, inf
      %1088 = vmin.xlane.f32.xlu0 %v1087
      %v1089 = vpop.xlane.xlu0 %1088
      %v1090 = vcvt.f32.s32 %v1089
      %v1091 = vcvt.f32.s32 %v1085
      %v1092 = vshll.u32 %v1091, 16
      %v1093 = vadd.s32 %v1092, %v1090
      %v1094 = vsel %vm820, %v1048, 2147483647
      %v1095 = vand.u32 %v1094, 65535
      %v1096 = vshra.s32 %v1094, 16
      %v1097 = vcvt.s32.f32 %v1095
      %v1098 = vcvt.s32.f32 %v1096
      %1099 = vmin.xlane.f32.xlu0 %v1098
      %v1100 = vpop.xlane.xlu0 %1099
      %vm1101 = vcmp.eq.f32.partialorder %v1098, %v1100
      %v1102 = vsel %vm1101, %v1097, inf
      %1103 = vmin.xlane.f32.xlu0 %v1102
      %v1104 = vpop.xlane.xlu0 %1103
      %v1105 = vcvt.f32.s32 %v1104
      %v1106 = vcvt.f32.s32 %v1100
      %v1107 = vshll.u32 %v1106, 16
      %v1108 = vadd.s32 %v1107, %v1105
      %vm1109 = vcmp.eq.s32.totalorder %v1045, %v1063
      %vm1110 = vcmp.eq.s32.totalorder %v1046, %v1078
      %vm1111 = vcmp.eq.s32.totalorder %v1047, %v1093
      %vm1112 = vcmp.eq.s32.totalorder %v1048, %v1108
      %v1113 = vsel %vm1109, 1, 0
      %v1114 = vsel %vm1110, 1, 0
      %v1115 = vsel %vm1111, 1, 0
      %v1116 = vsel %vm1112, 1, 0
      %v1117 = vcvt.s32.f32 %v1113
      %v1118 = vcvt.s32.f32 %v1114
      %v1119 = vcvt.s32.f32 %v1115
      %v1120 = vcvt.s32.f32 %v1116
      %v1121 = vpack.c.bf16 %v1118, %v1117
      %v1122 = vpack.c.bf16 %v1120, %v1119
      %v1124 = vsel %vm820, %v1121, 0
      %v1127 = vsel %vm820, %v1122, 0
      %1129 = vmatprep.subr.bf16.mxu0 0
      %1130 = vmatpush1.bf16.msra.mxu0 0
      %1131 = vmatprep.subr.bf16.mxu0 0
      %1132 = vmatpush1.bf16.msra.mxu0 0
      %1133 = vmatprep.subr.bf16.mxu0 0
      %1134 = vmatpush1.bf16.msra.mxu0 0
      %1135 = vmatprep.subr.bf16.mxu0 0
      %1136 = vmatpush1.bf16.msra.mxu0 0
      %1137 = vmatprep.subr.bf16.mxu0 0
      %1138 = vmatpush1.bf16.msra.mxu0 %v648
      %1139 = vmatprep.subr.bf16.mxu0 0
      %1140 = vmatpush1.bf16.msra.mxu0 %v647
      %1141 = vmatprep.subr.bf16.mxu0 0
      %1142 = vmatpush1.bf16.msra.mxu0 %v646
      %1143 = vmatprep.subr.bf16.mxu0 0
      %1144 = vmatpush1.bf16.msra.mxu0 %v645
      %1145 = vmatprep.subr.bf16.mxu0 0
      %1146 = vmatpush2.bf16.msra.mxu0 0
      %1147 = vmatprep.subr.bf16.mxu0 0
      %1148 = vmatpush2.bf16.msra.mxu0 0
      %1149 = vmatprep.subr.bf16.mxu0 0
      %1150 = vmatpush2.bf16.msra.mxu0 0
      %1151 = vmatprep.subr.bf16.mxu0 0
      %1152 = vmatpush2.bf16.msra.mxu0 0
      %1153 = vmatprep.subr.bf16.mxu0 0
      %1154 = vmatpush2.bf16.msra.mxu0 0
      %1155 = vmatprep.subr.bf16.mxu0 0
      %1156 = vmatpush2.bf16.msra.mxu0 0
      %1157 = vmatprep.subr.bf16.mxu0 0
      %1158 = vmatpush2.bf16.msra.mxu0 0
      %1159 = vmatprep.subr.bf16.mxu0 0
      %1160 = vmatpush2.bf16.msra.mxu0 0
      %1161 = vmatprep.mubr.bf16.mxu0 0
      %1162 = vmatmul.mubr.bf16.gmra.mxu0 %v1124
      %v1163 = vpop.f32.mrf.mxu0
      %v1164 = vadd.f32 0.0, %v1163
      %v1165 = vpop.f32.mrf.mxu0
      %v1166 = vpop.f32.mrf.mxu0
      %v1167 = vadd.f32 0.0, %v1166
      %v1168 = vpop.f32.mrf.mxu0
      %1169 = vmatprep.mubr.bf16.mxu0 0
      %1170 = vmatmul.mubr.bf16.gmra.mxu0 %v1127
      %v1171 = vpop.f32.mrf.mxu0
      %v1172 = vadd.f32 0.0, %v1171
      %v1173 = vpop.f32.mrf.mxu0
      %v1174 = vpop.f32.mrf.mxu0
      %v1175 = vadd.f32 0.0, %v1174
      %v1176 = vpop.f32.mrf.mxu0
      %1177 = vdwg.mxu0
      %v1178 = vadd.f32 %v486, %v1164
      %v1179 = vadd.f32 %v491, %v1167
      %v1180 = vadd.f32 %v496, %v1172
      %v1181 = vadd.f32 %v501, %v1175
      %v1182 = vmax.f32 %v1178, 0.0
      %v1183 = vmax.f32 %v1179, 0.0
      %v1184 = vmax.f32 %v1180, 0.0
      %v1185 = vmax.f32 %v1181, 0.0
      %v1186 = vpack.c.bf16 %v1183, %v1182
      %v1187 = vpack.c.bf16 %v1185, %v1184
      %v1189 = vsel %vm820, %v1186, 0
      %v1192 = vsel %vm820, %v1187, 0
      %1194 = vmatprep.subr.bf16.mxu0 0
      %1195 = vmatpush1.bf16.msra.mxu0 0
      %1196 = vmatprep.subr.bf16.mxu0 0
      %1197 = vmatpush1.bf16.msra.mxu0 0
      %1198 = vmatprep.subr.bf16.mxu0 0
      %1199 = vmatpush1.bf16.msra.mxu0 0
      %1200 = vmatprep.subr.bf16.mxu0 0
      %1201 = vmatpush1.bf16.msra.mxu0 0
      %1202 = vmatprep.subr.bf16.mxu0 0
      %1203 = vmatpush1.bf16.msra.mxu0 %v985
      %1204 = vmatprep.subr.bf16.mxu0 0
      %1205 = vmatpush1.bf16.msra.mxu0 %v984
      %1206 = vmatprep.subr.bf16.mxu0 0
      %1207 = vmatpush1.bf16.msra.mxu0 %v983
      %1208 = vmatprep.subr.bf16.mxu0 0
      %1209 = vmatpush1.bf16.msra.mxu0 %v982
      %1210 = vmatprep.subr.bf16.mxu0 0
      %1211 = vmatpush2.bf16.msra.mxu0 0
      %1212 = vmatprep.subr.bf16.mxu0 0
      %1213 = vmatpush2.bf16.msra.mxu0 0
      %1214 = vmatprep.subr.bf16.mxu0 0
      %1215 = vmatpush2.bf16.msra.mxu0 0
      %1216 = vmatprep.subr.bf16.mxu0 0
      %1217 = vmatpush2.bf16.msra.mxu0 0
      %1218 = vmatprep.subr.bf16.mxu0 0
      %1219 = vmatpush2.bf16.msra.mxu0 0
      %1220 = vmatprep.subr.bf16.mxu0 0
      %1221 = vmatpush2.bf16.msra.mxu0 0
      %1222 = vmatprep.subr.bf16.mxu0 0
      %1223 = vmatpush2.bf16.msra.mxu0 0
      %1224 = vmatprep.subr.bf16.mxu0 0
      %1225 = vmatpush2.bf16.msra.mxu0 0
      %1226 = vmatprep.mubr.bf16.mxu0 0
      %1227 = vmatmul.mubr.bf16.gmra.mxu0 %v1189
      %v1228 = vpop.f32.mrf.mxu0
      %v1229 = vadd.f32 %v964, %v1228
      %v1230 = vpop.f32.mrf.mxu0
      %v1231 = vpop.f32.mrf.mxu0
      %v1232 = vadd.f32 %v964, %v1231
      %v1233 = vpop.f32.mrf.mxu0
      %1234 = vmatprep.mubr.bf16.mxu0 0
      %1235 = vmatmul.mubr.bf16.gmra.mxu0 %v1192
      %v1236 = vpop.f32.mrf.mxu0
      %v1237 = vadd.f32 %v964, %v1236
      %v1238 = vpop.f32.mrf.mxu0
      %v1239 = vpop.f32.mrf.mxu0
      %v1240 = vadd.f32 %v964, %v1239
      %v1241 = vpop.f32.mrf.mxu0
      %1242 = vdwg.mxu0
      %vm1243 = vcmp.lt.s32.totalorder %v1063, 1872858888
      %vm1244 = vcmp.lt.s32.totalorder %v1078, 1872858888
      %vm1245 = vcmp.lt.s32.totalorder %v1093, 1872858888
      %vm1246 = vcmp.lt.s32.totalorder %v1108, 1872858888
      %v1247 = vmax.f32 %v1031, %v1229
      %v1248 = vmax.f32 %v1034, %v1232
      %v1249 = vmax.f32 %v1039, %v1237
      %v1250 = vmax.f32 %v1042, %v1240
      %v1251 = vsel %vm1243, 1, 0
      %v1252 = vsel %vm1244, 1, 0
      %v1253 = vsel %vm1245, 1, 0
      %v1254 = vsel %vm1246, 1, 0
      %vm1255 = vcmp.eq.s32.totalorder %v1251, 1
      %vm1256 = vcmp.eq.s32.totalorder %v1252, 1
      %vm1257 = vcmp.eq.s32.totalorder %v1253, 1
      %vm1258 = vcmp.eq.s32.totalorder %v1254, 1
      %v1259 = vsel %vm1255, %v1247, %v1031
      %v1260 = vsel %vm1256, %v1248, %v1034
      %v1261 = vsel %vm1257, %v1249, %v1039
      %v1262 = vsel %vm1258, %v1250, %v1042
      %v1263 = vsel %vm1109, 2147483647, %v1045
      %v1264 = vsel %vm1110, 2147483647, %v1046
      %v1265 = vsel %vm1111, 2147483647, %v1047
      %v1266 = vsel %vm1112, 2147483647, %v1048
      %v1267 = vsel %vm820, %v1263, 2147483647
      %v1268 = vand.u32 %v1267, 65535
      %v1269 = vshra.s32 %v1267, 16
      %v1270 = vcvt.s32.f32 %v1268
      %v1271 = vcvt.s32.f32 %v1269
      %1272 = vmin.xlane.f32.xlu0 %v1271
      %v1273 = vpop.xlane.xlu0 %1272
      %vm1274 = vcmp.eq.f32.partialorder %v1271, %v1273
      %v1275 = vsel %vm1274, %v1270, inf
      %1276 = vmin.xlane.f32.xlu0 %v1275
      %v1277 = vpop.xlane.xlu0 %1276
      %v1278 = vcvt.f32.s32 %v1277
      %v1279 = vcvt.f32.s32 %v1273
      %v1280 = vshll.u32 %v1279, 16
      %v1281 = vadd.s32 %v1280, %v1278
      %v1282 = vsel %vm820, %v1264, 2147483647
      %v1283 = vand.u32 %v1282, 65535
      %v1284 = vshra.s32 %v1282, 16
      %v1285 = vcvt.s32.f32 %v1283
      %v1286 = vcvt.s32.f32 %v1284
      %1287 = vmin.xlane.f32.xlu0 %v1286
      %v1288 = vpop.xlane.xlu0 %1287
      %vm1289 = vcmp.eq.f32.partialorder %v1286, %v1288
      %v1290 = vsel %vm1289, %v1285, inf
      %1291 = vmin.xlane.f32.xlu0 %v1290
      %v1292 = vpop.xlane.xlu0 %1291
      %v1293 = vcvt.f32.s32 %v1292
      %v1294 = vcvt.f32.s32 %v1288
      %v1295 = vshll.u32 %v1294, 16
      %v1296 = vadd.s32 %v1295, %v1293
      %v1297 = vsel %vm820, %v1265, 2147483647
      %v1298 = vand.u32 %v1297, 65535
      %v1299 = vshra.s32 %v1297, 16
      %v1300 = vcvt.s32.f32 %v1298
      %v1301 = vcvt.s32.f32 %v1299
      %1302 = vmin.xlane.f32.xlu0 %v1301
      %v1303 = vpop.xlane.xlu0 %1302
      %vm1304 = vcmp.eq.f32.partialorder %v1301, %v1303
      %v1305 = vsel %vm1304, %v1300, inf
      %1306 = vmin.xlane.f32.xlu0 %v1305
      %v1307 = vpop.xlane.xlu0 %1306
      %v1308 = vcvt.f32.s32 %v1307
      %v1309 = vcvt.f32.s32 %v1303
      %v1310 = vshll.u32 %v1309, 16
      %v1311 = vadd.s32 %v1310, %v1308
      %v1312 = vsel %vm820, %v1266, 2147483647
      %v1313 = vand.u32 %v1312, 65535
      %v1314 = vshra.s32 %v1312, 16
      %v1315 = vcvt.s32.f32 %v1313
      %v1316 = vcvt.s32.f32 %v1314
      %1317 = vmin.xlane.f32.xlu0 %v1316
      %v1318 = vpop.xlane.xlu0 %1317
      %vm1319 = vcmp.eq.f32.partialorder %v1316, %v1318
      %v1320 = vsel %vm1319, %v1315, inf
      %1321 = vmin.xlane.f32.xlu0 %v1320
      %v1322 = vpop.xlane.xlu0 %1321
      %v1323 = vcvt.f32.s32 %v1322
      %v1324 = vcvt.f32.s32 %v1318
      %v1325 = vshll.u32 %v1324, 16
      %v1326 = vadd.s32 %v1325, %v1323
      %vm1327 = vcmp.eq.s32.totalorder %v1263, %v1281
      %vm1328 = vcmp.eq.s32.totalorder %v1264, %v1296
      %vm1329 = vcmp.eq.s32.totalorder %v1265, %v1311
      %vm1330 = vcmp.eq.s32.totalorder %v1266, %v1326
      %v1331 = vsel %vm1327, 1, 0
      %v1332 = vsel %vm1328, 1, 0
      %v1333 = vsel %vm1329, 1, 0
      %v1334 = vsel %vm1330, 1, 0
      %v1335 = vcvt.s32.f32 %v1331
      %v1336 = vcvt.s32.f32 %v1332
      %v1337 = vcvt.s32.f32 %v1333
      %v1338 = vcvt.s32.f32 %v1334
      %v1339 = vpack.c.bf16 %v1336, %v1335
      %v1340 = vpack.c.bf16 %v1338, %v1337
      %v1342 = vsel %vm820, %v1339, 0
      %v1345 = vsel %vm820, %v1340, 0
      %1347 = vmatprep.subr.bf16.mxu0 0
      %1348 = vmatpush1.bf16.msra.mxu0 0
      %1349 = vmatprep.subr.bf16.mxu0 0
      %1350 = vmatpush1.bf16.msra.mxu0 0
      %1351 = vmatprep.subr.bf16.mxu0 0
      %1352 = vmatpush1.bf16.msra.mxu0 0
      %1353 = vmatprep.subr.bf16.mxu0 0
      %1354 = vmatpush1.bf16.msra.mxu0 0
      %1355 = vmatprep.subr.bf16.mxu0 0
      %1356 = vmatpush1.bf16.msra.mxu0 %v648
      %1357 = vmatprep.subr.bf16.mxu0 0
      %1358 = vmatpush1.bf16.msra.mxu0 %v647
      %1359 = vmatprep.subr.bf16.mxu0 0
      %1360 = vmatpush1.bf16.msra.mxu0 %v646
      %1361 = vmatprep.subr.bf16.mxu0 0
      %1362 = vmatpush1.bf16.msra.mxu0 %v645
      %1363 = vmatprep.subr.bf16.mxu0 0
      %1364 = vmatpush2.bf16.msra.mxu0 0
      %1365 = vmatprep.subr.bf16.mxu0 0
      %1366 = vmatpush2.bf16.msra.mxu0 0
      %1367 = vmatprep.subr.bf16.mxu0 0
      %1368 = vmatpush2.bf16.msra.mxu0 0
      %1369 = vmatprep.subr.bf16.mxu0 0
      %1370 = vmatpush2.bf16.msra.mxu0 0
      %1371 = vmatprep.subr.bf16.mxu0 0
      %1372 = vmatpush2.bf16.msra.mxu0 0
      %1373 = vmatprep.subr.bf16.mxu0 0
      %1374 = vmatpush2.bf16.msra.mxu0 0
      %1375 = vmatprep.subr.bf16.mxu0 0
      %1376 = vmatpush2.bf16.msra.mxu0 0
      %1377 = vmatprep.subr.bf16.mxu0 0
      %1378 = vmatpush2.bf16.msra.mxu0 0
      %1379 = vmatprep.mubr.bf16.mxu0 0
      %1380 = vmatmul.mubr.bf16.gmra.mxu0 %v1342
      %v1381 = vpop.f32.mrf.mxu0
      %v1382 = vadd.f32 0.0, %v1381
      %v1383 = vpop.f32.mrf.mxu0
      %v1384 = vpop.f32.mrf.mxu0
      %v1385 = vadd.f32 0.0, %v1384
      %v1386 = vpop.f32.mrf.mxu0
      %1387 = vmatprep.mubr.bf16.mxu0 0
      %1388 = vmatmul.mubr.bf16.gmra.mxu0 %v1345
      %v1389 = vpop.f32.mrf.mxu0
      %v1390 = vadd.f32 0.0, %v1389
      %v1391 = vpop.f32.mrf.mxu0
      %v1392 = vpop.f32.mrf.mxu0
      %v1393 = vadd.f32 0.0, %v1392
      %v1394 = vpop.f32.mrf.mxu0
      %1395 = vdwg.mxu0
      %v1396 = vadd.f32 %v486, %v1382
      %v1397 = vadd.f32 %v491, %v1385
      %v1398 = vadd.f32 %v496, %v1390
      %v1399 = vadd.f32 %v501, %v1393
      %v1400 = vmax.f32 %v1396, 0.0
      %v1401 = vmax.f32 %v1397, 0.0
      %v1402 = vmax.f32 %v1398, 0.0
      %v1403 = vmax.f32 %v1399, 0.0
      %v1404 = vpack.c.bf16 %v1401, %v1400
      %v1405 = vpack.c.bf16 %v1403, %v1402
      %v1407 = vsel %vm820, %v1404, 0
      %v1410 = vsel %vm820, %v1405, 0
      %1412 = vmatprep.subr.bf16.mxu0 0
      %1413 = vmatpush1.bf16.msra.mxu0 0
      %1414 = vmatprep.subr.bf16.mxu0 0
      %1415 = vmatpush1.bf16.msra.mxu0 0
      %1416 = vmatprep.subr.bf16.mxu0 0
      %1417 = vmatpush1.bf16.msra.mxu0 0
      %1418 = vmatprep.subr.bf16.mxu0 0
      %1419 = vmatpush1.bf16.msra.mxu0 0
      %1420 = vmatprep.subr.bf16.mxu0 0
      %1421 = vmatpush1.bf16.msra.mxu0 %v985
      %1422 = vmatprep.subr.bf16.mxu0 0
      %1423 = vmatpush1.bf16.msra.mxu0 %v984
      %1424 = vmatprep.subr.bf16.mxu0 0
      %1425 = vmatpush1.bf16.msra.mxu0 %v983
      %1426 = vmatprep.subr.bf16.mxu0 0
      %1427 = vmatpush1.bf16.msra.mxu0 %v982
      %1428 = vmatprep.subr.bf16.mxu0 0
      %1429 = vmatpush2.bf16.msra.mxu0 0
      %1430 = vmatprep.subr.bf16.mxu0 0
      %1431 = vmatpush2.bf16.msra.mxu0 0
      %1432 = vmatprep.subr.bf16.mxu0 0
      %1433 = vmatpush2.bf16.msra.mxu0 0
      %1434 = vmatprep.subr.bf16.mxu0 0
      %1435 = vmatpush2.bf16.msra.mxu0 0
      %1436 = vmatprep.subr.bf16.mxu0 0
      %1437 = vmatpush2.bf16.msra.mxu0 0
      %1438 = vmatprep.subr.bf16.mxu0 0
      %1439 = vmatpush2.bf16.msra.mxu0 0
      %1440 = vmatprep.subr.bf16.mxu0 0
      %1441 = vmatpush2.bf16.msra.mxu0 0
      %1442 = vmatprep.subr.bf16.mxu0 0
      %1443 = vmatpush2.bf16.msra.mxu0 0
      %1444 = vmatprep.mubr.bf16.mxu0 0
      %1445 = vmatmul.mubr.bf16.gmra.mxu0 %v1407
      %v1446 = vpop.f32.mrf.mxu0
      %v1447 = vadd.f32 %v964, %v1446
      %v1448 = vpop.f32.mrf.mxu0
      %v1449 = vpop.f32.mrf.mxu0
      %v1450 = vadd.f32 %v964, %v1449
      %v1451 = vpop.f32.mrf.mxu0
      %1452 = vmatprep.mubr.bf16.mxu0 0
      %1453 = vmatmul.mubr.bf16.gmra.mxu0 %v1410
      %v1454 = vpop.f32.mrf.mxu0
      %v1455 = vadd.f32 %v964, %v1454
      %v1456 = vpop.f32.mrf.mxu0
      %v1457 = vpop.f32.mrf.mxu0
      %v1458 = vadd.f32 %v964, %v1457
      %v1459 = vpop.f32.mrf.mxu0
      %1460 = vdwg.mxu0
      %vm1461 = vcmp.lt.s32.totalorder %v1281, 1872858888
      %vm1462 = vcmp.lt.s32.totalorder %v1296, 1872858888
      %vm1463 = vcmp.lt.s32.totalorder %v1311, 1872858888
      %vm1464 = vcmp.lt.s32.totalorder %v1326, 1872858888
      %v1465 = vmax.f32 %v1259, %v1447
      %v1466 = vmax.f32 %v1260, %v1450
      %v1467 = vmax.f32 %v1261, %v1455
      %v1468 = vmax.f32 %v1262, %v1458
      %v1469 = vsel %vm1461, 1, 0
      %v1470 = vsel %vm1462, 1, 0
      %v1471 = vsel %vm1463, 1, 0
      %v1472 = vsel %vm1464, 1, 0
      %vm1473 = vcmp.eq.s32.totalorder %v1469, 1
      %vm1474 = vcmp.eq.s32.totalorder %v1470, 1
      %vm1475 = vcmp.eq.s32.totalorder %v1471, 1
      %vm1476 = vcmp.eq.s32.totalorder %v1472, 1
      %v1477 = vsel %vm1473, %v1465, %v1259
      %v1478 = vsel %vm1474, %v1466, %v1260
      %v1479 = vsel %vm1475, %v1467, %v1261
      %v1480 = vsel %vm1476, %v1468, %v1262
      %v1481 = vsel %vm1327, 2147483647, %v1263
      %v1482 = vsel %vm1328, 2147483647, %v1264
      %v1483 = vsel %vm1329, 2147483647, %v1265
      %v1484 = vsel %vm1330, 2147483647, %v1266
      %v1485 = vsel %vm820, %v1481, 2147483647
      %v1486 = vand.u32 %v1485, 65535
      %v1487 = vshra.s32 %v1485, 16
      %v1488 = vcvt.s32.f32 %v1486
      %v1489 = vcvt.s32.f32 %v1487
      %1490 = vmin.xlane.f32.xlu0 %v1489
      %v1491 = vpop.xlane.xlu0 %1490
      %vm1492 = vcmp.eq.f32.partialorder %v1489, %v1491
      %v1493 = vsel %vm1492, %v1488, inf
      %1494 = vmin.xlane.f32.xlu0 %v1493
      %v1495 = vpop.xlane.xlu0 %1494
      %v1496 = vcvt.f32.s32 %v1495
      %v1497 = vcvt.f32.s32 %v1491
      %v1498 = vshll.u32 %v1497, 16
      %v1499 = vadd.s32 %v1498, %v1496
      %v1500 = vsel %vm820, %v1482, 2147483647
      %v1501 = vand.u32 %v1500, 65535
      %v1502 = vshra.s32 %v1500, 16
      %v1503 = vcvt.s32.f32 %v1501
      %v1504 = vcvt.s32.f32 %v1502
      %1505 = vmin.xlane.f32.xlu0 %v1504
      %v1506 = vpop.xlane.xlu0 %1505
      %vm1507 = vcmp.eq.f32.partialorder %v1504, %v1506
      %v1508 = vsel %vm1507, %v1503, inf
      %1509 = vmin.xlane.f32.xlu0 %v1508
      %v1510 = vpop.xlane.xlu0 %1509
      %v1511 = vcvt.f32.s32 %v1510
      %v1512 = vcvt.f32.s32 %v1506
      %v1513 = vshll.u32 %v1512, 16
      %v1514 = vadd.s32 %v1513, %v1511
      %v1515 = vsel %vm820, %v1483, 2147483647
      %v1516 = vand.u32 %v1515, 65535
      %v1517 = vshra.s32 %v1515, 16
      %v1518 = vcvt.s32.f32 %v1516
      %v1519 = vcvt.s32.f32 %v1517
      %1520 = vmin.xlane.f32.xlu0 %v1519
      %v1521 = vpop.xlane.xlu0 %1520
      %vm1522 = vcmp.eq.f32.partialorder %v1519, %v1521
      %v1523 = vsel %vm1522, %v1518, inf
      %1524 = vmin.xlane.f32.xlu0 %v1523
      %v1525 = vpop.xlane.xlu0 %1524
      %v1526 = vcvt.f32.s32 %v1525
      %v1527 = vcvt.f32.s32 %v1521
      %v1528 = vshll.u32 %v1527, 16
      %v1529 = vadd.s32 %v1528, %v1526
      %v1530 = vsel %vm820, %v1484, 2147483647
      %v1531 = vand.u32 %v1530, 65535
      %v1532 = vshra.s32 %v1530, 16
      %v1533 = vcvt.s32.f32 %v1531
      %v1534 = vcvt.s32.f32 %v1532
      %1535 = vmin.xlane.f32.xlu0 %v1534
      %v1536 = vpop.xlane.xlu0 %1535
      %vm1537 = vcmp.eq.f32.partialorder %v1534, %v1536
      %v1538 = vsel %vm1537, %v1533, inf
      %1539 = vmin.xlane.f32.xlu0 %v1538
      %v1540 = vpop.xlane.xlu0 %1539
      %v1541 = vcvt.f32.s32 %v1540
      %v1542 = vcvt.f32.s32 %v1536
      %v1543 = vshll.u32 %v1542, 16
      %v1544 = vadd.s32 %v1543, %v1541
      %vm1545 = vcmp.eq.s32.totalorder %v1481, %v1499
      %vm1546 = vcmp.eq.s32.totalorder %v1482, %v1514
      %vm1547 = vcmp.eq.s32.totalorder %v1483, %v1529
      %vm1548 = vcmp.eq.s32.totalorder %v1484, %v1544
      %v1549 = vsel %vm1545, 1, 0
      %v1550 = vsel %vm1546, 1, 0
      %v1551 = vsel %vm1547, 1, 0
      %v1552 = vsel %vm1548, 1, 0
      %v1553 = vcvt.s32.f32 %v1549
      %v1554 = vcvt.s32.f32 %v1550
      %v1555 = vcvt.s32.f32 %v1551
      %v1556 = vcvt.s32.f32 %v1552
      %v1557 = vpack.c.bf16 %v1554, %v1553
      %v1558 = vpack.c.bf16 %v1556, %v1555
      %v1560 = vsel %vm820, %v1557, 0
      %v1563 = vsel %vm820, %v1558, 0
      %1565 = vmatprep.subr.bf16.mxu0 0
      %1566 = vmatpush1.bf16.msra.mxu0 0
      %1567 = vmatprep.subr.bf16.mxu0 0
      %1568 = vmatpush1.bf16.msra.mxu0 0
      %1569 = vmatprep.subr.bf16.mxu0 0
      %1570 = vmatpush1.bf16.msra.mxu0 0
      %1571 = vmatprep.subr.bf16.mxu0 0
      %1572 = vmatpush1.bf16.msra.mxu0 0
      %1573 = vmatprep.subr.bf16.mxu0 0
      %1574 = vmatpush1.bf16.msra.mxu0 %v648
      %1575 = vmatprep.subr.bf16.mxu0 0
      %1576 = vmatpush1.bf16.msra.mxu0 %v647
      %1577 = vmatprep.subr.bf16.mxu0 0
      %1578 = vmatpush1.bf16.msra.mxu0 %v646
      %1579 = vmatprep.subr.bf16.mxu0 0
      %1580 = vmatpush1.bf16.msra.mxu0 %v645
      %1581 = vmatprep.subr.bf16.mxu0 0
      %1582 = vmatpush2.bf16.msra.mxu0 0
      %1583 = vmatprep.subr.bf16.mxu0 0
      %1584 = vmatpush2.bf16.msra.mxu0 0
      %1585 = vmatprep.subr.bf16.mxu0 0
      %1586 = vmatpush2.bf16.msra.mxu0 0
      %1587 = vmatprep.subr.bf16.mxu0 0
      %1588 = vmatpush2.bf16.msra.mxu0 0
      %1589 = vmatprep.subr.bf16.mxu0 0
      %1590 = vmatpush2.bf16.msra.mxu0 0
      %1591 = vmatprep.subr.bf16.mxu0 0
      %1592 = vmatpush2.bf16.msra.mxu0 0
      %1593 = vmatprep.subr.bf16.mxu0 0
      %1594 = vmatpush2.bf16.msra.mxu0 0
      %1595 = vmatprep.subr.bf16.mxu0 0
      %1596 = vmatpush2.bf16.msra.mxu0 0
      %1597 = vmatprep.mubr.bf16.mxu0 0
      %1598 = vmatmul.mubr.bf16.gmra.mxu0 %v1560
      %v1599 = vpop.f32.mrf.mxu0
      %v1600 = vadd.f32 0.0, %v1599
      %v1601 = vpop.f32.mrf.mxu0
      %v1602 = vpop.f32.mrf.mxu0
      %v1603 = vadd.f32 0.0, %v1602
      %v1604 = vpop.f32.mrf.mxu0
      %1605 = vmatprep.mubr.bf16.mxu0 0
      %1606 = vmatmul.mubr.bf16.gmra.mxu0 %v1563
      %v1607 = vpop.f32.mrf.mxu0
      %v1608 = vadd.f32 0.0, %v1607
      %v1609 = vpop.f32.mrf.mxu0
      %v1610 = vpop.f32.mrf.mxu0
      %v1611 = vadd.f32 0.0, %v1610
      %v1612 = vpop.f32.mrf.mxu0
      %1613 = vdwg.mxu0
      %v1614 = vadd.f32 %v486, %v1600
      %v1615 = vadd.f32 %v491, %v1603
      %v1616 = vadd.f32 %v496, %v1608
      %v1617 = vadd.f32 %v501, %v1611
      %v1618 = vmax.f32 %v1614, 0.0
      %v1619 = vmax.f32 %v1615, 0.0
      %v1620 = vmax.f32 %v1616, 0.0
      %v1621 = vmax.f32 %v1617, 0.0
      %v1622 = vpack.c.bf16 %v1619, %v1618
      %v1623 = vpack.c.bf16 %v1621, %v1620
      %v1625 = vsel %vm820, %v1622, 0
      %v1628 = vsel %vm820, %v1623, 0
      %1630 = vmatprep.subr.bf16.mxu0 0
      %1631 = vmatpush1.bf16.msra.mxu0 0
      %1632 = vmatprep.subr.bf16.mxu0 0
      %1633 = vmatpush1.bf16.msra.mxu0 0
      %1634 = vmatprep.subr.bf16.mxu0 0
      %1635 = vmatpush1.bf16.msra.mxu0 0
      %1636 = vmatprep.subr.bf16.mxu0 0
      %1637 = vmatpush1.bf16.msra.mxu0 0
      %1638 = vmatprep.subr.bf16.mxu0 0
      %1639 = vmatpush1.bf16.msra.mxu0 %v985
      %1640 = vmatprep.subr.bf16.mxu0 0
      %1641 = vmatpush1.bf16.msra.mxu0 %v984
      %1642 = vmatprep.subr.bf16.mxu0 0
      %1643 = vmatpush1.bf16.msra.mxu0 %v983
      %1644 = vmatprep.subr.bf16.mxu0 0
      %1645 = vmatpush1.bf16.msra.mxu0 %v982
      %1646 = vmatprep.subr.bf16.mxu0 0
      %1647 = vmatpush2.bf16.msra.mxu0 0
      %1648 = vmatprep.subr.bf16.mxu0 0
      %1649 = vmatpush2.bf16.msra.mxu0 0
      %1650 = vmatprep.subr.bf16.mxu0 0
      %1651 = vmatpush2.bf16.msra.mxu0 0
      %1652 = vmatprep.subr.bf16.mxu0 0
      %1653 = vmatpush2.bf16.msra.mxu0 0
      %1654 = vmatprep.subr.bf16.mxu0 0
      %1655 = vmatpush2.bf16.msra.mxu0 0
      %1656 = vmatprep.subr.bf16.mxu0 0
      %1657 = vmatpush2.bf16.msra.mxu0 0
      %1658 = vmatprep.subr.bf16.mxu0 0
      %1659 = vmatpush2.bf16.msra.mxu0 0
      %1660 = vmatprep.subr.bf16.mxu0 0
      %1661 = vmatpush2.bf16.msra.mxu0 0
      %1662 = vmatprep.mubr.bf16.mxu0 0
      %1663 = vmatmul.mubr.bf16.gmra.mxu0 %v1625
      %v1664 = vpop.f32.mrf.mxu0
      %v1665 = vadd.f32 %v964, %v1664
      %v1666 = vpop.f32.mrf.mxu0
      %v1667 = vpop.f32.mrf.mxu0
      %v1668 = vadd.f32 %v964, %v1667
      %v1669 = vpop.f32.mrf.mxu0
      %1670 = vmatprep.mubr.bf16.mxu0 0
      %1671 = vmatmul.mubr.bf16.gmra.mxu0 %v1628
      %v1672 = vpop.f32.mrf.mxu0
      %v1673 = vadd.f32 %v964, %v1672
      %v1674 = vpop.f32.mrf.mxu0
      %v1675 = vpop.f32.mrf.mxu0
      %v1676 = vadd.f32 %v964, %v1675
      %v1677 = vpop.f32.mrf.mxu0
      %1678 = vdwg.mxu0
      %vm1679 = vcmp.lt.s32.totalorder %v1499, 1872858888
      %vm1680 = vcmp.lt.s32.totalorder %v1514, 1872858888
      %vm1681 = vcmp.lt.s32.totalorder %v1529, 1872858888
      %vm1682 = vcmp.lt.s32.totalorder %v1544, 1872858888
      %v1683 = vmax.f32 %v1477, %v1665
      %v1684 = vmax.f32 %v1478, %v1668
      %v1685 = vmax.f32 %v1479, %v1673
      %v1686 = vmax.f32 %v1480, %v1676
      %v1687 = vsel %vm1679, 1, 0
      %v1688 = vsel %vm1680, 1, 0
      %v1689 = vsel %vm1681, 1, 0
      %v1690 = vsel %vm1682, 1, 0
      %vm1691 = vcmp.eq.s32.totalorder %v1687, 1
      %vm1692 = vcmp.eq.s32.totalorder %v1688, 1
      %vm1693 = vcmp.eq.s32.totalorder %v1689, 1
      %vm1694 = vcmp.eq.s32.totalorder %v1690, 1
      %v1695 = vsel %vm1691, %v1683, %v1477
      %v1696 = vsel %vm1692, %v1684, %v1478
      %v1697 = vsel %vm1693, %v1685, %v1479
      %v1698 = vsel %vm1694, %v1686, %v1480
      %1699 = vst.msk [vmem:[%s378] sm:$0xff] %vm820, %v1695
      %1700 = vst.msk [vmem:[%s378 + $0x8] sm:$0xff] %vm820, %v1696
      %1701 = vst.msk [vmem:[%s378 + $0x10] sm:$0xff] %vm820, %v1697
      %1702 = vst.msk [vmem:[%s378 + $0x18] sm:$0xff] %vm820, %v1698
      %s1703 = smul.u32 4, %s20
      %p1704 = scmp.lt.s32.totalorder %s1703, 7
      %s1705 = scalar_select %p1704, %s1703, 7
      %s1706 = smul.addr %s1705, 8
      %s1707 = scalar_lea.vmem %s9, %s1706
      // Predicated region
      $region57: #{dgcnn_forward.5} parent=55 // pred_check
        %p1708 = pneg %p242
      $region58: #{dgcnn_forward.5} parent=55 // pred_check_branch
        %1710 = sbr.rel (%p1708) target = $region60
      $region59: #{dgcnn_forward.5} parent=55 // pred_region
        %s1711 = smul.u32 4, %s20
      $region60: #{dgcnn_forward.5} parent=55 // pred_fallthru
        _
    $region56: #{dgcnn_forward.5} parent=5 // pred_fallthru
      _
    %p1712 = scmp.le.s32.totalorder 2, %s15
    // Predicated region
    $region61: #{dgcnn_forward.5} parent=5 // pred_check
      %p1713 = pneg %p1712
    $region62: #{dgcnn_forward.5} parent=5 // pred_check_branch
      %1715 = sbr.rel (%p1713) target = $region64
    $region63: #{dgcnn_forward.5} parent=5 // pred_region
      %s1716 = ssub.s32 %s15, 2
      // Predicated region
      $region65: #{dgcnn_forward.5} parent=63 // pred_check
        %p1717 = pneg %p248
      $region66: #{dgcnn_forward.5} parent=63 // pred_check_branch
        %1719 = sbr.rel (%p1717) target = $region68
      $region67: #{dgcnn_forward.5} parent=63 // pred_region
        %s1720 = smul.u32 4, %s21
        %p1721 = scmp.lt.s32.totalorder %s1720, 7
        %s1722 = scalar_select %p1721, %s1720, 7
        %s1723 = smul.addr %s1722, 8
        %s1724 = scalar_lea.vmem %s9, %s1723
      $region68: #{dgcnn_forward.5} parent=63 // pred_fallthru
        _
    $region64: #{dgcnn_forward.5} parent=5 // pred_fallthru
      _
  $region6: #{dgcnn_forward.5} parent=0 // loop_footer
    %s19 = sadd.s32 1, %s15
  $region7: #{dgcnn_forward.5} parent=0 // loop_footer_branch
    %14 = sbr.rel target = $region3
  $region8: #{dgcnn_forward.5} parent=0 // loop_exit
    _

// kernel: dgcnn_forward.4
$region0: #{dgcnn_forward.4}
  #allocation0 [shape = 'u32[]', space=smem, size = 0x4, offset = 0x4, fixed_abs, tag = 'smem constant byte address 0x4 - core index']
  #allocation1 [shape = 'u32[144,128]{1,0:T(1,128)}', space=vmem, size = 0x12000, scoped, tag = 'internal scratch']
  %s0 = inlined_call_operand.vmem [shape: f32[64,1], index: 0, kind: input, shape index: {}]
  %s1 = inlined_call_operand.vmem [shape: f32[1,64], index: 1, kind: input, shape index: {}]
  %s2 = inlined_call_operand.vmem [shape: f32[64,1], index: 2, kind: input, shape index: {}]
  %s3 = inlined_call_operand.vmem [shape: f32[64,7], index: 3, kind: input, shape index: {}]
  %s4 = inlined_call_operand.vmem [shape: f32[64,7], index: 4, kind: input, shape index: {}]
  %s5 = inlined_call_operand.vmem [shape: f32[7,64], index: 5, kind: input, shape index: {}]
  %s6 = inlined_call_operand.vmem [shape: f32[7,64], index: 6, kind: input, shape index: {}]
  %s7 = inlined_call_operand.vmem [shape: bf16[64,64], index: 7, kind: input, shape index: {}]
  %s8 = inlined_call_operand.vmem [shape: f32[1,64], index: 8, kind: input, shape index: {}]
  %s9 = inlined_call_operand.vmem [shape: f32[64,64], index: 9, kind: output, shape index: {}]
  %s10 = sld [smem:[#allocation0]]
  $region69: #{dgcnn_forward.4} parent=0
    _
  %s12 = ssub.s32 1, %s10
  %s13 = scalar_select 0, %s12, %s10
  loop: start=0, step=1, limit=4
  $region2: #{dgcnn_forward.4} parent=0 // loop_pre_header
    _
  $region3: #{dgcnn_forward.4} parent=0 // loop_header
    %s15 = sphi 0, %s19
    %p16 = scmp.ge.s32.totalorder %s15, 4
    %s25 = sphi 0, %s27
    %s28 = sphi 0, %s25
    %s29 = sphi 0, %s28
    %s45 = sphi 0, %s29
    %s49 = sphi 0, %s49
    %s51 = sphi 0, %s49
    %s52 = sphi 0, %s51
    %s66 = sphi 0, %s52
    %s72 = sphi 0, %s74
    %s75 = sphi 0, %s72
    %s76 = sphi 0, %s75
    %s92 = sphi 0, %s76
    %s98 = sphi 0, %s100
    %s101 = sphi 0, %s98
    %s102 = sphi 0, %s101
    %s118 = sphi 0, %s102
    %s122 = sphi 0, %s122
    %s124 = sphi 0, %s122
    %s125 = sphi 0, %s124
    %s139 = sphi 0, %s125
    %s143 = sphi 0, %s143
    %s145 = sphi 0, %s143
    %s146 = sphi 0, %s145
    %s160 = sphi 0, %s146
    %s164 = sphi 0, %s164
    %s166 = sphi 0, %s164
    %s167 = sphi 0, %s166
    %s181 = sphi 0, %s167
    %s185 = sphi 0, %s185
    %s187 = sphi 0, %s185
    %s188 = sphi 0, %s187
    %s202 = sphi 0, %s188
    %s206 = sphi 0, %s206
    %s208 = sphi 0, %s206
    %s209 = sphi 0, %s208
    %s223 = sphi 0, %s209
    %s229 = sphi 0, %s231
    %s232 = sphi 0, %s229
    %s233 = sphi 0, %s232
    %s249 = sphi 0, %s233
  $region4: #{dgcnn_forward.4} parent=0 // loop_header_branch
    %18 = sbr.rel (%p16) target = $region8
  $region5: #{dgcnn_forward.4} parent=0 // loop_body
    %s20 = ssub.s32 %s15, 1
    %s21 = ssub.s32 %s15, 2
    %s22 = sadd.s32 %s15, 1
    %s23 = ssub.s32 %s15, %s22
    %p24 = scmp.eq.s32.totalorder %s23, 0
    %s26 = sadd.s32 %s25, 1
    %s27 = scalar_select %p24, %s25, %s26
    %p30 = pneg %p24
    %p31 = scmp.eq.s32.totalorder %s15, 1
    %p32 = por %p30, %p31
    %p33 = scmp.ne.s32.totalorder %s25, %s28
    %p34 = scmp.eq.s32.totalorder %s15, 0
    %p35 = por %p33, %p34
    %p36 = scmp.ne.s32.totalorder %s25, %s28
    %p37 = scmp.eq.s32.totalorder %s20, 1
    %p38 = por %p36, %p37
    %p39 = scmp.ne.s32.totalorder %s28, %s29
    %p40 = scmp.eq.s32.totalorder %s20, 0
    %p41 = por %p39, %p40
    %p42 = scmp.ne.s32.totalorder %s28, %s29
    %p43 = scmp.eq.s32.totalorder %s21, 1
    %p44 = por %p42, %p43
    %p46 = scmp.ne.s32.totalorder %s29, %s45
    %p47 = scmp.eq.s32.totalorder %s21, 0
    %p48 = por %p46, %p47
    %s50 = sadd.s32 %s49, 1
    %p53 = scmp.eq.s32.totalorder %s15, 1
    %p54 = scmp.ne.s32.totalorder %s49, %s51
    %p55 = scmp.eq.s32.totalorder %s15, 0
    %p56 = por %p54, %p55
    %p57 = scmp.ne.s32.totalorder %s49, %s51
    %p58 = scmp.eq.s32.totalorder %s20, 1
    %p59 = por %p57, %p58
    %p60 = scmp.ne.s32.totalorder %s51, %s52
    %p61 = scmp.eq.s32.totalorder %s20, 0
    %p62 = por %p60, %p61
    %p63 = scmp.ne.s32.totalorder %s51, %s52
    %p64 = scmp.eq.s32.totalorder %s21, 1
    %p65 = por %p63, %p64
    %p67 = scmp.ne.s32.totalorder %s52, %s66
    %p68 = scmp.eq.s32.totalorder %s21, 0
    %p69 = por %p67, %p68
    %s70 = ssub.s32 %s15, %s22
    %p71 = scmp.eq.s32.totalorder %s70, 0
    %s73 = sadd.s32 %s72, 1
    %s74 = scalar_select %p71, %s72, %s73
    %p77 = pneg %p71
    %p78 = scmp.eq.s32.totalorder %s15, 1
    %p79 = por %p77, %p78
    %p80 = scmp.ne.s32.totalorder %s72, %s75
    %p81 = scmp.eq.s32.totalorder %s15, 0
    %p82 = por %p80, %p81
    %p83 = scmp.ne.s32.totalorder %s72, %s75
    %p84 = scmp.eq.s32.totalorder %s20, 1
    %p85 = por %p83, %p84
    %p86 = scmp.ne.s32.totalorder %s75, %s76
    %p87 = scmp.eq.s32.totalorder %s20, 0
    %p88 = por %p86, %p87
    %p89 = scmp.ne.s32.totalorder %s75, %s76
    %p90 = scmp.eq.s32.totalorder %s21, 1
    %p91 = por %p89, %p90
    %p93 = scmp.ne.s32.totalorder %s76, %s92
    %p94 = scmp.eq.s32.totalorder %s21, 0
    %p95 = por %p93, %p94
    %s96 = ssub.s32 %s15, %s22
    %p97 = scmp.eq.s32.totalorder %s96, 0
    %s99 = sadd.s32 %s98, 1
    %s100 = scalar_select %p97, %s98, %s99
    %p103 = pneg %p97
    %p104 = scmp.eq.s32.totalorder %s15, 1
    %p105 = por %p103, %p104
    %p106 = scmp.ne.s32.totalorder %s98, %s101
    %p107 = scmp.eq.s32.totalorder %s15, 0
    %p108 = por %p106, %p107
    %p109 = scmp.ne.s32.totalorder %s98, %s101
    %p110 = scmp.eq.s32.totalorder %s20, 1
    %p111 = por %p109, %p110
    %p112 = scmp.ne.s32.totalorder %s101, %s102
    %p113 = scmp.eq.s32.totalorder %s20, 0
    %p114 = por %p112, %p113
    %p115 = scmp.ne.s32.totalorder %s101, %s102
    %p116 = scmp.eq.s32.totalorder %s21, 1
    %p117 = por %p115, %p116
    %p119 = scmp.ne.s32.totalorder %s102, %s118
    %p120 = scmp.eq.s32.totalorder %s21, 0
    %p121 = por %p119, %p120
    %s123 = sadd.s32 %s122, 1
    %p126 = scmp.eq.s32.totalorder %s15, 1
    %p127 = scmp.ne.s32.totalorder %s122, %s124
    %p128 = scmp.eq.s32.totalorder %s15, 0
    %p129 = por %p127, %p128
    %p130 = scmp.ne.s32.totalorder %s122, %s124
    %p131 = scmp.eq.s32.totalorder %s20, 1
    %p132 = por %p130, %p131
    %p133 = scmp.ne.s32.totalorder %s124, %s125
    %p134 = scmp.eq.s32.totalorder %s20, 0
    %p135 = por %p133, %p134
    %p136 = scmp.ne.s32.totalorder %s124, %s125
    %p137 = scmp.eq.s32.totalorder %s21, 1
    %p138 = por %p136, %p137
    %p140 = scmp.ne.s32.totalorder %s125, %s139
    %p141 = scmp.eq.s32.totalorder %s21, 0
    %p142 = por %p140, %p141
    %s144 = sadd.s32 %s143, 1
    %p147 = scmp.eq.s32.totalorder %s15, 1
    %p148 = scmp.ne.s32.totalorder %s143, %s145
    %p149 = scmp.eq.s32.totalorder %s15, 0
    %p150 = por %p148, %p149
    %p151 = scmp.ne.s32.totalorder %s143, %s145
    %p152 = scmp.eq.s32.totalorder %s20, 1
    %p153 = por %p151, %p152
    %p154 = scmp.ne.s32.totalorder %s145, %s146
    %p155 = scmp.eq.s32.totalorder %s20, 0
    %p156 = por %p154, %p155
    %p157 = scmp.ne.s32.totalorder %s145, %s146
    %p158 = scmp.eq.s32.totalorder %s21, 1
    %p159 = por %p157, %p158
    %p161 = scmp.ne.s32.totalorder %s146, %s160
    %p162 = scmp.eq.s32.totalorder %s21, 0
    %p163 = por %p161, %p162
    %s165 = sadd.s32 %s164, 1
    %p168 = scmp.eq.s32.totalorder %s15, 1
    %p169 = scmp.ne.s32.totalorder %s164, %s166
    %p170 = scmp.eq.s32.totalorder %s15, 0
    %p171 = por %p169, %p170
    %p172 = scmp.ne.s32.totalorder %s164, %s166
    %p173 = scmp.eq.s32.totalorder %s20, 1
    %p174 = por %p172, %p173
    %p175 = scmp.ne.s32.totalorder %s166, %s167
    %p176 = scmp.eq.s32.totalorder %s20, 0
    %p177 = por %p175, %p176
    %p178 = scmp.ne.s32.totalorder %s166, %s167
    %p179 = scmp.eq.s32.totalorder %s21, 1
    %p180 = por %p178, %p179
    %p182 = scmp.ne.s32.totalorder %s167, %s181
    %p183 = scmp.eq.s32.totalorder %s21, 0
    %p184 = por %p182, %p183
    %s186 = sadd.s32 %s185, 1
    %p189 = scmp.eq.s32.totalorder %s15, 1
    %p190 = scmp.ne.s32.totalorder %s185, %s187
    %p191 = scmp.eq.s32.totalorder %s15, 0
    %p192 = por %p190, %p191
    %p193 = scmp.ne.s32.totalorder %s185, %s187
    %p194 = scmp.eq.s32.totalorder %s20, 1
    %p195 = por %p193, %p194
    %p196 = scmp.ne.s32.totalorder %s187, %s188
    %p197 = scmp.eq.s32.totalorder %s20, 0
    %p198 = por %p196, %p197
    %p199 = scmp.ne.s32.totalorder %s187, %s188
    %p200 = scmp.eq.s32.totalorder %s21, 1
    %p201 = por %p199, %p200
    %p203 = scmp.ne.s32.totalorder %s188, %s202
    %p204 = scmp.eq.s32.totalorder %s21, 0
    %p205 = por %p203, %p204
    %s207 = sadd.s32 %s206, 1
    %p210 = scmp.eq.s32.totalorder %s15, 1
    %p211 = scmp.ne.s32.totalorder %s206, %s208
    %p212 = scmp.eq.s32.totalorder %s15, 0
    %p213 = por %p211, %p212
    %p214 = scmp.ne.s32.totalorder %s206, %s208
    %p215 = scmp.eq.s32.totalorder %s20, 1
    %p216 = por %p214, %p215
    %p217 = scmp.ne.s32.totalorder %s208, %s209
    %p218 = scmp.eq.s32.totalorder %s20, 0
    %p219 = por %p217, %p218
    %p220 = scmp.ne.s32.totalorder %s208, %s209
    %p221 = scmp.eq.s32.totalorder %s21, 1
    %p222 = por %p220, %p221
    %p224 = scmp.ne.s32.totalorder %s209, %s223
    %p225 = scmp.eq.s32.totalorder %s21, 0
    %p226 = por %p224, %p225
    %s227 = ssub.s32 %s15, %s22
    %p228 = scmp.eq.s32.totalorder %s227, 0
    %s230 = sadd.s32 %s229, 1
    %s231 = scalar_select %p228, %s229, %s230
    %p234 = pneg %p228
    %p235 = scmp.eq.s32.totalorder %s15, 1
    %p236 = por %p234, %p235
    %p237 = scmp.ne.s32.totalorder %s229, %s232
    %p238 = scmp.eq.s32.totalorder %s15, 0
    %p239 = por %p237, %p238
    %p240 = scmp.ne.s32.totalorder %s229, %s232
    %p241 = scmp.eq.s32.totalorder %s20, 1
    %p242 = por %p240, %p241
    %p243 = scmp.ne.s32.totalorder %s232, %s233
    %p244 = scmp.eq.s32.totalorder %s20, 0
    %p245 = por %p243, %p244
    %p246 = scmp.ne.s32.totalorder %s232, %s233
    %p247 = scmp.eq.s32.totalorder %s21, 1
    %p248 = por %p246, %p247
    %p250 = scmp.ne.s32.totalorder %s233, %s249
    %p251 = scmp.eq.s32.totalorder %s21, 0
    %p252 = por %p250, %p251
    %p253 = scmp.le.s32.totalorder 1, %s15
    %p254 = scmp.lt.s32.totalorder %s15, 3
    %p255 = pnand %p253, %p254
    %p256 = pneg %p255
    // Predicated region
    $region9: #{dgcnn_forward.4} parent=5 // pred_check
      _
    $region10: #{dgcnn_forward.4} parent=5 // pred_check_branch
      %258 = sbr.rel (%p255) target = $region12
    $region11: #{dgcnn_forward.4} parent=5 // pred_region
      %s259 = ssub.s32 %s15, 1
      // Predicated region
      $region13: #{dgcnn_forward.4} parent=11 // pred_check
        %p260 = pneg %p62
      $region14: #{dgcnn_forward.4} parent=11 // pred_check_branch
        %262 = sbr.rel (%p260) target = $region16
      $region15: #{dgcnn_forward.4} parent=11 // pred_region
        _
      $region16: #{dgcnn_forward.4} parent=11 // pred_fallthru
        _
      // Predicated region
      $region17: #{dgcnn_forward.4} parent=11 // pred_check
        %p263 = pneg %p135
      $region18: #{dgcnn_forward.4} parent=11 // pred_check_branch
        %265 = sbr.rel (%p263) target = $region20
      $region19: #{dgcnn_forward.4} parent=11 // pred_region
        _
      $region20: #{dgcnn_forward.4} parent=11 // pred_fallthru
        _
      // Predicated region
      $region21: #{dgcnn_forward.4} parent=11 // pred_check
        %p266 = pneg %p156
      $region22: #{dgcnn_forward.4} parent=11 // pred_check_branch
        %268 = sbr.rel (%p266) target = $region24
      $region23: #{dgcnn_forward.4} parent=11 // pred_region
        _
      $region24: #{dgcnn_forward.4} parent=11 // pred_fallthru
        _
      // Predicated region
      $region25: #{dgcnn_forward.4} parent=11 // pred_check
        %p269 = pneg %p177
      $region26: #{dgcnn_forward.4} parent=11 // pred_check_branch
        %271 = sbr.rel (%p269) target = $region28
      $region27: #{dgcnn_forward.4} parent=11 // pred_region
        _
      $region28: #{dgcnn_forward.4} parent=11 // pred_fallthru
        _
      // Predicated region
      $region29: #{dgcnn_forward.4} parent=11 // pred_check
        %p272 = pneg %p198
      $region30: #{dgcnn_forward.4} parent=11 // pred_check_branch
        %274 = sbr.rel (%p272) target = $region32
      $region31: #{dgcnn_forward.4} parent=11 // pred_region
        _
      $region32: #{dgcnn_forward.4} parent=11 // pred_fallthru
        _
      // Predicated region
      $region33: #{dgcnn_forward.4} parent=11 // pred_check
        %p275 = pneg %p219
      $region34: #{dgcnn_forward.4} parent=11 // pred_check_branch
        %277 = sbr.rel (%p275) target = $region36
      $region35: #{dgcnn_forward.4} parent=11 // pred_region
        _
      $region36: #{dgcnn_forward.4} parent=11 // pred_fallthru
        _
    $region12: #{dgcnn_forward.4} parent=5 // pred_fallthru
      _
    %p278 = scmp.lt.s32.totalorder %s15, 2
    // Predicated region
    $region37: #{dgcnn_forward.4} parent=5 // pred_check
      %p279 = pneg %p278
    $region38: #{dgcnn_forward.4} parent=5 // pred_check_branch
      %281 = sbr.rel (%p279) target = $region40
    $region39: #{dgcnn_forward.4} parent=5 // pred_region
      // Predicated region
      $region41: #{dgcnn_forward.4} parent=39 // pred_check
        %p282 = pneg %p35
      $region42: #{dgcnn_forward.4} parent=39 // pred_check_branch
        %284 = sbr.rel (%p282) target = $region44
      $region43: #{dgcnn_forward.4} parent=39 // pred_region
        %s285 = smul.u32 4, %s15
        %p286 = scmp.lt.s32.totalorder %s285, 7
        %s287 = scalar_select %p286, %s285, 7
        %s288 = smul.addr %s287, 8
        %s289 = scalar_lea.vmem %s0, %s288
        %s290 = smul.u32 4, %s15
      $region44: #{dgcnn_forward.4} parent=39 // pred_fallthru
        _
      // Predicated region
      $region45: #{dgcnn_forward.4} parent=39 // pred_check
        %p291 = pneg %p82
      $region46: #{dgcnn_forward.4} parent=39 // pred_check_branch
        %293 = sbr.rel (%p291) target = $region48
      $region47: #{dgcnn_forward.4} parent=39 // pred_region
        %s294 = smul.u32 4, %s15
        %p295 = scmp.lt.s32.totalorder %s294, 7
        %s296 = scalar_select %p295, %s294, 7
        %s297 = smul.addr %s296, 8
        %s298 = scalar_lea.vmem %s2, %s297
        %s299 = smul.u32 4, %s15
      $region48: #{dgcnn_forward.4} parent=39 // pred_fallthru
        _
      // Predicated region
      $region49: #{dgcnn_forward.4} parent=39 // pred_check
        %p300 = pneg %p108
      $region50: #{dgcnn_forward.4} parent=39 // pred_check_branch
        %302 = sbr.rel (%p300) target = $region52
      $region51: #{dgcnn_forward.4} parent=39 // pred_region
        %s303 = smul.u32 4, %s15
        %p304 = scmp.lt.s32.totalorder %s303, 7
        %s305 = scalar_select %p304, %s303, 7
        %s306 = smul.addr %s305, 8
        %s307 = scalar_lea.vmem %s3, %s306
        %s308 = smul.u32 4, %s15
      $region52: #{dgcnn_forward.4} parent=39 // pred_fallthru
        _
    $region40: #{dgcnn_forward.4} parent=5 // pred_fallthru
      _
    %p309 = scmp.le.s32.totalorder 1, %s15
    %p310 = scmp.lt.s32.totalorder %s15, 3
    %p311 = pnand %p309, %p310
    %p312 = pneg %p311
    // Predicated region
    $region53: #{dgcnn_forward.4} parent=5 // pred_check
      _
    $region54: #{dgcnn_forward.4} parent=5 // pred_check_branch
      %314 = sbr.rel (%p311) target = $region56
    $region55: #{dgcnn_forward.4} parent=5 // pred_region
      %s315 = ssub.s32 %s15, 1
      %s316 = smul.u32 4, %s20
      %p317 = scmp.lt.s32.totalorder %s316, 7
      %s318 = scalar_select %p317, %s316, 7
      %s319 = smul.addr %s318, 8
      %s320 = scalar_lea.vmem %s0, %s319
      %p321 = pneg %p41
      %p322 = pneg %p38
      %p323 = pneg %p62
      %p324 = pneg %p59
      %s325 = smul.u32 4, %s20
      %p326 = scmp.lt.s32.totalorder %s325, 7
      %s327 = scalar_select %p326, %s325, 7
      %s328 = smul.addr %s327, 8
      %s329 = scalar_lea.vmem %s2, %s328
      %p330 = pneg %p88
      %p331 = pneg %p85
      %s332 = smul.u32 4, %s20
      %p333 = scmp.lt.s32.totalorder %s332, 7
      %s334 = scalar_select %p333, %s332, 7
      %s335 = smul.addr %s334, 8
      %s336 = scalar_lea.vmem %s3, %s335
      %p337 = pneg %p114
      %p338 = pneg %p111
      %p339 = pneg %p135
      %p340 = pneg %p132
      %p341 = pneg %p156
      %p342 = pneg %p153
      %p343 = pneg %p177
      %p344 = pneg %p174
      %p345 = pneg %p198
      %p346 = pneg %p195
      %p347 = pneg %p219
      %p348 = pneg %p216
      %p349 = pneg %p245
      %p350 = pneg %p242
      %s351 = smul.u32 4, %s20
      %p352 = scmp.lt.s32.totalorder %s351, 7
      %s353 = scalar_select %p352, %s351, 7
      %s354 = smul.addr %s353, 8
      %s355 = scalar_lea.vmem %s9, %s354
      %s356 = smul.u32 4, %s20
      %p357 = scmp.lt.s32.totalorder %s356, 7
      %s358 = scalar_select %p357, %s356, 7
      %s359 = smul.addr %s358, 8
      %s360 = scalar_lea.vmem %s0, %s359
      %s361 = smul.u32 4, %s20
      %s362 = smul.u32 4, %s20
      %p363 = scmp.lt.s32.totalorder %s362, 7
      %s364 = scalar_select %p363, %s362, 7
      %s365 = smul.addr %s364, 8
      %s366 = scalar_lea.vmem %s2, %s365
      %s367 = smul.u32 4, %s20
      %s368 = smul.u32 4, %s20
      %p369 = scmp.lt.s32.totalorder %s368, 7
      %s370 = scalar_select %p369, %s368, 7
      %s371 = smul.addr %s370, 8
      %s372 = scalar_lea.vmem %s3, %s371
      %s373 = smul.u32 4, %s20
      %s374 = smul.u32 4, %s20
      %p375 = scmp.lt.s32.totalorder %s374, 7
      %s376 = scalar_select %p375, %s374, 7
      %s377 = smul.addr %s376, 8
      %s378 = scalar_lea.vmem %s9, %s377
      %s379 = smul.u32 4, %s20
      %v381 = vld [vmem:[%s372] sm:$0xff]
      %v382 = vld [vmem:[%s372 + $0x8] sm:$0xff]
      %v383 = vld [vmem:[%s372 + $0x10] sm:$0xff]
      %v384 = vld [vmem:[%s372 + $0x18] sm:$0xff]
      %v385 = vld [vmem:[%s4] sm:$0xff]
      %v386 = vld [vmem:[%s4 + $0x8] sm:$0xff]
      %v387 = vld [vmem:[%s4 + $0x10] sm:$0xff]
      %v388 = vld [vmem:[%s4 + $0x18] sm:$0xff]
      %v389 = vld [vmem:[%s4 + $0x20] sm:$0xff]
      %v390 = vld [vmem:[%s4 + $0x28] sm:$0xff]
      %v391 = vld [vmem:[%s4 + $0x30] sm:$0xff]
      %v392 = vld [vmem:[%s4 + $0x38] sm:$0xff]
      %v393 = vld [vmem:[%s5] sm:$0x7f]
      %vm394 = vcmask 56320
      %v396 = vsel %vm394, %v381, 0
      %v399 = vsel %vm394, %v382, 0
      %v402 = vsel %vm394, %v383, 0
      %v405 = vsel %vm394, %v384, 0
      %vm407 = vcmask 1046528
      %v409 = vsel %vm407, %v393, 0
      %411 = vmatprep.subr.mxu0 0.0
      %412 = vmatpush1.msra.mxu0 0.0
      %413 = vmatprep.subr.mxu0 0.0
      %414 = vmatpush1.msra.mxu0 0.0
      %415 = vmatprep.subr.mxu0 0.0
      %416 = vmatpush1.msra.mxu0 0.0
      %417 = vmatprep.subr.mxu0 0.0
      %418 = vmatpush1.msra.mxu0 0.0
      %419 = vmatprep.subr.mxu0 0.0
      %420 = vmatpush1.msra.mxu0 0.0
      %421 = vmatprep.subr.mxu0 0.0
      %422 = vmatpush1.msra.mxu0 0.0
      %423 = vmatprep.subr.mxu0 0.0
      %424 = vmatpush1.msra.mxu0 0.0
      %425 = vmatprep.subr.mxu0 0.0
      %426 = vmatpush1.msra.mxu0 0.0
      %427 = vmatprep.subr.mxu0 0.0
      %428 = vmatpush1.msra.mxu0 0.0
      %429 = vmatprep.subr.mxu0 0.0
      %430 = vmatpush1.msra.mxu0 0.0
      %431 = vmatprep.subr.mxu0 0.0
      %432 = vmatpush1.msra.mxu0 0.0
      %433 = vmatprep.subr.mxu0 0.0
      %434 = vmatpush1.msra.mxu0 0.0
      %435 = vmatprep.subr.mxu0 0.0
      %436 = vmatpush1.msra.mxu0 0.0
      %437 = vmatprep.subr.mxu0 0.0
      %438 = vmatpush1.msra.mxu0 0.0
      %439 = vmatprep.subr.mxu0 0.0
      %440 = vmatpush1.msra.mxu0 0.0
      %441 = vmatprep.subr.mxu0 0.0
      %442 = vmatpush1.msra.mxu0 %v409
      %443 = vmatprep.subr.mxu0 0.0
      %444 = vmatpush2.msra.mxu0 0.0
      %445 = vmatprep.subr.mxu0 0.0
      %446 = vmatpush2.msra.mxu0 0.0
      %447 = vmatprep.subr.mxu0 0.0
      %448 = vmatpush2.msra.mxu0 0.0
      %449 = vmatprep.subr.mxu0 0.0
      %450 = vmatpush2.msra.mxu0 0.0
      %451 = vmatprep.subr.mxu0 0.0
      %452 = vmatpush2.msra.mxu0 0.0
      %453 = vmatprep.subr.mxu0 0.0
      %454 = vmatpush2.msra.mxu0 0.0
      %455 = vmatprep.subr.mxu0 0.0
      %456 = vmatpush2.msra.mxu0 0.0
      %457 = vmatprep.subr.mxu0 0.0
      %458 = vmatpush2.msra.mxu0 0.0
      %459 = vmatprep.subr.mxu0 0.0
      %460 = vmatpush2.msra.mxu0 0.0
      %461 = vmatprep.subr.mxu0 0.0
      %462 = vmatpush2.msra.mxu0 0.0
      %463 = vmatprep.subr.mxu0 0.0
      %464 = vmatpush2.msra.mxu0 0.0
      %465 = vmatprep.subr.mxu0 0.0
      %466 = vmatpush2.msra.mxu0 0.0
      %467 = vmatprep.subr.mxu0 0.0
      %468 = vmatpush2.msra.mxu0 0.0
      %469 = vmatprep.subr.mxu0 0.0
      %470 = vmatpush2.msra.mxu0 0.0
      %471 = vmatprep.subr.mxu0 0.0
      %472 = vmatpush2.msra.mxu0 0.0
      %473 = vmatprep.subr.mxu0 0.0
      %474 = vmatpush2.msra.mxu0 0.0
      %475 = vmatprep.mubr.f32.mxu0 0.0
      %476 = vmatmul.mubr.f32.gmra.mxu0 %v396
      %v477 = vpop.f32.mrf.mxu0
      %v478 = vadd.f32 0.0, %v477
      %v479 = vpop.f32.mrf.mxu0
      %480 = vmatprep.mubr.f32.mxu0 0.0
      %481 = vmatmul.mubr.f32.gmra.mxu0 %v399
      %v482 = vpop.f32.mrf.mxu0
      %v483 = vadd.f32 0.0, %v482
      %v484 = vpop.f32.mrf.mxu0
      %485 = vmatprep.mubr.f32.mxu0 0.0
      %486 = vmatmul.mubr.f32.gmra.mxu0 %v402
      %v487 = vpop.f32.mrf.mxu0
      %v488 = vadd.f32 0.0, %v487
      %v489 = vpop.f32.mrf.mxu0
      %490 = vmatprep.mubr.f32.mxu0 0.0
      %491 = vmatmul.mubr.f32.gmra.mxu0 %v405
      %v492 = vpop.f32.mrf.mxu0
      %v493 = vadd.f32 0.0, %v492
      %v494 = vpop.f32.mrf.mxu0
      %495 = vdwg.mxu0
      %v496 = vld [vmem:[%s6] sm:$0x7f]
      %v498 = vsel %vm394, %v385, 0
      %v501 = vsel %vm394, %v386, 0
      %v504 = vsel %vm394, %v387, 0
      %v507 = vsel %vm394, %v388, 0
      %v510 = vsel %vm394, %v389, 0
      %v513 = vsel %vm394, %v390, 0
      %v516 = vsel %vm394, %v391, 0
      %v519 = vsel %vm394, %v392, 0
      %v522 = vsel %vm407, %v496, 0
      %524 = vmatprep.subr.mxu0 0.0
      %525 = vmatpush1.msra.mxu0 0.0
      %526 = vmatprep.subr.mxu0 0.0
      %527 = vmatpush1.msra.mxu0 0.0
      %528 = vmatprep.subr.mxu0 0.0
      %529 = vmatpush1.msra.mxu0 0.0
      %530 = vmatprep.subr.mxu0 0.0
      %531 = vmatpush1.msra.mxu0 0.0
      %532 = vmatprep.subr.mxu0 0.0
      %533 = vmatpush1.msra.mxu0 0.0
      %534 = vmatprep.subr.mxu0 0.0
      %535 = vmatpush1.msra.mxu0 0.0
      %536 = vmatprep.subr.mxu0 0.0
      %537 = vmatpush1.msra.mxu0 0.0
      %538 = vmatprep.subr.mxu0 0.0
      %539 = vmatpush1.msra.mxu0 0.0
      %540 = vmatprep.subr.mxu0 0.0
      %541 = vmatpush1.msra.mxu0 0.0
      %542 = vmatprep.subr.mxu0 0.0
      %543 = vmatpush1.msra.mxu0 0.0
      %544 = vmatprep.subr.mxu0 0.0
      %545 = vmatpush1.msra.mxu0 0.0
      %546 = vmatprep.subr.mxu0 0.0
      %547 = vmatpush1.msra.mxu0 0.0
      %548 = vmatprep.subr.mxu0 0.0
      %549 = vmatpush1.msra.mxu0 0.0
      %550 = vmatprep.subr.mxu0 0.0
      %551 = vmatpush1.msra.mxu0 0.0
      %552 = vmatprep.subr.mxu0 0.0
      %553 = vmatpush1.msra.mxu0 0.0
      %554 = vmatprep.subr.mxu0 0.0
      %555 = vmatpush1.msra.mxu0 %v522
      %556 = vmatprep.subr.mxu0 0.0
      %557 = vmatpush2.msra.mxu0 0.0
      %558 = vmatprep.subr.mxu0 0.0
      %559 = vmatpush2.msra.mxu0 0.0
      %560 = vmatprep.subr.mxu0 0.0
      %561 = vmatpush2.msra.mxu0 0.0
      %562 = vmatprep.subr.mxu0 0.0
      %563 = vmatpush2.msra.mxu0 0.0
      %564 = vmatprep.subr.mxu0 0.0
      %565 = vmatpush2.msra.mxu0 0.0
      %566 = vmatprep.subr.mxu0 0.0
      %567 = vmatpush2.msra.mxu0 0.0
      %568 = vmatprep.subr.mxu0 0.0
      %569 = vmatpush2.msra.mxu0 0.0
      %570 = vmatprep.subr.mxu0 0.0
      %571 = vmatpush2.msra.mxu0 0.0
      %572 = vmatprep.subr.mxu0 0.0
      %573 = vmatpush2.msra.mxu0 0.0
      %574 = vmatprep.subr.mxu0 0.0
      %575 = vmatpush2.msra.mxu0 0.0
      %576 = vmatprep.subr.mxu0 0.0
      %577 = vmatpush2.msra.mxu0 0.0
      %578 = vmatprep.subr.mxu0 0.0
      %579 = vmatpush2.msra.mxu0 0.0
      %580 = vmatprep.subr.mxu0 0.0
      %581 = vmatpush2.msra.mxu0 0.0
      %582 = vmatprep.subr.mxu0 0.0
      %583 = vmatpush2.msra.mxu0 0.0
      %584 = vmatprep.subr.mxu0 0.0
      %585 = vmatpush2.msra.mxu0 0.0
      %586 = vmatprep.subr.mxu0 0.0
      %587 = vmatpush2.msra.mxu0 0.0
      %588 = vmatprep.mubr.f32.mxu0 0.0
      %589 = vmatmul.mubr.f32.gmra.mxu0 %v498
      %v590 = vpop.f32.mrf.mxu0
      %v591 = vadd.f32 0.0, %v590
      %v592 = vpop.f32.mrf.mxu0
      %593 = vmatprep.mubr.f32.mxu0 0.0
      %594 = vmatmul.mubr.f32.gmra.mxu0 %v501
      %v595 = vpop.f32.mrf.mxu0
      %v596 = vadd.f32 0.0, %v595
      %v597 = vpop.f32.mrf.mxu0
      %598 = vmatprep.mubr.f32.mxu0 0.0
      %599 = vmatmul.mubr.f32.gmra.mxu0 %v504
      %v600 = vpop.f32.mrf.mxu0
      %v601 = vadd.f32 0.0, %v600
      %v602 = vpop.f32.mrf.mxu0
      %603 = vmatprep.mubr.f32.mxu0 0.0
      %604 = vmatmul.mubr.f32.gmra.mxu0 %v507
      %v605 = vpop.f32.mrf.mxu0
      %v606 = vadd.f32 0.0, %v605
      %v607 = vpop.f32.mrf.mxu0
      %608 = vmatprep.mubr.f32.mxu0 0.0
      %609 = vmatmul.mubr.f32.gmra.mxu0 %v510
      %v610 = vpop.f32.mrf.mxu0
      %v611 = vadd.f32 0.0, %v610
      %v612 = vpop.f32.mrf.mxu0
      %613 = vmatprep.mubr.f32.mxu0 0.0
      %614 = vmatmul.mubr.f32.gmra.mxu0 %v513
      %v615 = vpop.f32.mrf.mxu0
      %v616 = vadd.f32 0.0, %v615
      %v617 = vpop.f32.mrf.mxu0
      %618 = vmatprep.mubr.f32.mxu0 0.0
      %619 = vmatmul.mubr.f32.gmra.mxu0 %v516
      %v620 = vpop.f32.mrf.mxu0
      %v621 = vadd.f32 0.0, %v620
      %v622 = vpop.f32.mrf.mxu0
      %623 = vmatprep.mubr.f32.mxu0 0.0
      %624 = vmatmul.mubr.f32.gmra.mxu0 %v519
      %v625 = vpop.f32.mrf.mxu0
      %v626 = vadd.f32 0.0, %v625
      %v627 = vpop.f32.mrf.mxu0
      %628 = vdwg.mxu0
      %v629 = vpack.c.bf16 %v596, %v591
      %v630 = vpack.c.bf16 %v606, %v601
      %v631 = vpack.c.bf16 %v616, %v611
      %v632 = vpack.c.bf16 %v626, %v621
      %v633 = vld [vmem:[%s366] sm:$0xff]
      %v634 = vld [vmem:[%s366 + $0x8] sm:$0xff]
      %v635 = vld [vmem:[%s366 + $0x10] sm:$0xff]
      %v636 = vld [vmem:[%s366 + $0x18] sm:$0xff]
      %638 = vset.pattern.permute.xlu0 0
      %639 = vperm.xlu0 %638, %v633
      %v640 = vpop.permute.xlu0 %639
      %643 = vset.pattern.permute.xlu0 0
      %644 = vperm.xlu0 %643, %v634
      %v645 = vpop.permute.xlu0 %644
      %648 = vset.pattern.permute.xlu0 0
      %649 = vperm.xlu0 %648, %v635
      %v650 = vpop.permute.xlu0 %649
      %653 = vset.pattern.permute.xlu0 0
      %654 = vperm.xlu0 %653, %v636
      %v655 = vpop.permute.xlu0 %654
      %657 = vmatprep.subr.mxu0 0.0
      %658 = vmatpush1.xpose.msra.mxu0 0.0
      %659 = vmatprep.subr.mxu0 0.0
      %660 = vmatpush1.xpose.msra.mxu0 0.0
      %661 = vmatprep.subr.mxu0 0.0
      %662 = vmatpush1.xpose.msra.mxu0 0.0
      %663 = vmatprep.subr.mxu0 0.0
      %664 = vmatpush1.xpose.msra.mxu0 0.0
      %665 = vmatprep.subr.mxu0 0.0
      %666 = vmatpush1.xpose.msra.mxu0 0.0
      %667 = vmatprep.subr.mxu0 0.0
      %668 = vmatpush1.xpose.msra.mxu0 0.0
      %669 = vmatprep.subr.mxu0 0.0
      %670 = vmatpush1.xpose.msra.mxu0 0.0
      %671 = vmatprep.subr.mxu0 0.0
      %672 = vmatpush1.xpose.msra.mxu0 0.0
      %673 = vmatprep.subr.mxu0 0.0
      %674 = vmatpush1.xpose.msra.mxu0 %v519
      %675 = vmatprep.subr.mxu0 0.0
      %676 = vmatpush1.xpose.msra.mxu0 %v516
      %677 = vmatprep.subr.mxu0 0.0
      %678 = vmatpush1.xpose.msra.mxu0 %v513
      %679 = vmatprep.subr.mxu0 0.0
      %680 = vmatpush1.xpose.msra.mxu0 %v510
      %681 = vmatprep.subr.mxu0 0.0
      %682 = vmatpush1.xpose.msra.mxu0 %v507
      %683 = vmatprep.subr.mxu0 0.0
      %684 = vmatpush1.xpose.msra.mxu0 %v504
      %685 = vmatprep.subr.mxu0 0.0
      %686 = vmatpush1.xpose.msra.mxu0 %v501
      %687 = vmatprep.subr.mxu0 0.0
      %688 = vmatpush1.xpose.msra.mxu0 %v498
      %689 = vmatprep.subr.mxu0 0.0
      %690 = vmatpush2.xpose.msra.mxu0 0.0
      %691 = vmatprep.subr.mxu0 0.0
      %692 = vmatpush2.xpose.msra.mxu0 0.0
      %693 = vmatprep.subr.mxu0 0.0
      %694 = vmatpush2.xpose.msra.mxu0 0.0
      %695 = vmatprep.subr.mxu0 0.0
      %696 = vmatpush2.xpose.msra.mxu0 0.0
      %697 = vmatprep.subr.mxu0 0.0
      %698 = vmatpush2.xpose.msra.mxu0 0.0
      %699 = vmatprep.subr.mxu0 0.0
      %700 = vmatpush2.xpose.msra.mxu0 0.0
      %701 = vmatprep.subr.mxu0 0.0
      %702 = vmatpush2.xpose.msra.mxu0 0.0
      %703 = vmatprep.subr.mxu0 0.0
      %704 = vmatpush2.xpose.msra.mxu0 0.0
      %705 = vmatprep.subr.mxu0 0.0
      %706 = vmatpush2.xpose.msra.mxu0 0.0
      %707 = vmatprep.subr.mxu0 0.0
      %708 = vmatpush2.xpose.msra.mxu0 0.0
      %709 = vmatprep.subr.mxu0 0.0
      %710 = vmatpush2.xpose.msra.mxu0 0.0
      %711 = vmatprep.subr.mxu0 0.0
      %712 = vmatpush2.xpose.msra.mxu0 0.0
      %713 = vmatprep.subr.mxu0 0.0
      %714 = vmatpush2.xpose.msra.mxu0 0.0
      %715 = vmatprep.subr.mxu0 0.0
      %716 = vmatpush2.xpose.msra.mxu0 0.0
      %717 = vmatprep.subr.mxu0 0.0
      %718 = vmatpush2.xpose.msra.mxu0 0.0
      %719 = vmatprep.subr.mxu0 0.0
      %720 = vmatpush2.xpose.msra.mxu0 0.0
      %721 = vmatprep.mubr.f32.mxu0 0.0
      %722 = vmatmul.mubr.f32.gmra.mxu0 %v396
      %v723 = vpop.f32.mrf.mxu0
      %v724 = vadd.f32 %v640, %v723
      %v725 = vpop.f32.mrf.mxu0
      %726 = vmatprep.mubr.f32.mxu0 0.0
      %727 = vmatmul.mubr.f32.gmra.mxu0 %v399
      %v728 = vpop.f32.mrf.mxu0
      %v729 = vadd.f32 %v645, %v728
      %v730 = vpop.f32.mrf.mxu0
      %731 = vmatprep.mubr.f32.mxu0 0.0
      %732 = vmatmul.mubr.f32.gmra.mxu0 %v402
      %v733 = vpop.f32.mrf.mxu0
      %v734 = vadd.f32 %v650, %v733
      %v735 = vpop.f32.mrf.mxu0
      %736 = vmatprep.mubr.f32.mxu0 0.0
      %737 = vmatmul.mubr.f32.gmra.mxu0 %v405
      %v738 = vpop.f32.mrf.mxu0
      %v739 = vadd.f32 %v655, %v738
      %v740 = vpop.f32.mrf.mxu0
      %741 = vdwg.mxu0
      %v742 = vld [vmem:[%s360] sm:$0xff]
      %v743 = vld [vmem:[%s360 + $0x8] sm:$0xff]
      %v744 = vld [vmem:[%s360 + $0x10] sm:$0xff]
      %v745 = vld [vmem:[%s360 + $0x18] sm:$0xff]
      %v746 = vld [vmem:[%s1] sm:$0x1]
      %748 = vset.pattern.permute.xlu0 0
      %749 = vperm.xlu0 %748, %v742
      %v750 = vpop.permute.xlu0 %749
      %753 = vset.pattern.permute.xlu0 0
      %754 = vperm.xlu0 %753, %v743
      %v755 = vpop.permute.xlu0 %754
      %758 = vset.pattern.permute.xlu0 0
      %759 = vperm.xlu0 %758, %v744
      %v760 = vpop.permute.xlu0 %759
      %763 = vset.pattern.permute.xlu0 0
      %764 = vperm.xlu0 %763, %v745
      %v765 = vpop.permute.xlu0 %764
      %v768 = vlaneseq
      %v769 = vshrl.u32 %v768, 7
      %v770 = vsub.s32 0, %v769
      %v771 = vrot.slane %v746, %v770
      %vm773 = vcmp.eq.f32.partialorder %v750, %v771
      %vm774 = vcmp.eq.f32.partialorder %v755, %v771
      %vm775 = vcmp.eq.f32.partialorder %v760, %v771
      %vm776 = vcmp.eq.f32.partialorder %v765, %v771
      %v777 = vsel %vm773, %v724, 1e+30
      %v778 = vsel %vm774, %v729, 1e+30
      %v779 = vsel %vm775, %v734, 1e+30
      %v780 = vsel %vm776, %v739, 1e+30
      %v781 = vlaneseq
      %v782 = vand.u32 %v781, 127
      %v787 = vand.u32 %v777, 4294967232
      %v788 = vand.u32 %v778, 4294967232
      %v789 = vand.u32 %v779, 4294967232
      %v790 = vand.u32 %v780, 4294967232
      %v791 = vor.u32 %v787, %v782
      %v792 = vor.u32 %v788, %v782
      %v793 = vor.u32 %v789, %v782
      %v794 = vor.u32 %v790, %v782
      %v795 = vld [vmem:[%s7] sm:$0xf]
      %v796 = vld [vmem:[%s7 + $0x4] sm:$0xf]
      %v797 = vld [vmem:[%s7 + $0x8] sm:$0xf]
      %v798 = vld [vmem:[%s7 + $0xc] sm:$0xf]
      %v799 = vld [vmem:[%s7 + $0x10] sm:$0xf]
      %v800 = vld [vmem:[%s7 + $0x14] sm:$0xf]
      %v801 = vld [vmem:[%s7 + $0x18] sm:$0xf]
      %v802 = vld [vmem:[%s7 + $0x1c] sm:$0xf]
      %v803 = vld [vmem:[%s8] sm:$0x1]
      %vm804 = vcmask 523264
      %v805 = vsel %vm804, %v791, 2147483647
      %v806 = vand.u32 %v805, 65535
      %v807 = vshra.s32 %v805, 16
      %v808 = vcvt.s32.f32 %v806
      %v809 = vcvt.s32.f32 %v807
      %810 = vmin.xlane.f32.xlu0 %v809
      %v811 = vpop.xlane.xlu0 %810
      %vm812 = vcmp.eq.f32.partialorder %v809, %v811
      %v813 = vsel %vm812, %v808, inf
      %814 = vmin.xlane.f32.xlu0 %v813
      %v815 = vpop.xlane.xlu0 %814
      %v816 = vcvt.f32.s32 %v815
      %v817 = vcvt.f32.s32 %v811
      %v818 = vshll.u32 %v817, 16
      %v819 = vadd.s32 %v818, %v816
      %v820 = vsel %vm804, %v792, 2147483647
      %v821 = vand.u32 %v820, 65535
      %v822 = vshra.s32 %v820, 16
      %v823 = vcvt.s32.f32 %v821
      %v824 = vcvt.s32.f32 %v822
      %825 = vmin.xlane.f32.xlu0 %v824
      %v826 = vpop.xlane.xlu0 %825
      %vm827 = vcmp.eq.f32.partialorder %v824, %v826
      %v828 = vsel %vm827, %v823, inf
      %829 = vmin.xlane.f32.xlu0 %v828
      %v830 = vpop.xlane.xlu0 %829
      %v831 = vcvt.f32.s32 %v830
      %v832 = vcvt.f32.s32 %v826
      %v833 = vshll.u32 %v832, 16
      %v834 = vadd.s32 %v833, %v831
      %v835 = vsel %vm804, %v793, 2147483647
      %v836 = vand.u32 %v835, 65535
      %v837 = vshra.s32 %v835, 16
      %v838 = vcvt.s32.f32 %v836
      %v839 = vcvt.s32.f32 %v837
      %840 = vmin.xlane.f32.xlu0 %v839
      %v841 = vpop.xlane.xlu0 %840
      %vm842 = vcmp.eq.f32.partialorder %v839, %v841
      %v843 = vsel %vm842, %v838, inf
      %844 = vmin.xlane.f32.xlu0 %v843
      %v845 = vpop.xlane.xlu0 %844
      %v846 = vcvt.f32.s32 %v845
      %v847 = vcvt.f32.s32 %v841
      %v848 = vshll.u32 %v847, 16
      %v849 = vadd.s32 %v848, %v846
      %v850 = vsel %vm804, %v794, 2147483647
      %v851 = vand.u32 %v850, 65535
      %v852 = vshra.s32 %v850, 16
      %v853 = vcvt.s32.f32 %v851
      %v854 = vcvt.s32.f32 %v852
      %855 = vmin.xlane.f32.xlu0 %v854
      %v856 = vpop.xlane.xlu0 %855
      %vm857 = vcmp.eq.f32.partialorder %v854, %v856
      %v858 = vsel %vm857, %v853, inf
      %859 = vmin.xlane.f32.xlu0 %v858
      %v860 = vpop.xlane.xlu0 %859
      %v861 = vcvt.f32.s32 %v860
      %v862 = vcvt.f32.s32 %v856
      %v863 = vshll.u32 %v862, 16
      %v864 = vadd.s32 %v863, %v861
      %vm865 = vcmp.eq.s32.totalorder %v791, %v819
      %vm866 = vcmp.eq.s32.totalorder %v792, %v834
      %vm867 = vcmp.eq.s32.totalorder %v793, %v849
      %vm868 = vcmp.eq.s32.totalorder %v794, %v864
      %v869 = vsel %vm865, 1, 0
      %v870 = vsel %vm866, 1, 0
      %v871 = vsel %vm867, 1, 0
      %v872 = vsel %vm868, 1, 0
      %v873 = vcvt.s32.f32 %v869
      %v874 = vcvt.s32.f32 %v870
      %v875 = vcvt.s32.f32 %v871
      %v876 = vcvt.s32.f32 %v872
      %v877 = vpack.c.bf16 %v874, %v873
      %v878 = vpack.c.bf16 %v876, %v875
      %v880 = vsel %vm804, %v877, 0
      %v883 = vsel %vm804, %v878, 0
      %885 = vmatprep.subr.bf16.mxu0 0
      %886 = vmatpush1.bf16.msra.mxu0 0
      %887 = vmatprep.subr.bf16.mxu0 0
      %888 = vmatpush1.bf16.msra.mxu0 0
      %889 = vmatprep.subr.bf16.mxu0 0
      %890 = vmatpush1.bf16.msra.mxu0 0
      %891 = vmatprep.subr.bf16.mxu0 0
      %892 = vmatpush1.bf16.msra.mxu0 0
      %893 = vmatprep.subr.bf16.mxu0 0
      %894 = vmatpush1.bf16.msra.mxu0 %v632
      %895 = vmatprep.subr.bf16.mxu0 0
      %896 = vmatpush1.bf16.msra.mxu0 %v631
      %897 = vmatprep.subr.bf16.mxu0 0
      %898 = vmatpush1.bf16.msra.mxu0 %v630
      %899 = vmatprep.subr.bf16.mxu0 0
      %900 = vmatpush1.bf16.msra.mxu0 %v629
      %901 = vmatprep.subr.bf16.mxu0 0
      %902 = vmatpush2.bf16.msra.mxu0 0
      %903 = vmatprep.subr.bf16.mxu0 0
      %904 = vmatpush2.bf16.msra.mxu0 0
      %905 = vmatprep.subr.bf16.mxu0 0
      %906 = vmatpush2.bf16.msra.mxu0 0
      %907 = vmatprep.subr.bf16.mxu0 0
      %908 = vmatpush2.bf16.msra.mxu0 0
      %909 = vmatprep.subr.bf16.mxu0 0
      %910 = vmatpush2.bf16.msra.mxu0 0
      %911 = vmatprep.subr.bf16.mxu0 0
      %912 = vmatpush2.bf16.msra.mxu0 0
      %913 = vmatprep.subr.bf16.mxu0 0
      %914 = vmatpush2.bf16.msra.mxu0 0
      %915 = vmatprep.subr.bf16.mxu0 0
      %916 = vmatpush2.bf16.msra.mxu0 0
      %917 = vmatprep.mubr.bf16.mxu0 0
      %918 = vmatmul.mubr.bf16.gmra.mxu0 %v880
      %v919 = vpop.f32.mrf.mxu0
      %v920 = vadd.f32 0.0, %v919
      %v921 = vpop.f32.mrf.mxu0
      %v922 = vpop.f32.mrf.mxu0
      %v923 = vadd.f32 0.0, %v922
      %v924 = vpop.f32.mrf.mxu0
      %925 = vmatprep.mubr.bf16.mxu0 0
      %926 = vmatmul.mubr.bf16.gmra.mxu0 %v883
      %v927 = vpop.f32.mrf.mxu0
      %v928 = vadd.f32 0.0, %v927
      %v929 = vpop.f32.mrf.mxu0
      %v930 = vpop.f32.mrf.mxu0
      %v931 = vadd.f32 0.0, %v930
      %v932 = vpop.f32.mrf.mxu0
      %933 = vdwg.mxu0
      %v934 = vadd.f32 %v478, %v920
      %v935 = vadd.f32 %v483, %v923
      %v936 = vadd.f32 %v488, %v928
      %v937 = vadd.f32 %v493, %v931
      %v938 = vmax.f32 %v934, 0.0
      %v939 = vmax.f32 %v935, 0.0
      %v940 = vmax.f32 %v936, 0.0
      %v941 = vmax.f32 %v937, 0.0
      %v942 = vpack.c.bf16 %v939, %v938
      %v943 = vpack.c.bf16 %v941, %v940
      %v945 = vlaneseq
      %v946 = vshrl.u32 %v945, 7
      %v947 = vsub.s32 0, %v946
      %v948 = vrot.slane %v803, %v947
      %v958 = vunpack.c.l.b16 %v795
      %v959 = vunpack.c.l.b16 %v796
      %v960 = vunpack.c.l.b16 %v797
      %v961 = vunpack.c.l.b16 %v798
      %v962 = vunpack.c.l.b16 %v799
      %v963 = vunpack.c.l.b16 %v800
      %v964 = vunpack.c.l.b16 %v801
      %v965 = vunpack.c.l.b16 %v802
      %v966 = vpack.c.b16 %v959, %v958
      %v967 = vpack.c.b16 %v961, %v960
      %v968 = vpack.c.b16 %v963, %v962
      %v969 = vpack.c.b16 %v965, %v964
      %v975 = vsel %vm804, %v942, 0
      %v978 = vsel %vm804, %v943, 0
      %980 = vmatprep.subr.bf16.mxu0 0
      %981 = vmatpush1.bf16.msra.mxu0 0
      %982 = vmatprep.subr.bf16.mxu0 0
      %983 = vmatpush1.bf16.msra.mxu0 0
      %984 = vmatprep.subr.bf16.mxu0 0
      %985 = vmatpush1.bf16.msra.mxu0 0
      %986 = vmatprep.subr.bf16.mxu0 0
      %987 = vmatpush1.bf16.msra.mxu0 0
      %988 = vmatprep.subr.bf16.mxu0 0
      %989 = vmatpush1.bf16.msra.mxu0 %v969
      %990 = vmatprep.subr.bf16.mxu0 0
      %991 = vmatpush1.bf16.msra.mxu0 %v968
      %992 = vmatprep.subr.bf16.mxu0 0
      %993 = vmatpush1.bf16.msra.mxu0 %v967
      %994 = vmatprep.subr.bf16.mxu0 0
      %995 = vmatpush1.bf16.msra.mxu0 %v966
      %996 = vmatprep.subr.bf16.mxu0 0
      %997 = vmatpush2.bf16.msra.mxu0 0
      %998 = vmatprep.subr.bf16.mxu0 0
      %999 = vmatpush2.bf16.msra.mxu0 0
      %1000 = vmatprep.subr.bf16.mxu0 0
      %1001 = vmatpush2.bf16.msra.mxu0 0
      %1002 = vmatprep.subr.bf16.mxu0 0
      %1003 = vmatpush2.bf16.msra.mxu0 0
      %1004 = vmatprep.subr.bf16.mxu0 0
      %1005 = vmatpush2.bf16.msra.mxu0 0
      %1006 = vmatprep.subr.bf16.mxu0 0
      %1007 = vmatpush2.bf16.msra.mxu0 0
      %1008 = vmatprep.subr.bf16.mxu0 0
      %1009 = vmatpush2.bf16.msra.mxu0 0
      %1010 = vmatprep.subr.bf16.mxu0 0
      %1011 = vmatpush2.bf16.msra.mxu0 0
      %1012 = vmatprep.mubr.bf16.mxu0 0
      %1013 = vmatmul.mubr.bf16.gmra.mxu0 %v975
      %v1014 = vpop.f32.mrf.mxu0
      %v1015 = vadd.f32 %v948, %v1014
      %v1016 = vpop.f32.mrf.mxu0
      %v1017 = vpop.f32.mrf.mxu0
      %v1018 = vadd.f32 %v948, %v1017
      %v1019 = vpop.f32.mrf.mxu0
      %1020 = vmatprep.mubr.bf16.mxu0 0
      %1021 = vmatmul.mubr.bf16.gmra.mxu0 %v978
      %v1022 = vpop.f32.mrf.mxu0
      %v1023 = vadd.f32 %v948, %v1022
      %v1024 = vpop.f32.mrf.mxu0
      %v1025 = vpop.f32.mrf.mxu0
      %v1026 = vadd.f32 %v948, %v1025
      %v1027 = vpop.f32.mrf.mxu0
      %1028 = vdwg.mxu0
      %v1029 = vsel %vm865, 2147483647, %v791
      %v1030 = vsel %vm866, 2147483647, %v792
      %v1031 = vsel %vm867, 2147483647, %v793
      %v1032 = vsel %vm868, 2147483647, %v794
      %v1033 = vsel %vm804, %v1029, 2147483647
      %v1034 = vand.u32 %v1033, 65535
      %v1035 = vshra.s32 %v1033, 16
      %v1036 = vcvt.s32.f32 %v1034
      %v1037 = vcvt.s32.f32 %v1035
      %1038 = vmin.xlane.f32.xlu0 %v1037
      %v1039 = vpop.xlane.xlu0 %1038
      %vm1040 = vcmp.eq.f32.partialorder %v1037, %v1039
      %v1041 = vsel %vm1040, %v1036, inf
      %1042 = vmin.xlane.f32.xlu0 %v1041
      %v1043 = vpop.xlane.xlu0 %1042
      %v1044 = vcvt.f32.s32 %v1043
      %v1045 = vcvt.f32.s32 %v1039
      %v1046 = vshll.u32 %v1045, 16
      %v1047 = vadd.s32 %v1046, %v1044
      %v1048 = vsel %vm804, %v1030, 2147483647
      %v1049 = vand.u32 %v1048, 65535
      %v1050 = vshra.s32 %v1048, 16
      %v1051 = vcvt.s32.f32 %v1049
      %v1052 = vcvt.s32.f32 %v1050
      %1053 = vmin.xlane.f32.xlu0 %v1052
      %v1054 = vpop.xlane.xlu0 %1053
      %vm1055 = vcmp.eq.f32.partialorder %v1052, %v1054
      %v1056 = vsel %vm1055, %v1051, inf
      %1057 = vmin.xlane.f32.xlu0 %v1056
      %v1058 = vpop.xlane.xlu0 %1057
      %v1059 = vcvt.f32.s32 %v1058
      %v1060 = vcvt.f32.s32 %v1054
      %v1061 = vshll.u32 %v1060, 16
      %v1062 = vadd.s32 %v1061, %v1059
      %v1063 = vsel %vm804, %v1031, 2147483647
      %v1064 = vand.u32 %v1063, 65535
      %v1065 = vshra.s32 %v1063, 16
      %v1066 = vcvt.s32.f32 %v1064
      %v1067 = vcvt.s32.f32 %v1065
      %1068 = vmin.xlane.f32.xlu0 %v1067
      %v1069 = vpop.xlane.xlu0 %1068
      %vm1070 = vcmp.eq.f32.partialorder %v1067, %v1069
      %v1071 = vsel %vm1070, %v1066, inf
      %1072 = vmin.xlane.f32.xlu0 %v1071
      %v1073 = vpop.xlane.xlu0 %1072
      %v1074 = vcvt.f32.s32 %v1073
      %v1075 = vcvt.f32.s32 %v1069
      %v1076 = vshll.u32 %v1075, 16
      %v1077 = vadd.s32 %v1076, %v1074
      %v1078 = vsel %vm804, %v1032, 2147483647
      %v1079 = vand.u32 %v1078, 65535
      %v1080 = vshra.s32 %v1078, 16
      %v1081 = vcvt.s32.f32 %v1079
      %v1082 = vcvt.s32.f32 %v1080
      %1083 = vmin.xlane.f32.xlu0 %v1082
      %v1084 = vpop.xlane.xlu0 %1083
      %vm1085 = vcmp.eq.f32.partialorder %v1082, %v1084
      %v1086 = vsel %vm1085, %v1081, inf
      %1087 = vmin.xlane.f32.xlu0 %v1086
      %v1088 = vpop.xlane.xlu0 %1087
      %v1089 = vcvt.f32.s32 %v1088
      %v1090 = vcvt.f32.s32 %v1084
      %v1091 = vshll.u32 %v1090, 16
      %v1092 = vadd.s32 %v1091, %v1089
      %vm1093 = vcmp.eq.s32.totalorder %v1029, %v1047
      %vm1094 = vcmp.eq.s32.totalorder %v1030, %v1062
      %vm1095 = vcmp.eq.s32.totalorder %v1031, %v1077
      %vm1096 = vcmp.eq.s32.totalorder %v1032, %v1092
      %v1097 = vsel %vm1093, 1, 0
      %v1098 = vsel %vm1094, 1, 0
      %v1099 = vsel %vm1095, 1, 0
      %v1100 = vsel %vm1096, 1, 0
      %v1101 = vcvt.s32.f32 %v1097
      %v1102 = vcvt.s32.f32 %v1098
      %v1103 = vcvt.s32.f32 %v1099
      %v1104 = vcvt.s32.f32 %v1100
      %v1105 = vpack.c.bf16 %v1102, %v1101
      %v1106 = vpack.c.bf16 %v1104, %v1103
      %v1108 = vsel %vm804, %v1105, 0
      %v1111 = vsel %vm804, %v1106, 0
      %1113 = vmatprep.subr.bf16.mxu0 0
      %1114 = vmatpush1.bf16.msra.mxu0 0
      %1115 = vmatprep.subr.bf16.mxu0 0
      %1116 = vmatpush1.bf16.msra.mxu0 0
      %1117 = vmatprep.subr.bf16.mxu0 0
      %1118 = vmatpush1.bf16.msra.mxu0 0
      %1119 = vmatprep.subr.bf16.mxu0 0
      %1120 = vmatpush1.bf16.msra.mxu0 0
      %1121 = vmatprep.subr.bf16.mxu0 0
      %1122 = vmatpush1.bf16.msra.mxu0 %v632
      %1123 = vmatprep.subr.bf16.mxu0 0
      %1124 = vmatpush1.bf16.msra.mxu0 %v631
      %1125 = vmatprep.subr.bf16.mxu0 0
      %1126 = vmatpush1.bf16.msra.mxu0 %v630
      %1127 = vmatprep.subr.bf16.mxu0 0
      %1128 = vmatpush1.bf16.msra.mxu0 %v629
      %1129 = vmatprep.subr.bf16.mxu0 0
      %1130 = vmatpush2.bf16.msra.mxu0 0
      %1131 = vmatprep.subr.bf16.mxu0 0
      %1132 = vmatpush2.bf16.msra.mxu0 0
      %1133 = vmatprep.subr.bf16.mxu0 0
      %1134 = vmatpush2.bf16.msra.mxu0 0
      %1135 = vmatprep.subr.bf16.mxu0 0
      %1136 = vmatpush2.bf16.msra.mxu0 0
      %1137 = vmatprep.subr.bf16.mxu0 0
      %1138 = vmatpush2.bf16.msra.mxu0 0
      %1139 = vmatprep.subr.bf16.mxu0 0
      %1140 = vmatpush2.bf16.msra.mxu0 0
      %1141 = vmatprep.subr.bf16.mxu0 0
      %1142 = vmatpush2.bf16.msra.mxu0 0
      %1143 = vmatprep.subr.bf16.mxu0 0
      %1144 = vmatpush2.bf16.msra.mxu0 0
      %1145 = vmatprep.mubr.bf16.mxu0 0
      %1146 = vmatmul.mubr.bf16.gmra.mxu0 %v1108
      %v1147 = vpop.f32.mrf.mxu0
      %v1148 = vadd.f32 0.0, %v1147
      %v1149 = vpop.f32.mrf.mxu0
      %v1150 = vpop.f32.mrf.mxu0
      %v1151 = vadd.f32 0.0, %v1150
      %v1152 = vpop.f32.mrf.mxu0
      %1153 = vmatprep.mubr.bf16.mxu0 0
      %1154 = vmatmul.mubr.bf16.gmra.mxu0 %v1111
      %v1155 = vpop.f32.mrf.mxu0
      %v1156 = vadd.f32 0.0, %v1155
      %v1157 = vpop.f32.mrf.mxu0
      %v1158 = vpop.f32.mrf.mxu0
      %v1159 = vadd.f32 0.0, %v1158
      %v1160 = vpop.f32.mrf.mxu0
      %1161 = vdwg.mxu0
      %v1162 = vadd.f32 %v478, %v1148
      %v1163 = vadd.f32 %v483, %v1151
      %v1164 = vadd.f32 %v488, %v1156
      %v1165 = vadd.f32 %v493, %v1159
      %v1166 = vmax.f32 %v1162, 0.0
      %v1167 = vmax.f32 %v1163, 0.0
      %v1168 = vmax.f32 %v1164, 0.0
      %v1169 = vmax.f32 %v1165, 0.0
      %v1170 = vpack.c.bf16 %v1167, %v1166
      %v1171 = vpack.c.bf16 %v1169, %v1168
      %v1173 = vsel %vm804, %v1170, 0
      %v1176 = vsel %vm804, %v1171, 0
      %1178 = vmatprep.subr.bf16.mxu0 0
      %1179 = vmatpush1.bf16.msra.mxu0 0
      %1180 = vmatprep.subr.bf16.mxu0 0
      %1181 = vmatpush1.bf16.msra.mxu0 0
      %1182 = vmatprep.subr.bf16.mxu0 0
      %1183 = vmatpush1.bf16.msra.mxu0 0
      %1184 = vmatprep.subr.bf16.mxu0 0
      %1185 = vmatpush1.bf16.msra.mxu0 0
      %1186 = vmatprep.subr.bf16.mxu0 0
      %1187 = vmatpush1.bf16.msra.mxu0 %v969
      %1188 = vmatprep.subr.bf16.mxu0 0
      %1189 = vmatpush1.bf16.msra.mxu0 %v968
      %1190 = vmatprep.subr.bf16.mxu0 0
      %1191 = vmatpush1.bf16.msra.mxu0 %v967
      %1192 = vmatprep.subr.bf16.mxu0 0
      %1193 = vmatpush1.bf16.msra.mxu0 %v966
      %1194 = vmatprep.subr.bf16.mxu0 0
      %1195 = vmatpush2.bf16.msra.mxu0 0
      %1196 = vmatprep.subr.bf16.mxu0 0
      %1197 = vmatpush2.bf16.msra.mxu0 0
      %1198 = vmatprep.subr.bf16.mxu0 0
      %1199 = vmatpush2.bf16.msra.mxu0 0
      %1200 = vmatprep.subr.bf16.mxu0 0
      %1201 = vmatpush2.bf16.msra.mxu0 0
      %1202 = vmatprep.subr.bf16.mxu0 0
      %1203 = vmatpush2.bf16.msra.mxu0 0
      %1204 = vmatprep.subr.bf16.mxu0 0
      %1205 = vmatpush2.bf16.msra.mxu0 0
      %1206 = vmatprep.subr.bf16.mxu0 0
      %1207 = vmatpush2.bf16.msra.mxu0 0
      %1208 = vmatprep.subr.bf16.mxu0 0
      %1209 = vmatpush2.bf16.msra.mxu0 0
      %1210 = vmatprep.mubr.bf16.mxu0 0
      %1211 = vmatmul.mubr.bf16.gmra.mxu0 %v1173
      %v1212 = vpop.f32.mrf.mxu0
      %v1213 = vadd.f32 %v948, %v1212
      %v1214 = vpop.f32.mrf.mxu0
      %v1215 = vpop.f32.mrf.mxu0
      %v1216 = vadd.f32 %v948, %v1215
      %v1217 = vpop.f32.mrf.mxu0
      %1218 = vmatprep.mubr.bf16.mxu0 0
      %1219 = vmatmul.mubr.bf16.gmra.mxu0 %v1176
      %v1220 = vpop.f32.mrf.mxu0
      %v1221 = vadd.f32 %v948, %v1220
      %v1222 = vpop.f32.mrf.mxu0
      %v1223 = vpop.f32.mrf.mxu0
      %v1224 = vadd.f32 %v948, %v1223
      %v1225 = vpop.f32.mrf.mxu0
      %1226 = vdwg.mxu0
      %vm1227 = vcmp.lt.s32.totalorder %v1047, 1872858888
      %vm1228 = vcmp.lt.s32.totalorder %v1062, 1872858888
      %vm1229 = vcmp.lt.s32.totalorder %v1077, 1872858888
      %vm1230 = vcmp.lt.s32.totalorder %v1092, 1872858888
      %v1231 = vmax.f32 %v1015, %v1213
      %v1232 = vmax.f32 %v1018, %v1216
      %v1233 = vmax.f32 %v1023, %v1221
      %v1234 = vmax.f32 %v1026, %v1224
      %v1235 = vsel %vm1227, 1, 0
      %v1236 = vsel %vm1228, 1, 0
      %v1237 = vsel %vm1229, 1, 0
      %v1238 = vsel %vm1230, 1, 0
      %vm1239 = vcmp.eq.s32.totalorder %v1235, 1
      %vm1240 = vcmp.eq.s32.totalorder %v1236, 1
      %vm1241 = vcmp.eq.s32.totalorder %v1237, 1
      %vm1242 = vcmp.eq.s32.totalorder %v1238, 1
      %v1243 = vsel %vm1239, %v1231, %v1015
      %v1244 = vsel %vm1240, %v1232, %v1018
      %v1245 = vsel %vm1241, %v1233, %v1023
      %v1246 = vsel %vm1242, %v1234, %v1026
      %v1247 = vsel %vm1093, 2147483647, %v1029
      %v1248 = vsel %vm1094, 2147483647, %v1030
      %v1249 = vsel %vm1095, 2147483647, %v1031
      %v1250 = vsel %vm1096, 2147483647, %v1032
      %v1251 = vsel %vm804, %v1247, 2147483647
      %v1252 = vand.u32 %v1251, 65535
      %v1253 = vshra.s32 %v1251, 16
      %v1254 = vcvt.s32.f32 %v1252
      %v1255 = vcvt.s32.f32 %v1253
      %1256 = vmin.xlane.f32.xlu0 %v1255
      %v1257 = vpop.xlane.xlu0 %1256
      %vm1258 = vcmp.eq.f32.partialorder %v1255, %v1257
      %v1259 = vsel %vm1258, %v1254, inf
      %1260 = vmin.xlane.f32.xlu0 %v1259
      %v1261 = vpop.xlane.xlu0 %1260
      %v1262 = vcvt.f32.s32 %v1261
      %v1263 = vcvt.f32.s32 %v1257
      %v1264 = vshll.u32 %v1263, 16
      %v1265 = vadd.s32 %v1264, %v1262
      %v1266 = vsel %vm804, %v1248, 2147483647
      %v1267 = vand.u32 %v1266, 65535
      %v1268 = vshra.s32 %v1266, 16
      %v1269 = vcvt.s32.f32 %v1267
      %v1270 = vcvt.s32.f32 %v1268
      %1271 = vmin.xlane.f32.xlu0 %v1270
      %v1272 = vpop.xlane.xlu0 %1271
      %vm1273 = vcmp.eq.f32.partialorder %v1270, %v1272
      %v1274 = vsel %vm1273, %v1269, inf
      %1275 = vmin.xlane.f32.xlu0 %v1274
      %v1276 = vpop.xlane.xlu0 %1275
      %v1277 = vcvt.f32.s32 %v1276
      %v1278 = vcvt.f32.s32 %v1272
      %v1279 = vshll.u32 %v1278, 16
      %v1280 = vadd.s32 %v1279, %v1277
      %v1281 = vsel %vm804, %v1249, 2147483647
      %v1282 = vand.u32 %v1281, 65535
      %v1283 = vshra.s32 %v1281, 16
      %v1284 = vcvt.s32.f32 %v1282
      %v1285 = vcvt.s32.f32 %v1283
      %1286 = vmin.xlane.f32.xlu0 %v1285
      %v1287 = vpop.xlane.xlu0 %1286
      %vm1288 = vcmp.eq.f32.partialorder %v1285, %v1287
      %v1289 = vsel %vm1288, %v1284, inf
      %1290 = vmin.xlane.f32.xlu0 %v1289
      %v1291 = vpop.xlane.xlu0 %1290
      %v1292 = vcvt.f32.s32 %v1291
      %v1293 = vcvt.f32.s32 %v1287
      %v1294 = vshll.u32 %v1293, 16
      %v1295 = vadd.s32 %v1294, %v1292
      %v1296 = vsel %vm804, %v1250, 2147483647
      %v1297 = vand.u32 %v1296, 65535
      %v1298 = vshra.s32 %v1296, 16
      %v1299 = vcvt.s32.f32 %v1297
      %v1300 = vcvt.s32.f32 %v1298
      %1301 = vmin.xlane.f32.xlu0 %v1300
      %v1302 = vpop.xlane.xlu0 %1301
      %vm1303 = vcmp.eq.f32.partialorder %v1300, %v1302
      %v1304 = vsel %vm1303, %v1299, inf
      %1305 = vmin.xlane.f32.xlu0 %v1304
      %v1306 = vpop.xlane.xlu0 %1305
      %v1307 = vcvt.f32.s32 %v1306
      %v1308 = vcvt.f32.s32 %v1302
      %v1309 = vshll.u32 %v1308, 16
      %v1310 = vadd.s32 %v1309, %v1307
      %vm1311 = vcmp.eq.s32.totalorder %v1247, %v1265
      %vm1312 = vcmp.eq.s32.totalorder %v1248, %v1280
      %vm1313 = vcmp.eq.s32.totalorder %v1249, %v1295
      %vm1314 = vcmp.eq.s32.totalorder %v1250, %v1310
      %v1315 = vsel %vm1311, 1, 0
      %v1316 = vsel %vm1312, 1, 0
      %v1317 = vsel %vm1313, 1, 0
      %v1318 = vsel %vm1314, 1, 0
      %v1319 = vcvt.s32.f32 %v1315
      %v1320 = vcvt.s32.f32 %v1316
      %v1321 = vcvt.s32.f32 %v1317
      %v1322 = vcvt.s32.f32 %v1318
      %v1323 = vpack.c.bf16 %v1320, %v1319
      %v1324 = vpack.c.bf16 %v1322, %v1321
      %v1326 = vsel %vm804, %v1323, 0
      %v1329 = vsel %vm804, %v1324, 0
      %1331 = vmatprep.subr.bf16.mxu0 0
      %1332 = vmatpush1.bf16.msra.mxu0 0
      %1333 = vmatprep.subr.bf16.mxu0 0
      %1334 = vmatpush1.bf16.msra.mxu0 0
      %1335 = vmatprep.subr.bf16.mxu0 0
      %1336 = vmatpush1.bf16.msra.mxu0 0
      %1337 = vmatprep.subr.bf16.mxu0 0
      %1338 = vmatpush1.bf16.msra.mxu0 0
      %1339 = vmatprep.subr.bf16.mxu0 0
      %1340 = vmatpush1.bf16.msra.mxu0 %v632
      %1341 = vmatprep.subr.bf16.mxu0 0
      %1342 = vmatpush1.bf16.msra.mxu0 %v631
      %1343 = vmatprep.subr.bf16.mxu0 0
      %1344 = vmatpush1.bf16.msra.mxu0 %v630
      %1345 = vmatprep.subr.bf16.mxu0 0
      %1346 = vmatpush1.bf16.msra.mxu0 %v629
      %1347 = vmatprep.subr.bf16.mxu0 0
      %1348 = vmatpush2.bf16.msra.mxu0 0
      %1349 = vmatprep.subr.bf16.mxu0 0
      %1350 = vmatpush2.bf16.msra.mxu0 0
      %1351 = vmatprep.subr.bf16.mxu0 0
      %1352 = vmatpush2.bf16.msra.mxu0 0
      %1353 = vmatprep.subr.bf16.mxu0 0
      %1354 = vmatpush2.bf16.msra.mxu0 0
      %1355 = vmatprep.subr.bf16.mxu0 0
      %1356 = vmatpush2.bf16.msra.mxu0 0
      %1357 = vmatprep.subr.bf16.mxu0 0
      %1358 = vmatpush2.bf16.msra.mxu0 0
      %1359 = vmatprep.subr.bf16.mxu0 0
      %1360 = vmatpush2.bf16.msra.mxu0 0
      %1361 = vmatprep.subr.bf16.mxu0 0
      %1362 = vmatpush2.bf16.msra.mxu0 0
      %1363 = vmatprep.mubr.bf16.mxu0 0
      %1364 = vmatmul.mubr.bf16.gmra.mxu0 %v1326
      %v1365 = vpop.f32.mrf.mxu0
      %v1366 = vadd.f32 0.0, %v1365
      %v1367 = vpop.f32.mrf.mxu0
      %v1368 = vpop.f32.mrf.mxu0
      %v1369 = vadd.f32 0.0, %v1368
      %v1370 = vpop.f32.mrf.mxu0
      %1371 = vmatprep.mubr.bf16.mxu0 0
      %1372 = vmatmul.mubr.bf16.gmra.mxu0 %v1329
      %v1373 = vpop.f32.mrf.mxu0
      %v1374 = vadd.f32 0.0, %v1373
      %v1375 = vpop.f32.mrf.mxu0
      %v1376 = vpop.f32.mrf.mxu0
      %v1377 = vadd.f32 0.0, %v1376
      %v1378 = vpop.f32.mrf.mxu0
      %1379 = vdwg.mxu0
      %v1380 = vadd.f32 %v478, %v1366
      %v1381 = vadd.f32 %v483, %v1369
      %v1382 = vadd.f32 %v488, %v1374
      %v1383 = vadd.f32 %v493, %v1377
      %v1384 = vmax.f32 %v1380, 0.0
      %v1385 = vmax.f32 %v1381, 0.0
      %v1386 = vmax.f32 %v1382, 0.0
      %v1387 = vmax.f32 %v1383, 0.0
      %v1388 = vpack.c.bf16 %v1385, %v1384
      %v1389 = vpack.c.bf16 %v1387, %v1386
      %v1391 = vsel %vm804, %v1388, 0
      %v1394 = vsel %vm804, %v1389, 0
      %1396 = vmatprep.subr.bf16.mxu0 0
      %1397 = vmatpush1.bf16.msra.mxu0 0
      %1398 = vmatprep.subr.bf16.mxu0 0
      %1399 = vmatpush1.bf16.msra.mxu0 0
      %1400 = vmatprep.subr.bf16.mxu0 0
      %1401 = vmatpush1.bf16.msra.mxu0 0
      %1402 = vmatprep.subr.bf16.mxu0 0
      %1403 = vmatpush1.bf16.msra.mxu0 0
      %1404 = vmatprep.subr.bf16.mxu0 0
      %1405 = vmatpush1.bf16.msra.mxu0 %v969
      %1406 = vmatprep.subr.bf16.mxu0 0
      %1407 = vmatpush1.bf16.msra.mxu0 %v968
      %1408 = vmatprep.subr.bf16.mxu0 0
      %1409 = vmatpush1.bf16.msra.mxu0 %v967
      %1410 = vmatprep.subr.bf16.mxu0 0
      %1411 = vmatpush1.bf16.msra.mxu0 %v966
      %1412 = vmatprep.subr.bf16.mxu0 0
      %1413 = vmatpush2.bf16.msra.mxu0 0
      %1414 = vmatprep.subr.bf16.mxu0 0
      %1415 = vmatpush2.bf16.msra.mxu0 0
      %1416 = vmatprep.subr.bf16.mxu0 0
      %1417 = vmatpush2.bf16.msra.mxu0 0
      %1418 = vmatprep.subr.bf16.mxu0 0
      %1419 = vmatpush2.bf16.msra.mxu0 0
      %1420 = vmatprep.subr.bf16.mxu0 0
      %1421 = vmatpush2.bf16.msra.mxu0 0
      %1422 = vmatprep.subr.bf16.mxu0 0
      %1423 = vmatpush2.bf16.msra.mxu0 0
      %1424 = vmatprep.subr.bf16.mxu0 0
      %1425 = vmatpush2.bf16.msra.mxu0 0
      %1426 = vmatprep.subr.bf16.mxu0 0
      %1427 = vmatpush2.bf16.msra.mxu0 0
      %1428 = vmatprep.mubr.bf16.mxu0 0
      %1429 = vmatmul.mubr.bf16.gmra.mxu0 %v1391
      %v1430 = vpop.f32.mrf.mxu0
      %v1431 = vadd.f32 %v948, %v1430
      %v1432 = vpop.f32.mrf.mxu0
      %v1433 = vpop.f32.mrf.mxu0
      %v1434 = vadd.f32 %v948, %v1433
      %v1435 = vpop.f32.mrf.mxu0
      %1436 = vmatprep.mubr.bf16.mxu0 0
      %1437 = vmatmul.mubr.bf16.gmra.mxu0 %v1394
      %v1438 = vpop.f32.mrf.mxu0
      %v1439 = vadd.f32 %v948, %v1438
      %v1440 = vpop.f32.mrf.mxu0
      %v1441 = vpop.f32.mrf.mxu0
      %v1442 = vadd.f32 %v948, %v1441
      %v1443 = vpop.f32.mrf.mxu0
      %1444 = vdwg.mxu0
      %vm1445 = vcmp.lt.s32.totalorder %v1265, 1872858888
      %vm1446 = vcmp.lt.s32.totalorder %v1280, 1872858888
      %vm1447 = vcmp.lt.s32.totalorder %v1295, 1872858888
      %vm1448 = vcmp.lt.s32.totalorder %v1310, 1872858888
      %v1449 = vmax.f32 %v1243, %v1431
      %v1450 = vmax.f32 %v1244, %v1434
      %v1451 = vmax.f32 %v1245, %v1439
      %v1452 = vmax.f32 %v1246, %v1442
      %v1453 = vsel %vm1445, 1, 0
      %v1454 = vsel %vm1446, 1, 0
      %v1455 = vsel %vm1447, 1, 0
      %v1456 = vsel %vm1448, 1, 0
      %vm1457 = vcmp.eq.s32.totalorder %v1453, 1
      %vm1458 = vcmp.eq.s32.totalorder %v1454, 1
      %vm1459 = vcmp.eq.s32.totalorder %v1455, 1
      %vm1460 = vcmp.eq.s32.totalorder %v1456, 1
      %v1461 = vsel %vm1457, %v1449, %v1243
      %v1462 = vsel %vm1458, %v1450, %v1244
      %v1463 = vsel %vm1459, %v1451, %v1245
      %v1464 = vsel %vm1460, %v1452, %v1246
      %v1465 = vsel %vm1311, 2147483647, %v1247
      %v1466 = vsel %vm1312, 2147483647, %v1248
      %v1467 = vsel %vm1313, 2147483647, %v1249
      %v1468 = vsel %vm1314, 2147483647, %v1250
      %v1469 = vsel %vm804, %v1465, 2147483647
      %v1470 = vand.u32 %v1469, 65535
      %v1471 = vshra.s32 %v1469, 16
      %v1472 = vcvt.s32.f32 %v1470
      %v1473 = vcvt.s32.f32 %v1471
      %1474 = vmin.xlane.f32.xlu0 %v1473
      %v1475 = vpop.xlane.xlu0 %1474
      %vm1476 = vcmp.eq.f32.partialorder %v1473, %v1475
      %v1477 = vsel %vm1476, %v1472, inf
      %1478 = vmin.xlane.f32.xlu0 %v1477
      %v1479 = vpop.xlane.xlu0 %1478
      %v1480 = vcvt.f32.s32 %v1479
      %v1481 = vcvt.f32.s32 %v1475
      %v1482 = vshll.u32 %v1481, 16
      %v1483 = vadd.s32 %v1482, %v1480
      %v1484 = vsel %vm804, %v1466, 2147483647
      %v1485 = vand.u32 %v1484, 65535
      %v1486 = vshra.s32 %v1484, 16
      %v1487 = vcvt.s32.f32 %v1485
      %v1488 = vcvt.s32.f32 %v1486
      %1489 = vmin.xlane.f32.xlu0 %v1488
      %v1490 = vpop.xlane.xlu0 %1489
      %vm1491 = vcmp.eq.f32.partialorder %v1488, %v1490
      %v1492 = vsel %vm1491, %v1487, inf
      %1493 = vmin.xlane.f32.xlu0 %v1492
      %v1494 = vpop.xlane.xlu0 %1493
      %v1495 = vcvt.f32.s32 %v1494
      %v1496 = vcvt.f32.s32 %v1490
      %v1497 = vshll.u32 %v1496, 16
      %v1498 = vadd.s32 %v1497, %v1495
      %v1499 = vsel %vm804, %v1467, 2147483647
      %v1500 = vand.u32 %v1499, 65535
      %v1501 = vshra.s32 %v1499, 16
      %v1502 = vcvt.s32.f32 %v1500
      %v1503 = vcvt.s32.f32 %v1501
      %1504 = vmin.xlane.f32.xlu0 %v1503
      %v1505 = vpop.xlane.xlu0 %1504
      %vm1506 = vcmp.eq.f32.partialorder %v1503, %v1505
      %v1507 = vsel %vm1506, %v1502, inf
      %1508 = vmin.xlane.f32.xlu0 %v1507
      %v1509 = vpop.xlane.xlu0 %1508
      %v1510 = vcvt.f32.s32 %v1509
      %v1511 = vcvt.f32.s32 %v1505
      %v1512 = vshll.u32 %v1511, 16
      %v1513 = vadd.s32 %v1512, %v1510
      %v1514 = vsel %vm804, %v1468, 2147483647
      %v1515 = vand.u32 %v1514, 65535
      %v1516 = vshra.s32 %v1514, 16
      %v1517 = vcvt.s32.f32 %v1515
      %v1518 = vcvt.s32.f32 %v1516
      %1519 = vmin.xlane.f32.xlu0 %v1518
      %v1520 = vpop.xlane.xlu0 %1519
      %vm1521 = vcmp.eq.f32.partialorder %v1518, %v1520
      %v1522 = vsel %vm1521, %v1517, inf
      %1523 = vmin.xlane.f32.xlu0 %v1522
      %v1524 = vpop.xlane.xlu0 %1523
      %v1525 = vcvt.f32.s32 %v1524
      %v1526 = vcvt.f32.s32 %v1520
      %v1527 = vshll.u32 %v1526, 16
      %v1528 = vadd.s32 %v1527, %v1525
      %vm1529 = vcmp.eq.s32.totalorder %v1465, %v1483
      %vm1530 = vcmp.eq.s32.totalorder %v1466, %v1498
      %vm1531 = vcmp.eq.s32.totalorder %v1467, %v1513
      %vm1532 = vcmp.eq.s32.totalorder %v1468, %v1528
      %v1533 = vsel %vm1529, 1, 0
      %v1534 = vsel %vm1530, 1, 0
      %v1535 = vsel %vm1531, 1, 0
      %v1536 = vsel %vm1532, 1, 0
      %v1537 = vcvt.s32.f32 %v1533
      %v1538 = vcvt.s32.f32 %v1534
      %v1539 = vcvt.s32.f32 %v1535
      %v1540 = vcvt.s32.f32 %v1536
      %v1541 = vpack.c.bf16 %v1538, %v1537
      %v1542 = vpack.c.bf16 %v1540, %v1539
      %v1544 = vsel %vm804, %v1541, 0
      %v1547 = vsel %vm804, %v1542, 0
      %1549 = vmatprep.subr.bf16.mxu0 0
      %1550 = vmatpush1.bf16.msra.mxu0 0
      %1551 = vmatprep.subr.bf16.mxu0 0
      %1552 = vmatpush1.bf16.msra.mxu0 0
      %1553 = vmatprep.subr.bf16.mxu0 0
      %1554 = vmatpush1.bf16.msra.mxu0 0
      %1555 = vmatprep.subr.bf16.mxu0 0
      %1556 = vmatpush1.bf16.msra.mxu0 0
      %1557 = vmatprep.subr.bf16.mxu0 0
      %1558 = vmatpush1.bf16.msra.mxu0 %v632
      %1559 = vmatprep.subr.bf16.mxu0 0
      %1560 = vmatpush1.bf16.msra.mxu0 %v631
      %1561 = vmatprep.subr.bf16.mxu0 0
      %1562 = vmatpush1.bf16.msra.mxu0 %v630
      %1563 = vmatprep.subr.bf16.mxu0 0
      %1564 = vmatpush1.bf16.msra.mxu0 %v629
      %1565 = vmatprep.subr.bf16.mxu0 0
      %1566 = vmatpush2.bf16.msra.mxu0 0
      %1567 = vmatprep.subr.bf16.mxu0 0
      %1568 = vmatpush2.bf16.msra.mxu0 0
      %1569 = vmatprep.subr.bf16.mxu0 0
      %1570 = vmatpush2.bf16.msra.mxu0 0
      %1571 = vmatprep.subr.bf16.mxu0 0
      %1572 = vmatpush2.bf16.msra.mxu0 0
      %1573 = vmatprep.subr.bf16.mxu0 0
      %1574 = vmatpush2.bf16.msra.mxu0 0
      %1575 = vmatprep.subr.bf16.mxu0 0
      %1576 = vmatpush2.bf16.msra.mxu0 0
      %1577 = vmatprep.subr.bf16.mxu0 0
      %1578 = vmatpush2.bf16.msra.mxu0 0
      %1579 = vmatprep.subr.bf16.mxu0 0
      %1580 = vmatpush2.bf16.msra.mxu0 0
      %1581 = vmatprep.mubr.bf16.mxu0 0
      %1582 = vmatmul.mubr.bf16.gmra.mxu0 %v1544
      %v1583 = vpop.f32.mrf.mxu0
      %v1584 = vadd.f32 0.0, %v1583
      %v1585 = vpop.f32.mrf.mxu0
      %v1586 = vpop.f32.mrf.mxu0
      %v1587 = vadd.f32 0.0, %v1586
      %v1588 = vpop.f32.mrf.mxu0
      %1589 = vmatprep.mubr.bf16.mxu0 0
      %1590 = vmatmul.mubr.bf16.gmra.mxu0 %v1547
      %v1591 = vpop.f32.mrf.mxu0
      %v1592 = vadd.f32 0.0, %v1591
      %v1593 = vpop.f32.mrf.mxu0
      %v1594 = vpop.f32.mrf.mxu0
      %v1595 = vadd.f32 0.0, %v1594
      %v1596 = vpop.f32.mrf.mxu0
      %1597 = vdwg.mxu0
      %v1598 = vadd.f32 %v478, %v1584
      %v1599 = vadd.f32 %v483, %v1587
      %v1600 = vadd.f32 %v488, %v1592
      %v1601 = vadd.f32 %v493, %v1595
      %v1602 = vmax.f32 %v1598, 0.0
      %v1603 = vmax.f32 %v1599, 0.0
      %v1604 = vmax.f32 %v1600, 0.0
      %v1605 = vmax.f32 %v1601, 0.0
      %v1606 = vpack.c.bf16 %v1603, %v1602
      %v1607 = vpack.c.bf16 %v1605, %v1604
      %v1609 = vsel %vm804, %v1606, 0
      %v1612 = vsel %vm804, %v1607, 0
      %1614 = vmatprep.subr.bf16.mxu0 0
      %1615 = vmatpush1.bf16.msra.mxu0 0
      %1616 = vmatprep.subr.bf16.mxu0 0
      %1617 = vmatpush1.bf16.msra.mxu0 0
      %1618 = vmatprep.subr.bf16.mxu0 0
      %1619 = vmatpush1.bf16.msra.mxu0 0
      %1620 = vmatprep.subr.bf16.mxu0 0
      %1621 = vmatpush1.bf16.msra.mxu0 0
      %1622 = vmatprep.subr.bf16.mxu0 0
      %1623 = vmatpush1.bf16.msra.mxu0 %v969
      %1624 = vmatprep.subr.bf16.mxu0 0
      %1625 = vmatpush1.bf16.msra.mxu0 %v968
      %1626 = vmatprep.subr.bf16.mxu0 0
      %1627 = vmatpush1.bf16.msra.mxu0 %v967
      %1628 = vmatprep.subr.bf16.mxu0 0
      %1629 = vmatpush1.bf16.msra.mxu0 %v966
      %1630 = vmatprep.subr.bf16.mxu0 0
      %1631 = vmatpush2.bf16.msra.mxu0 0
      %1632 = vmatprep.subr.bf16.mxu0 0
      %1633 = vmatpush2.bf16.msra.mxu0 0
      %1634 = vmatprep.subr.bf16.mxu0 0
      %1635 = vmatpush2.bf16.msra.mxu0 0
      %1636 = vmatprep.subr.bf16.mxu0 0
      %1637 = vmatpush2.bf16.msra.mxu0 0
      %1638 = vmatprep.subr.bf16.mxu0 0
      %1639 = vmatpush2.bf16.msra.mxu0 0
      %1640 = vmatprep.subr.bf16.mxu0 0
      %1641 = vmatpush2.bf16.msra.mxu0 0
      %1642 = vmatprep.subr.bf16.mxu0 0
      %1643 = vmatpush2.bf16.msra.mxu0 0
      %1644 = vmatprep.subr.bf16.mxu0 0
      %1645 = vmatpush2.bf16.msra.mxu0 0
      %1646 = vmatprep.mubr.bf16.mxu0 0
      %1647 = vmatmul.mubr.bf16.gmra.mxu0 %v1609
      %v1648 = vpop.f32.mrf.mxu0
      %v1649 = vadd.f32 %v948, %v1648
      %v1650 = vpop.f32.mrf.mxu0
      %v1651 = vpop.f32.mrf.mxu0
      %v1652 = vadd.f32 %v948, %v1651
      %v1653 = vpop.f32.mrf.mxu0
      %1654 = vmatprep.mubr.bf16.mxu0 0
      %1655 = vmatmul.mubr.bf16.gmra.mxu0 %v1612
      %v1656 = vpop.f32.mrf.mxu0
      %v1657 = vadd.f32 %v948, %v1656
      %v1658 = vpop.f32.mrf.mxu0
      %v1659 = vpop.f32.mrf.mxu0
      %v1660 = vadd.f32 %v948, %v1659
      %v1661 = vpop.f32.mrf.mxu0
      %1662 = vdwg.mxu0
      %vm1663 = vcmp.lt.s32.totalorder %v1483, 1872858888
      %vm1664 = vcmp.lt.s32.totalorder %v1498, 1872858888
      %vm1665 = vcmp.lt.s32.totalorder %v1513, 1872858888
      %vm1666 = vcmp.lt.s32.totalorder %v1528, 1872858888
      %v1667 = vmax.f32 %v1461, %v1649
      %v1668 = vmax.f32 %v1462, %v1652
      %v1669 = vmax.f32 %v1463, %v1657
      %v1670 = vmax.f32 %v1464, %v1660
      %v1671 = vsel %vm1663, 1, 0
      %v1672 = vsel %vm1664, 1, 0
      %v1673 = vsel %vm1665, 1, 0
      %v1674 = vsel %vm1666, 1, 0
      %vm1675 = vcmp.eq.s32.totalorder %v1671, 1
      %vm1676 = vcmp.eq.s32.totalorder %v1672, 1
      %vm1677 = vcmp.eq.s32.totalorder %v1673, 1
      %vm1678 = vcmp.eq.s32.totalorder %v1674, 1
      %v1679 = vsel %vm1675, %v1667, %v1461
      %v1680 = vsel %vm1676, %v1668, %v1462
      %v1681 = vsel %vm1677, %v1669, %v1463
      %v1682 = vsel %vm1678, %v1670, %v1464
      %1683 = vst.msk [vmem:[%s378] sm:$0xff] %vm804, %v1679
      %1684 = vst.msk [vmem:[%s378 + $0x8] sm:$0xff] %vm804, %v1680
      %1685 = vst.msk [vmem:[%s378 + $0x10] sm:$0xff] %vm804, %v1681
      %1686 = vst.msk [vmem:[%s378 + $0x18] sm:$0xff] %vm804, %v1682
      %s1687 = smul.u32 4, %s20
      %p1688 = scmp.lt.s32.totalorder %s1687, 7
      %s1689 = scalar_select %p1688, %s1687, 7
      %s1690 = smul.addr %s1689, 8
      %s1691 = scalar_lea.vmem %s9, %s1690
      // Predicated region
      $region57: #{dgcnn_forward.4} parent=55 // pred_check
        %p1692 = pneg %p242
      $region58: #{dgcnn_forward.4} parent=55 // pred_check_branch
        %1694 = sbr.rel (%p1692) target = $region60
      $region59: #{dgcnn_forward.4} parent=55 // pred_region
        %s1695 = smul.u32 4, %s20
      $region60: #{dgcnn_forward.4} parent=55 // pred_fallthru
        _
    $region56: #{dgcnn_forward.4} parent=5 // pred_fallthru
      _
    %p1696 = scmp.le.s32.totalorder 2, %s15
    // Predicated region
    $region61: #{dgcnn_forward.4} parent=5 // pred_check
      %p1697 = pneg %p1696
    $region62: #{dgcnn_forward.4} parent=5 // pred_check_branch
      %1699 = sbr.rel (%p1697) target = $region64
    $region63: #{dgcnn_forward.4} parent=5 // pred_region
      %s1700 = ssub.s32 %s15, 2
      // Predicated region
      $region65: #{dgcnn_forward.4} parent=63 // pred_check
        %p1701 = pneg %p248
      $region66: #{dgcnn_forward.4} parent=63 // pred_check_branch
        %1703 = sbr.rel (%p1701) target = $region68
      $region67: #{dgcnn_forward.4} parent=63 // pred_region
        %s1704 = smul.u32 4, %s21
        %p1705 = scmp.lt.s32.totalorder %s1704, 7
        %s1706 = scalar_select %p1705, %s1704, 7
        %s1707 = smul.addr %s1706, 8
        %s1708 = scalar_lea.vmem %s9, %s1707
      $region68: #{dgcnn_forward.4} parent=63 // pred_fallthru
        _
    $region64: #{dgcnn_forward.4} parent=5 // pred_fallthru
      _
  $region6: #{dgcnn_forward.4} parent=0 // loop_footer
    %s19 = sadd.s32 1, %s15
  $region7: #{dgcnn_forward.4} parent=0 // loop_footer_branch
    %14 = sbr.rel target = $region3
  $region8: #{dgcnn_forward.4} parent=0 // loop_exit
    _

// kernel: dgcnn_forward.7
$region0: #{dgcnn_forward.7}
  #allocation0 [shape = 'u32[]', space=smem, size = 0x4, offset = 0x4, fixed_abs, tag = 'smem constant byte address 0x4 - core index']
  #allocation1 [shape = 'u32[144,128]{1,0:T(1,128)}', space=vmem, size = 0x12000, scoped, tag = 'internal scratch']
  %s0 = inlined_call_operand.vmem [shape: f32[64,192], index: 0, kind: input, shape index: {}]
  %s1 = inlined_call_operand.vmem [shape: bf16[192,1024], index: 1, kind: input, shape index: {}]
  %s2 = inlined_call_operand.vmem [shape: f32[1,1024], index: 2, kind: input, shape index: {}]
  %s3 = inlined_call_operand.vmem [shape: bf16[1024,256], index: 3, kind: input, shape index: {}]
  %s4 = inlined_call_operand.vmem [shape: f32[1,256], index: 4, kind: input, shape index: {}]
  %s5 = inlined_call_operand.vmem [shape: bf16[256,128], index: 5, kind: input, shape index: {}]
  %s6 = inlined_call_operand.vmem [shape: f32[1,128], index: 6, kind: input, shape index: {}]
  %s7 = inlined_call_operand.vmem [shape: bf16[128,128], index: 7, kind: input, shape index: {}]
  %s8 = inlined_call_operand.vmem [shape: f32[1,128], index: 8, kind: input, shape index: {}]
  %s9 = inlined_call_operand.vmem [shape: f32[64,128], index: 9, kind: output, shape index: {}]
  %s10 = sld [smem:[#allocation0]]
  $region69: #{dgcnn_forward.7} parent=0
    _
  %s12 = ssub.s32 1, %s10
  %s13 = scalar_select 0, %s12, %s10
  loop: start=0, step=1, limit=4
  $region2: #{dgcnn_forward.7} parent=0 // loop_pre_header
    _
  $region3: #{dgcnn_forward.7} parent=0 // loop_header
    %s15 = sphi 0, %s19
    %p16 = scmp.ge.s32.totalorder %s15, 4
    %s25 = sphi 0, %s27
    %s28 = sphi 0, %s25
    %s29 = sphi 0, %s28
    %s45 = sphi 0, %s29
    %s49 = sphi 0, %s49
    %s51 = sphi 0, %s49
    %s52 = sphi 0, %s51
    %s66 = sphi 0, %s52
    %s70 = sphi 0, %s70
    %s72 = sphi 0, %s70
    %s73 = sphi 0, %s72
    %s87 = sphi 0, %s73
    %s91 = sphi 0, %s91
    %s93 = sphi 0, %s91
    %s94 = sphi 0, %s93
    %s108 = sphi 0, %s94
    %s112 = sphi 0, %s112
    %s114 = sphi 0, %s112
    %s115 = sphi 0, %s114
    %s129 = sphi 0, %s115
    %s133 = sphi 0, %s133
    %s135 = sphi 0, %s133
    %s136 = sphi 0, %s135
    %s150 = sphi 0, %s136
    %s154 = sphi 0, %s154
    %s156 = sphi 0, %s154
    %s157 = sphi 0, %s156
    %s171 = sphi 0, %s157
    %s175 = sphi 0, %s175
    %s177 = sphi 0, %s175
    %s178 = sphi 0, %s177
    %s192 = sphi 0, %s178
    %s196 = sphi 0, %s196
    %s198 = sphi 0, %s196
    %s199 = sphi 0, %s198
    %s213 = sphi 0, %s199
    %s219 = sphi 0, %s221
    %s222 = sphi 0, %s219
    %s223 = sphi 0, %s222
    %s239 = sphi 0, %s223
  $region4: #{dgcnn_forward.7} parent=0 // loop_header_branch
    %18 = sbr.rel (%p16) target = $region8
  $region5: #{dgcnn_forward.7} parent=0 // loop_body
    %s20 = ssub.s32 %s15, 1
    %s21 = ssub.s32 %s15, 2
    %s22 = sadd.s32 %s15, 1
    %s23 = ssub.s32 %s15, %s22
    %p24 = scmp.eq.s32.totalorder %s23, 0
    %s26 = sadd.s32 %s25, 1
    %s27 = scalar_select %p24, %s25, %s26
    %p30 = pneg %p24
    %p31 = scmp.eq.s32.totalorder %s15, 1
    %p32 = por %p30, %p31
    %p33 = scmp.ne.s32.totalorder %s25, %s28
    %p34 = scmp.eq.s32.totalorder %s15, 0
    %p35 = por %p33, %p34
    %p36 = scmp.ne.s32.totalorder %s25, %s28
    %p37 = scmp.eq.s32.totalorder %s20, 1
    %p38 = por %p36, %p37
    %p39 = scmp.ne.s32.totalorder %s28, %s29
    %p40 = scmp.eq.s32.totalorder %s20, 0
    %p41 = por %p39, %p40
    %p42 = scmp.ne.s32.totalorder %s28, %s29
    %p43 = scmp.eq.s32.totalorder %s21, 1
    %p44 = por %p42, %p43
    %p46 = scmp.ne.s32.totalorder %s29, %s45
    %p47 = scmp.eq.s32.totalorder %s21, 0
    %p48 = por %p46, %p47
    %s50 = sadd.s32 %s49, 1
    %p53 = scmp.eq.s32.totalorder %s15, 1
    %p54 = scmp.ne.s32.totalorder %s49, %s51
    %p55 = scmp.eq.s32.totalorder %s15, 0
    %p56 = por %p54, %p55
    %p57 = scmp.ne.s32.totalorder %s49, %s51
    %p58 = scmp.eq.s32.totalorder %s20, 1
    %p59 = por %p57, %p58
    %p60 = scmp.ne.s32.totalorder %s51, %s52
    %p61 = scmp.eq.s32.totalorder %s20, 0
    %p62 = por %p60, %p61
    %p63 = scmp.ne.s32.totalorder %s51, %s52
    %p64 = scmp.eq.s32.totalorder %s21, 1
    %p65 = por %p63, %p64
    %p67 = scmp.ne.s32.totalorder %s52, %s66
    %p68 = scmp.eq.s32.totalorder %s21, 0
    %p69 = por %p67, %p68
    %s71 = sadd.s32 %s70, 1
    %p74 = scmp.eq.s32.totalorder %s15, 1
    %p75 = scmp.ne.s32.totalorder %s70, %s72
    %p76 = scmp.eq.s32.totalorder %s15, 0
    %p77 = por %p75, %p76
    %p78 = scmp.ne.s32.totalorder %s70, %s72
    %p79 = scmp.eq.s32.totalorder %s20, 1
    %p80 = por %p78, %p79
    %p81 = scmp.ne.s32.totalorder %s72, %s73
    %p82 = scmp.eq.s32.totalorder %s20, 0
    %p83 = por %p81, %p82
    %p84 = scmp.ne.s32.totalorder %s72, %s73
    %p85 = scmp.eq.s32.totalorder %s21, 1
    %p86 = por %p84, %p85
    %p88 = scmp.ne.s32.totalorder %s73, %s87
    %p89 = scmp.eq.s32.totalorder %s21, 0
    %p90 = por %p88, %p89
    %s92 = sadd.s32 %s91, 1
    %p95 = scmp.eq.s32.totalorder %s15, 1
    %p96 = scmp.ne.s32.totalorder %s91, %s93
    %p97 = scmp.eq.s32.totalorder %s15, 0
    %p98 = por %p96, %p97
    %p99 = scmp.ne.s32.totalorder %s91, %s93
    %p100 = scmp.eq.s32.totalorder %s20, 1
    %p101 = por %p99, %p100
    %p102 = scmp.ne.s32.totalorder %s93, %s94
    %p103 = scmp.eq.s32.totalorder %s20, 0
    %p104 = por %p102, %p103
    %p105 = scmp.ne.s32.totalorder %s93, %s94
    %p106 = scmp.eq.s32.totalorder %s21, 1
    %p107 = por %p105, %p106
    %p109 = scmp.ne.s32.totalorder %s94, %s108
    %p110 = scmp.eq.s32.totalorder %s21, 0
    %p111 = por %p109, %p110
    %s113 = sadd.s32 %s112, 1
    %p116 = scmp.eq.s32.totalorder %s15, 1
    %p117 = scmp.ne.s32.totalorder %s112, %s114
    %p118 = scmp.eq.s32.totalorder %s15, 0
    %p119 = por %p117, %p118
    %p120 = scmp.ne.s32.totalorder %s112, %s114
    %p121 = scmp.eq.s32.totalorder %s20, 1
    %p122 = por %p120, %p121
    %p123 = scmp.ne.s32.totalorder %s114, %s115
    %p124 = scmp.eq.s32.totalorder %s20, 0
    %p125 = por %p123, %p124
    %p126 = scmp.ne.s32.totalorder %s114, %s115
    %p127 = scmp.eq.s32.totalorder %s21, 1
    %p128 = por %p126, %p127
    %p130 = scmp.ne.s32.totalorder %s115, %s129
    %p131 = scmp.eq.s32.totalorder %s21, 0
    %p132 = por %p130, %p131
    %s134 = sadd.s32 %s133, 1
    %p137 = scmp.eq.s32.totalorder %s15, 1
    %p138 = scmp.ne.s32.totalorder %s133, %s135
    %p139 = scmp.eq.s32.totalorder %s15, 0
    %p140 = por %p138, %p139
    %p141 = scmp.ne.s32.totalorder %s133, %s135
    %p142 = scmp.eq.s32.totalorder %s20, 1
    %p143 = por %p141, %p142
    %p144 = scmp.ne.s32.totalorder %s135, %s136
    %p145 = scmp.eq.s32.totalorder %s20, 0
    %p146 = por %p144, %p145
    %p147 = scmp.ne.s32.totalorder %s135, %s136
    %p148 = scmp.eq.s32.totalorder %s21, 1
    %p149 = por %p147, %p148
    %p151 = scmp.ne.s32.totalorder %s136, %s150
    %p152 = scmp.eq.s32.totalorder %s21, 0
    %p153 = por %p151, %p152
    %s155 = sadd.s32 %s154, 1
    %p158 = scmp.eq.s32.totalorder %s15, 1
    %p159 = scmp.ne.s32.totalorder %s154, %s156
    %p160 = scmp.eq.s32.totalorder %s15, 0
    %p161 = por %p159, %p160
    %p162 = scmp.ne.s32.totalorder %s154, %s156
    %p163 = scmp.eq.s32.totalorder %s20, 1
    %p164 = por %p162, %p163
    %p165 = scmp.ne.s32.totalorder %s156, %s157
    %p166 = scmp.eq.s32.totalorder %s20, 0
    %p167 = por %p165, %p166
    %p168 = scmp.ne.s32.totalorder %s156, %s157
    %p169 = scmp.eq.s32.totalorder %s21, 1
    %p170 = por %p168, %p169
    %p172 = scmp.ne.s32.totalorder %s157, %s171
    %p173 = scmp.eq.s32.totalorder %s21, 0
    %p174 = por %p172, %p173
    %s176 = sadd.s32 %s175, 1
    %p179 = scmp.eq.s32.totalorder %s15, 1
    %p180 = scmp.ne.s32.totalorder %s175, %s177
    %p181 = scmp.eq.s32.totalorder %s15, 0
    %p182 = por %p180, %p181
    %p183 = scmp.ne.s32.totalorder %s175, %s177
    %p184 = scmp.eq.s32.totalorder %s20, 1
    %p185 = por %p183, %p184
    %p186 = scmp.ne.s32.totalorder %s177, %s178
    %p187 = scmp.eq.s32.totalorder %s20, 0
    %p188 = por %p186, %p187
    %p189 = scmp.ne.s32.totalorder %s177, %s178
    %p190 = scmp.eq.s32.totalorder %s21, 1
    %p191 = por %p189, %p190
    %p193 = scmp.ne.s32.totalorder %s178, %s192
    %p194 = scmp.eq.s32.totalorder %s21, 0
    %p195 = por %p193, %p194
    %s197 = sadd.s32 %s196, 1
    %p200 = scmp.eq.s32.totalorder %s15, 1
    %p201 = scmp.ne.s32.totalorder %s196, %s198
    %p202 = scmp.eq.s32.totalorder %s15, 0
    %p203 = por %p201, %p202
    %p204 = scmp.ne.s32.totalorder %s196, %s198
    %p205 = scmp.eq.s32.totalorder %s20, 1
    %p206 = por %p204, %p205
    %p207 = scmp.ne.s32.totalorder %s198, %s199
    %p208 = scmp.eq.s32.totalorder %s20, 0
    %p209 = por %p207, %p208
    %p210 = scmp.ne.s32.totalorder %s198, %s199
    %p211 = scmp.eq.s32.totalorder %s21, 1
    %p212 = por %p210, %p211
    %p214 = scmp.ne.s32.totalorder %s199, %s213
    %p215 = scmp.eq.s32.totalorder %s21, 0
    %p216 = por %p214, %p215
    %s217 = ssub.s32 %s15, %s22
    %p218 = scmp.eq.s32.totalorder %s217, 0
    %s220 = sadd.s32 %s219, 1
    %s221 = scalar_select %p218, %s219, %s220
    %p224 = pneg %p218
    %p225 = scmp.eq.s32.totalorder %s15, 1
    %p226 = por %p224, %p225
    %p227 = scmp.ne.s32.totalorder %s219, %s222
    %p228 = scmp.eq.s32.totalorder %s15, 0
    %p229 = por %p227, %p228
    %p230 = scmp.ne.s32.totalorder %s219, %s222
    %p231 = scmp.eq.s32.totalorder %s20, 1
    %p232 = por %p230, %p231
    %p233 = scmp.ne.s32.totalorder %s222, %s223
    %p234 = scmp.eq.s32.totalorder %s20, 0
    %p235 = por %p233, %p234
    %p236 = scmp.ne.s32.totalorder %s222, %s223
    %p237 = scmp.eq.s32.totalorder %s21, 1
    %p238 = por %p236, %p237
    %p240 = scmp.ne.s32.totalorder %s223, %s239
    %p241 = scmp.eq.s32.totalorder %s21, 0
    %p242 = por %p240, %p241
    %p243 = scmp.le.s32.totalorder 1, %s15
    %p244 = scmp.lt.s32.totalorder %s15, 3
    %p245 = pnand %p243, %p244
    %p246 = pneg %p245
    // Predicated region
    $region9: #{dgcnn_forward.7} parent=5 // pred_check
      _
    $region10: #{dgcnn_forward.7} parent=5 // pred_check_branch
      %248 = sbr.rel (%p245) target = $region12
    $region11: #{dgcnn_forward.7} parent=5 // pred_region
      %s249 = ssub.s32 %s15, 1
      // Predicated region
      $region13: #{dgcnn_forward.7} parent=11 // pred_check
        %p250 = pneg %p62
      $region14: #{dgcnn_forward.7} parent=11 // pred_check_branch
        %252 = sbr.rel (%p250) target = $region16
      $region15: #{dgcnn_forward.7} parent=11 // pred_region
        _
      $region16: #{dgcnn_forward.7} parent=11 // pred_fallthru
        _
      // Predicated region
      $region17: #{dgcnn_forward.7} parent=11 // pred_check
        %p253 = pneg %p83
      $region18: #{dgcnn_forward.7} parent=11 // pred_check_branch
        %255 = sbr.rel (%p253) target = $region20
      $region19: #{dgcnn_forward.7} parent=11 // pred_region
        _
      $region20: #{dgcnn_forward.7} parent=11 // pred_fallthru
        _
      // Predicated region
      $region21: #{dgcnn_forward.7} parent=11 // pred_check
        %p256 = pneg %p104
      $region22: #{dgcnn_forward.7} parent=11 // pred_check_branch
        %258 = sbr.rel (%p256) target = $region24
      $region23: #{dgcnn_forward.7} parent=11 // pred_region
        _
      $region24: #{dgcnn_forward.7} parent=11 // pred_fallthru
        _
      // Predicated region
      $region25: #{dgcnn_forward.7} parent=11 // pred_check
        %p259 = pneg %p125
      $region26: #{dgcnn_forward.7} parent=11 // pred_check_branch
        %261 = sbr.rel (%p259) target = $region28
      $region27: #{dgcnn_forward.7} parent=11 // pred_region
        _
      $region28: #{dgcnn_forward.7} parent=11 // pred_fallthru
        _
      // Predicated region
      $region29: #{dgcnn_forward.7} parent=11 // pred_check
        %p262 = pneg %p146
      $region30: #{dgcnn_forward.7} parent=11 // pred_check_branch
        %264 = sbr.rel (%p262) target = $region32
      $region31: #{dgcnn_forward.7} parent=11 // pred_region
        _
      $region32: #{dgcnn_forward.7} parent=11 // pred_fallthru
        _
      // Predicated region
      $region33: #{dgcnn_forward.7} parent=11 // pred_check
        %p265 = pneg %p167
      $region34: #{dgcnn_forward.7} parent=11 // pred_check_branch
        %267 = sbr.rel (%p265) target = $region36
      $region35: #{dgcnn_forward.7} parent=11 // pred_region
        _
      $region36: #{dgcnn_forward.7} parent=11 // pred_fallthru
        _
      // Predicated region
      $region37: #{dgcnn_forward.7} parent=11 // pred_check
        %p268 = pneg %p188
      $region38: #{dgcnn_forward.7} parent=11 // pred_check_branch
        %270 = sbr.rel (%p268) target = $region40
      $region39: #{dgcnn_forward.7} parent=11 // pred_region
        _
      $region40: #{dgcnn_forward.7} parent=11 // pred_fallthru
        _
      // Predicated region
      $region41: #{dgcnn_forward.7} parent=11 // pred_check
        %p271 = pneg %p209
      $region42: #{dgcnn_forward.7} parent=11 // pred_check_branch
        %273 = sbr.rel (%p271) target = $region44
      $region43: #{dgcnn_forward.7} parent=11 // pred_region
        _
      $region44: #{dgcnn_forward.7} parent=11 // pred_fallthru
        _
    $region12: #{dgcnn_forward.7} parent=5 // pred_fallthru
      _
    %p274 = scmp.lt.s32.totalorder %s15, 2
    // Predicated region
    $region45: #{dgcnn_forward.7} parent=5 // pred_check
      %p275 = pneg %p274
    $region46: #{dgcnn_forward.7} parent=5 // pred_check_branch
      %277 = sbr.rel (%p275) target = $region48
    $region47: #{dgcnn_forward.7} parent=5 // pred_region
      // Predicated region
      $region49: #{dgcnn_forward.7} parent=47 // pred_check
        %p278 = pneg %p35
      $region50: #{dgcnn_forward.7} parent=47 // pred_check_branch
        %280 = sbr.rel (%p278) target = $region52
      $region51: #{dgcnn_forward.7} parent=47 // pred_region
        %s281 = smul.u32 4, %s15
        %p282 = scmp.lt.s32.totalorder %s281, 7
        %s283 = scalar_select %p282, %s281, 7
        %s284 = smul.addr %s283, 2
        %s285 = smul.addr %s284, 8
        %s286 = scalar_lea.vmem %s0, %s285
        %s287 = smul.u32 4, %s15
      $region52: #{dgcnn_forward.7} parent=47 // pred_fallthru
        _
    $region48: #{dgcnn_forward.7} parent=5 // pred_fallthru
      _
    %p288 = scmp.le.s32.totalorder 1, %s15
    %p289 = scmp.lt.s32.totalorder %s15, 3
    %p290 = pnand %p288, %p289
    %p291 = pneg %p290
    // Predicated region
    $region53: #{dgcnn_forward.7} parent=5 // pred_check
      _
    $region54: #{dgcnn_forward.7} parent=5 // pred_check_branch
      %293 = sbr.rel (%p290) target = $region56
    $region55: #{dgcnn_forward.7} parent=5 // pred_region
      %s294 = ssub.s32 %s15, 1
      %s295 = smul.u32 4, %s20
      %p296 = scmp.lt.s32.totalorder %s295, 7
      %s297 = scalar_select %p296, %s295, 7
      %s298 = smul.addr %s297, 2
      %s299 = smul.addr %s298, 8
      %s300 = scalar_lea.vmem %s0, %s299
      %p301 = pneg %p41
      %p302 = pneg %p38
      %p303 = pneg %p62
      %p304 = pneg %p59
      %p305 = pneg %p83
      %p306 = pneg %p80
      %p307 = pneg %p104
      %p308 = pneg %p101
      %p309 = pneg %p125
      %p310 = pneg %p122
      %p311 = pneg %p146
      %p312 = pneg %p143
      %p313 = pneg %p167
      %p314 = pneg %p164
      %p315 = pneg %p188
      %p316 = pneg %p185
      %p317 = pneg %p209
      %p318 = pneg %p206
      %p319 = pneg %p235
      %p320 = pneg %p232
      %s321 = smul.u32 4, %s20
      %p322 = scmp.lt.s32.totalorder %s321, 7
      %s323 = scalar_select %p322, %s321, 7
      %s324 = smul.addr %s323, 8
      %s325 = scalar_lea.vmem %s9, %s324
      %s326 = smul.u32 4, %s20
      %p327 = scmp.lt.s32.totalorder %s326, 7
      %s328 = scalar_select %p327, %s326, 7
      %s329 = smul.addr %s328, 2
      %s330 = smul.addr %s329, 8
      %s331 = scalar_lea.vmem %s0, %s330
      %s332 = smul.u32 4, %s20
      %s333 = smul.u32 4, %s20
      %p334 = scmp.lt.s32.totalorder %s333, 7
      %s335 = scalar_select %p334, %s333, 7
      %s336 = smul.addr %s335, 8
      %s337 = scalar_lea.vmem %s9, %s336
      %s338 = smul.u32 4, %s20
      %v340 = vld [vmem:[%s331] sm:$0xff]
      %v341 = vld [vmem:[%s331 + $0x8] sm:$0xff]
      %v342 = vld [vmem:[%s331 + $0x10] sm:$0xff]
      %v343 = vld [vmem:[%s331 + $0x18] sm:$0xff]
      %v344 = vld [vmem:[%s331 + $0x20] sm:$0xff]
      %v345 = vld [vmem:[%s331 + $0x28] sm:$0xff]
      %v346 = vld [vmem:[%s331 + $0x30] sm:$0xff]
      %v347 = vld [vmem:[%s331 + $0x38] sm:$0xff]
      %v348 = vpack.c.bf16 %v342, %v340
      %v349 = vpack.c.bf16 %v343, %v341
      %v350 = vpack.c.bf16 %v346, %v344
      %v351 = vpack.c.bf16 %v347, %v345
      %v352 = vld [vmem:[%s1] sm:$0xff]
      %v353 = vld [vmem:[%s1 + $0x8] sm:$0xff]
      %v354 = vld [vmem:[%s1 + $0x10] sm:$0xff]
      %v355 = vld [vmem:[%s1 + $0x18] sm:$0xff]
      %v356 = vld [vmem:[%s1 + $0x20] sm:$0xff]
      %v357 = vld [vmem:[%s1 + $0x28] sm:$0xff]
      %v358 = vld [vmem:[%s1 + $0x30] sm:$0xff]
      %v359 = vld [vmem:[%s1 + $0x38] sm:$0xff]
      %v360 = vld [vmem:[%s1 + $0x40] sm:$0xff]
      %v361 = vld [vmem:[%s1 + $0x48] sm:$0xff]
      %v362 = vld [vmem:[%s1 + $0x50] sm:$0xff]
      %v363 = vld [vmem:[%s1 + $0x58] sm:$0xff]
      %v364 = vld [vmem:[%s1 + $0x60] sm:$0xff]
      %v365 = vld [vmem:[%s1 + $0x68] sm:$0xff]
      %v366 = vld [vmem:[%s1 + $0x70] sm:$0xff]
      %v367 = vld [vmem:[%s1 + $0x78] sm:$0xff]
      %v368 = vld [vmem:[%s1 + $0x80] sm:$0xff]
      %v369 = vld [vmem:[%s1 + $0x88] sm:$0xff]
      %v370 = vld [vmem:[%s1 + $0x90] sm:$0xff]
      %v371 = vld [vmem:[%s1 + $0x98] sm:$0xff]
      %v372 = vld [vmem:[%s1 + $0xa0] sm:$0xff]
      %v373 = vld [vmem:[%s1 + $0xa8] sm:$0xff]
      %v374 = vld [vmem:[%s1 + $0xb0] sm:$0xff]
      %v375 = vld [vmem:[%s1 + $0xb8] sm:$0xff]
      %v376 = vld [vmem:[%s1 + $0xc0] sm:$0xff]
      %v377 = vld [vmem:[%s1 + $0xc8] sm:$0xff]
      %v378 = vld [vmem:[%s1 + $0xd0] sm:$0xff]
      %v379 = vld [vmem:[%s1 + $0xd8] sm:$0xff]
      %v380 = vld [vmem:[%s1 + $0xe0] sm:$0xff]
      %v381 = vld [vmem:[%s1 + $0xe8] sm:$0xff]
      %v382 = vld [vmem:[%s1 + $0xf0] sm:$0xff]
      %v383 = vld [vmem:[%s1 + $0xf8] sm:$0xff]
      %v384 = vld [vmem:[%s1 + $0x100] sm:$0xff]
      %v385 = vld [vmem:[%s1 + $0x108] sm:$0xff]
      %v386 = vld [vmem:[%s1 + $0x110] sm:$0xff]
      %v387 = vld [vmem:[%s1 + $0x118] sm:$0xff]
      %v388 = vld [vmem:[%s1 + $0x120] sm:$0xff]
      %v389 = vld [vmem:[%s1 + $0x128] sm:$0xff]
      %v390 = vld [vmem:[%s1 + $0x130] sm:$0xff]
      %v391 = vld [vmem:[%s1 + $0x138] sm:$0xff]
      %v392 = vld [vmem:[%s1 + $0x140] sm:$0xff]
      %v393 = vld [vmem:[%s1 + $0x148] sm:$0xff]
      %v394 = vld [vmem:[%s1 + $0x150] sm:$0xff]
      %v395 = vld [vmem:[%s1 + $0x158] sm:$0xff]
      %v396 = vld [vmem:[%s1 + $0x160] sm:$0xff]
      %v397 = vld [vmem:[%s1 + $0x168] sm:$0xff]
      %v398 = vld [vmem:[%s1 + $0x170] sm:$0xff]
      %v399 = vld [vmem:[%s1 + $0x178] sm:$0xff]
      %v400 = vld [vmem:[%s1 + $0x180] sm:$0xff]
      %v401 = vld [vmem:[%s1 + $0x188] sm:$0xff]
      %v402 = vld [vmem:[%s1 + $0x190] sm:$0xff]
      %v403 = vld [vmem:[%s1 + $0x198] sm:$0xff]
      %v404 = vld [vmem:[%s1 + $0x1a0] sm:$0xff]
      %v405 = vld [vmem:[%s1 + $0x1a8] sm:$0xff]
      %v406 = vld [vmem:[%s1 + $0x1b0] sm:$0xff]
      %v407 = vld [vmem:[%s1 + $0x1b8] sm:$0xff]
      %v408 = vld [vmem:[%s1 + $0x1c0] sm:$0xff]
      %v409 = vld [vmem:[%s1 + $0x1c8] sm:$0xff]
      %v410 = vld [vmem:[%s1 + $0x1d0] sm:$0xff]
      %v411 = vld [vmem:[%s1 + $0x1d8] sm:$0xff]
      %v412 = vld [vmem:[%s1 + $0x1e0] sm:$0xff]
      %v413 = vld [vmem:[%s1 + $0x1e8] sm:$0xff]
      %v414 = vld [vmem:[%s1 + $0x1f0] sm:$0xff]
      %v415 = vld [vmem:[%s1 + $0x1f8] sm:$0xff]
      %v416 = vld [vmem:[%s1 + $0x200] sm:$0xff]
      %v417 = vld [vmem:[%s1 + $0x208] sm:$0xff]
      %v418 = vld [vmem:[%s1 + $0x210] sm:$0xff]
      %v419 = vld [vmem:[%s1 + $0x218] sm:$0xff]
      %v420 = vld [vmem:[%s1 + $0x220] sm:$0xff]
      %v421 = vld [vmem:[%s1 + $0x228] sm:$0xff]
      %v422 = vld [vmem:[%s1 + $0x230] sm:$0xff]
      %v423 = vld [vmem:[%s1 + $0x238] sm:$0xff]
      %v424 = vld [vmem:[%s1 + $0x240] sm:$0xff]
      %v425 = vld [vmem:[%s1 + $0x248] sm:$0xff]
      %v426 = vld [vmem:[%s1 + $0x250] sm:$0xff]
      %v427 = vld [vmem:[%s1 + $0x258] sm:$0xff]
      %v428 = vld [vmem:[%s1 + $0x260] sm:$0xff]
      %v429 = vld [vmem:[%s1 + $0x268] sm:$0xff]
      %v430 = vld [vmem:[%s1 + $0x270] sm:$0xff]
      %v431 = vld [vmem:[%s1 + $0x278] sm:$0xff]
      %v432 = vld [vmem:[%s1 + $0x280] sm:$0xff]
      %v433 = vld [vmem:[%s1 + $0x288] sm:$0xff]
      %v434 = vld [vmem:[%s1 + $0x290] sm:$0xff]
      %v435 = vld [vmem:[%s1 + $0x298] sm:$0xff]
      %v436 = vld [vmem:[%s1 + $0x2a0] sm:$0xff]
      %v437 = vld [vmem:[%s1 + $0x2a8] sm:$0xff]
      %v438 = vld [vmem:[%s1 + $0x2b0] sm:$0xff]
      %v439 = vld [vmem:[%s1 + $0x2b8] sm:$0xff]
      %v440 = vld [vmem:[%s1 + $0x2c0] sm:$0xff]
      %v441 = vld [vmem:[%s1 + $0x2c8] sm:$0xff]
      %v442 = vld [vmem:[%s1 + $0x2d0] sm:$0xff]
      %v443 = vld [vmem:[%s1 + $0x2d8] sm:$0xff]
      %v444 = vld [vmem:[%s1 + $0x2e0] sm:$0xff]
      %v445 = vld [vmem:[%s1 + $0x2e8] sm:$0xff]
      %v446 = vld [vmem:[%s1 + $0x2f0] sm:$0xff]
      %v447 = vld [vmem:[%s1 + $0x2f8] sm:$0xff]
      %v448 = vld [vmem:[%s2] sm:$0xff]
      %v450 = vlaneseq
      %v451 = vshrl.u32 %v450, 7
      %v452 = vsub.s32 0, %v451
      %v453 = vrot.slane %v448, %v452
      %v454 = vlaneseq
      %v455 = vshrl.u32 %v454, 7
      %v456 = vsub.s32 1, %v455
      %v457 = vrot.slane %v448, %v456
      %v458 = vlaneseq
      %v459 = vshrl.u32 %v458, 7
      %v460 = vsub.s32 2, %v459
      %v461 = vrot.slane %v448, %v460
      %v462 = vlaneseq
      %v463 = vshrl.u32 %v462, 7
      %v464 = vsub.s32 3, %v463
      %v465 = vrot.slane %v448, %v464
      %v466 = vlaneseq
      %v467 = vshrl.u32 %v466, 7
      %v468 = vsub.s32 4, %v467
      %v469 = vrot.slane %v448, %v468
      %v470 = vlaneseq
      %v471 = vshrl.u32 %v470, 7
      %v472 = vsub.s32 5, %v471
      %v473 = vrot.slane %v448, %v472
      %v474 = vlaneseq
      %v475 = vshrl.u32 %v474, 7
      %v476 = vsub.s32 6, %v475
      %v477 = vrot.slane %v448, %v476
      %v478 = vlaneseq
      %v479 = vshrl.u32 %v478, 7
      %v480 = vsub.s32 7, %v479
      %v481 = vrot.slane %v448, %v480
      %v586 = vunpack.c.l.b16 %v352
      %v587 = vunpack.c.h.b16 %v352
      %v588 = vunpack.c.l.b16 %v353
      %v589 = vunpack.c.h.b16 %v353
      %v590 = vunpack.c.l.b16 %v354
      %v591 = vunpack.c.h.b16 %v354
      %v592 = vunpack.c.l.b16 %v355
      %v593 = vunpack.c.h.b16 %v355
      %v594 = vunpack.c.l.b16 %v356
      %v595 = vunpack.c.h.b16 %v356
      %v596 = vunpack.c.l.b16 %v357
      %v597 = vunpack.c.h.b16 %v357
      %v598 = vunpack.c.l.b16 %v358
      %v599 = vunpack.c.h.b16 %v358
      %v600 = vunpack.c.l.b16 %v359
      %v601 = vunpack.c.h.b16 %v359
      %v602 = vunpack.c.l.b16 %v360
      %v603 = vunpack.c.h.b16 %v360
      %v604 = vunpack.c.l.b16 %v361
      %v605 = vunpack.c.h.b16 %v361
      %v606 = vunpack.c.l.b16 %v362
      %v607 = vunpack.c.h.b16 %v362
      %v608 = vunpack.c.l.b16 %v363
      %v609 = vunpack.c.h.b16 %v363
      %v610 = vunpack.c.l.b16 %v364
      %v611 = vunpack.c.h.b16 %v364
      %v612 = vunpack.c.l.b16 %v365
      %v613 = vunpack.c.h.b16 %v365
      %v614 = vunpack.c.l.b16 %v366
      %v615 = vunpack.c.h.b16 %v366
      %v616 = vunpack.c.l.b16 %v367
      %v617 = vunpack.c.h.b16 %v367
      %v618 = vunpack.c.l.b16 %v368
      %v619 = vunpack.c.h.b16 %v368
      %v620 = vunpack.c.l.b16 %v369
      %v621 = vunpack.c.h.b16 %v369
      %v622 = vunpack.c.l.b16 %v370
      %v623 = vunpack.c.h.b16 %v370
      %v624 = vunpack.c.l.b16 %v371
      %v625 = vunpack.c.h.b16 %v371
      %v626 = vunpack.c.l.b16 %v372
      %v627 = vunpack.c.h.b16 %v372
      %v628 = vunpack.c.l.b16 %v373
      %v629 = vunpack.c.h.b16 %v373
      %v630 = vunpack.c.l.b16 %v374
      %v631 = vunpack.c.h.b16 %v374
      %v632 = vunpack.c.l.b16 %v375
      %v633 = vunpack.c.h.b16 %v375
      %v634 = vunpack.c.l.b16 %v376
      %v635 = vunpack.c.h.b16 %v376
      %v636 = vunpack.c.l.b16 %v377
      %v637 = vunpack.c.h.b16 %v377
      %v638 = vunpack.c.l.b16 %v378
      %v639 = vunpack.c.h.b16 %v378
      %v640 = vunpack.c.l.b16 %v379
      %v641 = vunpack.c.h.b16 %v379
      %v642 = vunpack.c.l.b16 %v380
      %v643 = vunpack.c.h.b16 %v380
      %v644 = vunpack.c.l.b16 %v381
      %v645 = vunpack.c.h.b16 %v381
      %v646 = vunpack.c.l.b16 %v382
      %v647 = vunpack.c.h.b16 %v382
      %v648 = vunpack.c.l.b16 %v383
      %v649 = vunpack.c.h.b16 %v383
      %v650 = vunpack.c.l.b16 %v384
      %v651 = vunpack.c.h.b16 %v384
      %v652 = vunpack.c.l.b16 %v385
      %v653 = vunpack.c.h.b16 %v385
      %v654 = vunpack.c.l.b16 %v386
      %v655 = vunpack.c.h.b16 %v386
      %v656 = vunpack.c.l.b16 %v387
      %v657 = vunpack.c.h.b16 %v387
      %v658 = vunpack.c.l.b16 %v388
      %v659 = vunpack.c.h.b16 %v388
      %v660 = vunpack.c.l.b16 %v389
      %v661 = vunpack.c.h.b16 %v389
      %v662 = vunpack.c.l.b16 %v390
      %v663 = vunpack.c.h.b16 %v390
      %v664 = vunpack.c.l.b16 %v391
      %v665 = vunpack.c.h.b16 %v391
      %v666 = vunpack.c.l.b16 %v392
      %v667 = vunpack.c.h.b16 %v392
      %v668 = vunpack.c.l.b16 %v393
      %v669 = vunpack.c.h.b16 %v393
      %v670 = vunpack.c.l.b16 %v394
      %v671 = vunpack.c.h.b16 %v394
      %v672 = vunpack.c.l.b16 %v395
      %v673 = vunpack.c.h.b16 %v395
      %v674 = vunpack.c.l.b16 %v396
      %v675 = vunpack.c.h.b16 %v396
      %v676 = vunpack.c.l.b16 %v397
      %v677 = vunpack.c.h.b16 %v397
      %v678 = vunpack.c.l.b16 %v398
      %v679 = vunpack.c.h.b16 %v398
      %v680 = vunpack.c.l.b16 %v399
      %v681 = vunpack.c.h.b16 %v399
      %v682 = vunpack.c.l.b16 %v400
      %v683 = vunpack.c.h.b16 %v400
      %v684 = vunpack.c.l.b16 %v401
      %v685 = vunpack.c.h.b16 %v401
      %v686 = vunpack.c.l.b16 %v402
      %v687 = vunpack.c.h.b16 %v402
      %v688 = vunpack.c.l.b16 %v403
      %v689 = vunpack.c.h.b16 %v403
      %v690 = vunpack.c.l.b16 %v404
      %v691 = vunpack.c.h.b16 %v404
      %v692 = vunpack.c.l.b16 %v405
      %v693 = vunpack.c.h.b16 %v405
      %v694 = vunpack.c.l.b16 %v406
      %v695 = vunpack.c.h.b16 %v406
      %v696 = vunpack.c.l.b16 %v407
      %v697 = vunpack.c.h.b16 %v407
      %v698 = vunpack.c.l.b16 %v408
      %v699 = vunpack.c.h.b16 %v408
      %v700 = vunpack.c.l.b16 %v409
      %v701 = vunpack.c.h.b16 %v409
      %v702 = vunpack.c.l.b16 %v410
      %v703 = vunpack.c.h.b16 %v410
      %v704 = vunpack.c.l.b16 %v411
      %v705 = vunpack.c.h.b16 %v411
      %v706 = vunpack.c.l.b16 %v412
      %v707 = vunpack.c.h.b16 %v412
      %v708 = vunpack.c.l.b16 %v413
      %v709 = vunpack.c.h.b16 %v413
      %v710 = vunpack.c.l.b16 %v414
      %v711 = vunpack.c.h.b16 %v414
      %v712 = vunpack.c.l.b16 %v415
      %v713 = vunpack.c.h.b16 %v415
      %v714 = vunpack.c.l.b16 %v416
      %v715 = vunpack.c.h.b16 %v416
      %v716 = vunpack.c.l.b16 %v417
      %v717 = vunpack.c.h.b16 %v417
      %v718 = vunpack.c.l.b16 %v418
      %v719 = vunpack.c.h.b16 %v418
      %v720 = vunpack.c.l.b16 %v419
      %v721 = vunpack.c.h.b16 %v419
      %v722 = vunpack.c.l.b16 %v420
      %v723 = vunpack.c.h.b16 %v420
      %v724 = vunpack.c.l.b16 %v421
      %v725 = vunpack.c.h.b16 %v421
      %v726 = vunpack.c.l.b16 %v422
      %v727 = vunpack.c.h.b16 %v422
      %v728 = vunpack.c.l.b16 %v423
      %v729 = vunpack.c.h.b16 %v423
      %v730 = vunpack.c.l.b16 %v424
      %v731 = vunpack.c.h.b16 %v424
      %v732 = vunpack.c.l.b16 %v425
      %v733 = vunpack.c.h.b16 %v425
      %v734 = vunpack.c.l.b16 %v426
      %v735 = vunpack.c.h.b16 %v426
      %v736 = vunpack.c.l.b16 %v427
      %v737 = vunpack.c.h.b16 %v427
      %v738 = vunpack.c.l.b16 %v428
      %v739 = vunpack.c.h.b16 %v428
      %v740 = vunpack.c.l.b16 %v429
      %v741 = vunpack.c.h.b16 %v429
      %v742 = vunpack.c.l.b16 %v430
      %v743 = vunpack.c.h.b16 %v430
      %v744 = vunpack.c.l.b16 %v431
      %v745 = vunpack.c.h.b16 %v431
      %v746 = vunpack.c.l.b16 %v432
      %v747 = vunpack.c.h.b16 %v432
      %v748 = vunpack.c.l.b16 %v433
      %v749 = vunpack.c.h.b16 %v433
      %v750 = vunpack.c.l.b16 %v434
      %v751 = vunpack.c.h.b16 %v434
      %v752 = vunpack.c.l.b16 %v435
      %v753 = vunpack.c.h.b16 %v435
      %v754 = vunpack.c.l.b16 %v436
      %v755 = vunpack.c.h.b16 %v436
      %v756 = vunpack.c.l.b16 %v437
      %v757 = vunpack.c.h.b16 %v437
      %v758 = vunpack.c.l.b16 %v438
      %v759 = vunpack.c.h.b16 %v438
      %v760 = vunpack.c.l.b16 %v439
      %v761 = vunpack.c.h.b16 %v439
      %v762 = vunpack.c.l.b16 %v440
      %v763 = vunpack.c.h.b16 %v440
      %v764 = vunpack.c.l.b16 %v441
      %v765 = vunpack.c.h.b16 %v441
      %v766 = vunpack.c.l.b16 %v442
      %v767 = vunpack.c.h.b16 %v442
      %v768 = vunpack.c.l.b16 %v443
      %v769 = vunpack.c.h.b16 %v443
      %v770 = vunpack.c.l.b16 %v444
      %v771 = vunpack.c.h.b16 %v444
      %v772 = vunpack.c.l.b16 %v445
      %v773 = vunpack.c.h.b16 %v445
      %v774 = vunpack.c.l.b16 %v446
      %v775 = vunpack.c.h.b16 %v446
      %v776 = vunpack.c.l.b16 %v447
      %v777 = vunpack.c.h.b16 %v447
      %v778 = vpack.c.b16 %v594, %v586
      %v779 = vpack.c.b16 %v595, %v587
      %v780 = vpack.c.b16 %v596, %v588
      %v781 = vpack.c.b16 %v597, %v589
      %v782 = vpack.c.b16 %v598, %v590
      %v783 = vpack.c.b16 %v599, %v591
      %v784 = vpack.c.b16 %v600, %v592
      %v785 = vpack.c.b16 %v601, %v593
      %v786 = vpack.c.b16 %v610, %v602
      %v787 = vpack.c.b16 %v611, %v603
      %v788 = vpack.c.b16 %v612, %v604
      %v789 = vpack.c.b16 %v613, %v605
      %v790 = vpack.c.b16 %v614, %v606
      %v791 = vpack.c.b16 %v615, %v607
      %v792 = vpack.c.b16 %v616, %v608
      %v793 = vpack.c.b16 %v617, %v609
      %v794 = vpack.c.b16 %v626, %v618
      %v795 = vpack.c.b16 %v627, %v619
      %v796 = vpack.c.b16 %v628, %v620
      %v797 = vpack.c.b16 %v629, %v621
      %v798 = vpack.c.b16 %v630, %v622
      %v799 = vpack.c.b16 %v631, %v623
      %v800 = vpack.c.b16 %v632, %v624
      %v801 = vpack.c.b16 %v633, %v625
      %v802 = vpack.c.b16 %v642, %v634
      %v803 = vpack.c.b16 %v643, %v635
      %v804 = vpack.c.b16 %v644, %v636
      %v805 = vpack.c.b16 %v645, %v637
      %v806 = vpack.c.b16 %v646, %v638
      %v807 = vpack.c.b16 %v647, %v639
      %v808 = vpack.c.b16 %v648, %v640
      %v809 = vpack.c.b16 %v649, %v641
      %v810 = vpack.c.b16 %v658, %v650
      %v811 = vpack.c.b16 %v659, %v651
      %v812 = vpack.c.b16 %v660, %v652
      %v813 = vpack.c.b16 %v661, %v653
      %v814 = vpack.c.b16 %v662, %v654
      %v815 = vpack.c.b16 %v663, %v655
      %v816 = vpack.c.b16 %v664, %v656
      %v817 = vpack.c.b16 %v665, %v657
      %v818 = vpack.c.b16 %v674, %v666
      %v819 = vpack.c.b16 %v675, %v667
      %v820 = vpack.c.b16 %v676, %v668
      %v821 = vpack.c.b16 %v677, %v669
      %v822 = vpack.c.b16 %v678, %v670
      %v823 = vpack.c.b16 %v679, %v671
      %v824 = vpack.c.b16 %v680, %v672
      %v825 = vpack.c.b16 %v681, %v673
      %v826 = vpack.c.b16 %v690, %v682
      %v827 = vpack.c.b16 %v691, %v683
      %v828 = vpack.c.b16 %v692, %v684
      %v829 = vpack.c.b16 %v693, %v685
      %v830 = vpack.c.b16 %v694, %v686
      %v831 = vpack.c.b16 %v695, %v687
      %v832 = vpack.c.b16 %v696, %v688
      %v833 = vpack.c.b16 %v697, %v689
      %v834 = vpack.c.b16 %v706, %v698
      %v835 = vpack.c.b16 %v707, %v699
      %v836 = vpack.c.b16 %v708, %v700
      %v837 = vpack.c.b16 %v709, %v701
      %v838 = vpack.c.b16 %v710, %v702
      %v839 = vpack.c.b16 %v711, %v703
      %v840 = vpack.c.b16 %v712, %v704
      %v841 = vpack.c.b16 %v713, %v705
      %v842 = vpack.c.b16 %v722, %v714
      %v843 = vpack.c.b16 %v723, %v715
      %v844 = vpack.c.b16 %v724, %v716
      %v845 = vpack.c.b16 %v725, %v717
      %v846 = vpack.c.b16 %v726, %v718
      %v847 = vpack.c.b16 %v727, %v719
      %v848 = vpack.c.b16 %v728, %v720
      %v849 = vpack.c.b16 %v729, %v721
      %v850 = vpack.c.b16 %v738, %v730
      %v851 = vpack.c.b16 %v739, %v731
      %v852 = vpack.c.b16 %v740, %v732
      %v853 = vpack.c.b16 %v741, %v733
      %v854 = vpack.c.b16 %v742, %v734
      %v855 = vpack.c.b16 %v743, %v735
      %v856 = vpack.c.b16 %v744, %v736
      %v857 = vpack.c.b16 %v745, %v737
      %v858 = vpack.c.b16 %v754, %v746
      %v859 = vpack.c.b16 %v755, %v747
      %v860 = vpack.c.b16 %v756, %v748
      %v861 = vpack.c.b16 %v757, %v749
      %v862 = vpack.c.b16 %v758, %v750
      %v863 = vpack.c.b16 %v759, %v751
      %v864 = vpack.c.b16 %v760, %v752
      %v865 = vpack.c.b16 %v761, %v753
      %v866 = vpack.c.b16 %v770, %v762
      %v867 = vpack.c.b16 %v771, %v763
      %v868 = vpack.c.b16 %v772, %v764
      %v869 = vpack.c.b16 %v773, %v765
      %v870 = vpack.c.b16 %v774, %v766
      %v871 = vpack.c.b16 %v775, %v767
      %v872 = vpack.c.b16 %v776, %v768
      %v873 = vpack.c.b16 %v777, %v769
      %vm970 = vcmask 523264
      %v972 = vsel %vm970, %v349, 0
      %v975 = vsel %vm970, %v351, 0
      %977 = vmatprep.subr.bf16.mxu0 %v835
      %978 = vmatpush1.bf16.msra.mxu0 %v834
      %979 = vmatprep.subr.bf16.mxu0 %v827
      %980 = vmatpush1.bf16.msra.mxu0 %v826
      %981 = vmatprep.subr.bf16.mxu0 %v819
      %982 = vmatpush1.bf16.msra.mxu0 %v818
      %983 = vmatprep.subr.bf16.mxu0 %v811
      %984 = vmatpush1.bf16.msra.mxu0 %v810
      %985 = vmatprep.subr.bf16.mxu0 %v803
      %986 = vmatpush1.bf16.msra.mxu0 %v802
      %987 = vmatprep.subr.bf16.mxu0 %v795
      %988 = vmatpush1.bf16.msra.mxu0 %v794
      %989 = vmatprep.subr.bf16.mxu0 %v787
      %990 = vmatpush1.bf16.msra.mxu0 %v786
      %991 = vmatprep.subr.bf16.mxu0 %v779
      %992 = vmatpush1.bf16.msra.mxu0 %v778
      %993 = vmatprep.subr.bf16.mxu0 0
      %994 = vmatpush2.bf16.msra.mxu0 0
      %995 = vmatprep.subr.bf16.mxu0 0
      %996 = vmatpush2.bf16.msra.mxu0 0
      %997 = vmatprep.subr.bf16.mxu0 0
      %998 = vmatpush2.bf16.msra.mxu0 0
      %999 = vmatprep.subr.bf16.mxu0 0
      %1000 = vmatpush2.bf16.msra.mxu0 0
      %1001 = vmatprep.subr.bf16.mxu0 %v867
      %1002 = vmatpush2.bf16.msra.mxu0 %v866
      %1003 = vmatprep.subr.bf16.mxu0 %v859
      %1004 = vmatpush2.bf16.msra.mxu0 %v858
      %1005 = vmatprep.subr.bf16.mxu0 %v851
      %1006 = vmatpush2.bf16.msra.mxu0 %v850
      %1007 = vmatprep.subr.bf16.mxu0 %v843
      %1008 = vmatpush2.bf16.msra.mxu0 %v842
      %1009 = vmatprep.mubr.bf16.mxu0 %v972
      %1010 = vmatmul.mubr.bf16.gmra.mxu0 %v348
      %v1011 = vpop.f32.mrf.mxu0
      %v1012 = vadd.f32 %v453, %v1011
      %v1013 = vpop.f32.mrf.mxu0
      %v1014 = vadd.f32 %v457, %v1013
      %v1015 = vpop.f32.mrf.mxu0
      %v1016 = vadd.f32 %v453, %v1015
      %v1017 = vpop.f32.mrf.mxu0
      %v1018 = vadd.f32 %v457, %v1017
      %1019 = vmatprep.mubr.bf16.mxu0 %v975
      %1020 = vmatmul.mubr.bf16.gmra.mxu0 %v350
      %v1021 = vpop.f32.mrf.mxu0
      %v1022 = vadd.f32 %v453, %v1021
      %v1023 = vpop.f32.mrf.mxu0
      %v1024 = vadd.f32 %v457, %v1023
      %v1025 = vpop.f32.mrf.mxu0
      %v1026 = vadd.f32 %v453, %v1025
      %v1027 = vpop.f32.mrf.mxu0
      %v1028 = vadd.f32 %v457, %v1027
      %1029 = vdwg.mxu0
      %1030 = vmatprep.subr.bf16.mxu0 %v837
      %1031 = vmatpush1.bf16.msra.mxu0 %v836
      %1032 = vmatprep.subr.bf16.mxu0 %v829
      %1033 = vmatpush1.bf16.msra.mxu0 %v828
      %1034 = vmatprep.subr.bf16.mxu0 %v821
      %1035 = vmatpush1.bf16.msra.mxu0 %v820
      %1036 = vmatprep.subr.bf16.mxu0 %v813
      %1037 = vmatpush1.bf16.msra.mxu0 %v812
      %1038 = vmatprep.subr.bf16.mxu0 %v805
      %1039 = vmatpush1.bf16.msra.mxu0 %v804
      %1040 = vmatprep.subr.bf16.mxu0 %v797
      %1041 = vmatpush1.bf16.msra.mxu0 %v796
      %1042 = vmatprep.subr.bf16.mxu0 %v789
      %1043 = vmatpush1.bf16.msra.mxu0 %v788
      %1044 = vmatprep.subr.bf16.mxu0 %v781
      %1045 = vmatpush1.bf16.msra.mxu0 %v780
      %1046 = vmatprep.subr.bf16.mxu0 0
      %1047 = vmatpush2.bf16.msra.mxu0 0
      %1048 = vmatprep.subr.bf16.mxu0 0
      %1049 = vmatpush2.bf16.msra.mxu0 0
      %1050 = vmatprep.subr.bf16.mxu0 0
      %1051 = vmatpush2.bf16.msra.mxu0 0
      %1052 = vmatprep.subr.bf16.mxu0 0
      %1053 = vmatpush2.bf16.msra.mxu0 0
      %1054 = vmatprep.subr.bf16.mxu0 %v869
      %1055 = vmatpush2.bf16.msra.mxu0 %v868
      %1056 = vmatprep.subr.bf16.mxu0 %v861
      %1057 = vmatpush2.bf16.msra.mxu0 %v860
      %1058 = vmatprep.subr.bf16.mxu0 %v853
      %1059 = vmatpush2.bf16.msra.mxu0 %v852
      %1060 = vmatprep.subr.bf16.mxu0 %v845
      %1061 = vmatpush2.bf16.msra.mxu0 %v844
      %1062 = vmatprep.mubr.bf16.mxu0 %v972
      %1063 = vmatmul.mubr.bf16.gmra.mxu0 %v348
      %v1064 = vpop.f32.mrf.mxu0
      %v1065 = vadd.f32 %v461, %v1064
      %v1066 = vpop.f32.mrf.mxu0
      %v1067 = vadd.f32 %v465, %v1066
      %v1068 = vpop.f32.mrf.mxu0
      %v1069 = vadd.f32 %v461, %v1068
      %v1070 = vpop.f32.mrf.mxu0
      %v1071 = vadd.f32 %v465, %v1070
      %1072 = vmatprep.mubr.bf16.mxu0 %v975
      %1073 = vmatmul.mubr.bf16.gmra.mxu0 %v350
      %v1074 = vpop.f32.mrf.mxu0
      %v1075 = vadd.f32 %v461, %v1074
      %v1076 = vpop.f32.mrf.mxu0
      %v1077 = vadd.f32 %v465, %v1076
      %v1078 = vpop.f32.mrf.mxu0
      %v1079 = vadd.f32 %v461, %v1078
      %v1080 = vpop.f32.mrf.mxu0
      %v1081 = vadd.f32 %v465, %v1080
      %1082 = vdwg.mxu0
      %1083 = vmatprep.subr.bf16.mxu0 %v839
      %1084 = vmatpush1.bf16.msra.mxu0 %v838
      %1085 = vmatprep.subr.bf16.mxu0 %v831
      %1086 = vmatpush1.bf16.msra.mxu0 %v830
      %1087 = vmatprep.subr.bf16.mxu0 %v823
      %1088 = vmatpush1.bf16.msra.mxu0 %v822
      %1089 = vmatprep.subr.bf16.mxu0 %v815
      %1090 = vmatpush1.bf16.msra.mxu0 %v814
      %1091 = vmatprep.subr.bf16.mxu0 %v807
      %1092 = vmatpush1.bf16.msra.mxu0 %v806
      %1093 = vmatprep.subr.bf16.mxu0 %v799
      %1094 = vmatpush1.bf16.msra.mxu0 %v798
      %1095 = vmatprep.subr.bf16.mxu0 %v791
      %1096 = vmatpush1.bf16.msra.mxu0 %v790
      %1097 = vmatprep.subr.bf16.mxu0 %v783
      %1098 = vmatpush1.bf16.msra.mxu0 %v782
      %1099 = vmatprep.subr.bf16.mxu0 0
      %1100 = vmatpush2.bf16.msra.mxu0 0
      %1101 = vmatprep.subr.bf16.mxu0 0
      %1102 = vmatpush2.bf16.msra.mxu0 0
      %1103 = vmatprep.subr.bf16.mxu0 0
      %1104 = vmatpush2.bf16.msra.mxu0 0
      %1105 = vmatprep.subr.bf16.mxu0 0
      %1106 = vmatpush2.bf16.msra.mxu0 0
      %1107 = vmatprep.subr.bf16.mxu0 %v871
      %1108 = vmatpush2.bf16.msra.mxu0 %v870
      %1109 = vmatprep.subr.bf16.mxu0 %v863
      %1110 = vmatpush2.bf16.msra.mxu0 %v862
      %1111 = vmatprep.subr.bf16.mxu0 %v855
      %1112 = vmatpush2.bf16.msra.mxu0 %v854
      %1113 = vmatprep.subr.bf16.mxu0 %v847
      %1114 = vmatpush2.bf16.msra.mxu0 %v846
      %1115 = vmatprep.mubr.bf16.mxu0 %v972
      %1116 = vmatmul.mubr.bf16.gmra.mxu0 %v348
      %v1117 = vpop.f32.mrf.mxu0
      %v1118 = vadd.f32 %v469, %v1117
      %v1119 = vpop.f32.mrf.mxu0
      %v1120 = vadd.f32 %v473, %v1119
      %v1121 = vpop.f32.mrf.mxu0
      %v1122 = vadd.f32 %v469, %v1121
      %v1123 = vpop.f32.mrf.mxu0
      %v1124 = vadd.f32 %v473, %v1123
      %1125 = vmatprep.mubr.bf16.mxu0 %v975
      %1126 = vmatmul.mubr.bf16.gmra.mxu0 %v350
      %v1127 = vpop.f32.mrf.mxu0
      %v1128 = vadd.f32 %v469, %v1127
      %v1129 = vpop.f32.mrf.mxu0
      %v1130 = vadd.f32 %v473, %v1129
      %v1131 = vpop.f32.mrf.mxu0
      %v1132 = vadd.f32 %v469, %v1131
      %v1133 = vpop.f32.mrf.mxu0
      %v1134 = vadd.f32 %v473, %v1133
      %1135 = vdwg.mxu0
      %1136 = vmatprep.subr.bf16.mxu0 %v841
      %1137 = vmatpush1.bf16.msra.mxu0 %v840
      %1138 = vmatprep.subr.bf16.mxu0 %v833
      %1139 = vmatpush1.bf16.msra.mxu0 %v832
      %1140 = vmatprep.subr.bf16.mxu0 %v825
      %1141 = vmatpush1.bf16.msra.mxu0 %v824
      %1142 = vmatprep.subr.bf16.mxu0 %v817
      %1143 = vmatpush1.bf16.msra.mxu0 %v816
      %1144 = vmatprep.subr.bf16.mxu0 %v809
      %1145 = vmatpush1.bf16.msra.mxu0 %v808
      %1146 = vmatprep.subr.bf16.mxu0 %v801
      %1147 = vmatpush1.bf16.msra.mxu0 %v800
      %1148 = vmatprep.subr.bf16.mxu0 %v793
      %1149 = vmatpush1.bf16.msra.mxu0 %v792
      %1150 = vmatprep.subr.bf16.mxu0 %v785
      %1151 = vmatpush1.bf16.msra.mxu0 %v784
      %1152 = vmatprep.subr.bf16.mxu0 0
      %1153 = vmatpush2.bf16.msra.mxu0 0
      %1154 = vmatprep.subr.bf16.mxu0 0
      %1155 = vmatpush2.bf16.msra.mxu0 0
      %1156 = vmatprep.subr.bf16.mxu0 0
      %1157 = vmatpush2.bf16.msra.mxu0 0
      %1158 = vmatprep.subr.bf16.mxu0 0
      %1159 = vmatpush2.bf16.msra.mxu0 0
      %1160 = vmatprep.subr.bf16.mxu0 %v873
      %1161 = vmatpush2.bf16.msra.mxu0 %v872
      %1162 = vmatprep.subr.bf16.mxu0 %v865
      %1163 = vmatpush2.bf16.msra.mxu0 %v864
      %1164 = vmatprep.subr.bf16.mxu0 %v857
      %1165 = vmatpush2.bf16.msra.mxu0 %v856
      %1166 = vmatprep.subr.bf16.mxu0 %v849
      %1167 = vmatpush2.bf16.msra.mxu0 %v848
      %1168 = vmatprep.mubr.bf16.mxu0 %v972
      %1169 = vmatmul.mubr.bf16.gmra.mxu0 %v348
      %v1170 = vpop.f32.mrf.mxu0
      %v1171 = vadd.f32 %v477, %v1170
      %v1172 = vpop.f32.mrf.mxu0
      %v1173 = vadd.f32 %v481, %v1172
      %v1174 = vpop.f32.mrf.mxu0
      %v1175 = vadd.f32 %v477, %v1174
      %v1176 = vpop.f32.mrf.mxu0
      %v1177 = vadd.f32 %v481, %v1176
      %1178 = vmatprep.mubr.bf16.mxu0 %v975
      %1179 = vmatmul.mubr.bf16.gmra.mxu0 %v350
      %v1180 = vpop.f32.mrf.mxu0
      %v1181 = vadd.f32 %v477, %v1180
      %v1182 = vpop.f32.mrf.mxu0
      %v1183 = vadd.f32 %v481, %v1182
      %v1184 = vpop.f32.mrf.mxu0
      %v1185 = vadd.f32 %v477, %v1184
      %v1186 = vpop.f32.mrf.mxu0
      %v1187 = vadd.f32 %v481, %v1186
      %1188 = vdwg.mxu0
      %v1189 = vmax.f32 %v1012, 0.0
      %v1190 = vmax.f32 %v1014, 0.0
      %v1191 = vmax.f32 %v1065, 0.0
      %v1192 = vmax.f32 %v1067, 0.0
      %v1193 = vmax.f32 %v1118, 0.0
      %v1194 = vmax.f32 %v1120, 0.0
      %v1195 = vmax.f32 %v1171, 0.0
      %v1196 = vmax.f32 %v1173, 0.0
      %v1197 = vmax.f32 %v1016, 0.0
      %v1198 = vmax.f32 %v1018, 0.0
      %v1199 = vmax.f32 %v1069, 0.0
      %v1200 = vmax.f32 %v1071, 0.0
      %v1201 = vmax.f32 %v1122, 0.0
      %v1202 = vmax.f32 %v1124, 0.0
      %v1203 = vmax.f32 %v1175, 0.0
      %v1204 = vmax.f32 %v1177, 0.0
      %v1205 = vmax.f32 %v1022, 0.0
      %v1206 = vmax.f32 %v1024, 0.0
      %v1207 = vmax.f32 %v1075, 0.0
      %v1208 = vmax.f32 %v1077, 0.0
      %v1209 = vmax.f32 %v1128, 0.0
      %v1210 = vmax.f32 %v1130, 0.0
      %v1211 = vmax.f32 %v1181, 0.0
      %v1212 = vmax.f32 %v1183, 0.0
      %v1213 = vmax.f32 %v1026, 0.0
      %v1214 = vmax.f32 %v1028, 0.0
      %v1215 = vmax.f32 %v1079, 0.0
      %v1216 = vmax.f32 %v1081, 0.0
      %v1217 = vmax.f32 %v1132, 0.0
      %v1218 = vmax.f32 %v1134, 0.0
      %v1219 = vmax.f32 %v1185, 0.0
      %v1220 = vmax.f32 %v1187, 0.0
      %v1221 = vpack.c.bf16 %v1197, %v1189
      %v1222 = vpack.c.bf16 %v1198, %v1190
      %v1223 = vpack.c.bf16 %v1199, %v1191
      %v1224 = vpack.c.bf16 %v1200, %v1192
      %v1225 = vpack.c.bf16 %v1201, %v1193
      %v1226 = vpack.c.bf16 %v1202, %v1194
      %v1227 = vpack.c.bf16 %v1203, %v1195
      %v1228 = vpack.c.bf16 %v1204, %v1196
      %v1229 = vpack.c.bf16 %v1213, %v1205
      %v1230 = vpack.c.bf16 %v1214, %v1206
      %v1231 = vpack.c.bf16 %v1215, %v1207
      %v1232 = vpack.c.bf16 %v1216, %v1208
      %v1233 = vpack.c.bf16 %v1217, %v1209
      %v1234 = vpack.c.bf16 %v1218, %v1210
      %v1235 = vpack.c.bf16 %v1219, %v1211
      %v1236 = vpack.c.bf16 %v1220, %v1212
      %v1237 = vld [vmem:[%s3] sm:$0xff]
      %v1238 = vld [vmem:[%s3 + $0x8] sm:$0xff]
      %v1239 = vld [vmem:[%s3 + $0x10] sm:$0xff]
      %v1240 = vld [vmem:[%s3 + $0x18] sm:$0xff]
      %v1241 = vld [vmem:[%s3 + $0x20] sm:$0xff]
      %v1242 = vld [vmem:[%s3 + $0x28] sm:$0xff]
      %v1243 = vld [vmem:[%s3 + $0x30] sm:$0xff]
      %v1244 = vld [vmem:[%s3 + $0x38] sm:$0xff]
      %v1245 = vld [vmem:[%s3 + $0x40] sm:$0xff]
      %v1246 = vld [vmem:[%s3 + $0x48] sm:$0xff]
      %v1247 = vld [vmem:[%s3 + $0x50] sm:$0xff]
      %v1248 = vld [vmem:[%s3 + $0x58] sm:$0xff]
      %v1249 = vld [vmem:[%s3 + $0x60] sm:$0xff]
      %v1250 = vld [vmem:[%s3 + $0x68] sm:$0xff]
      %v1251 = vld [vmem:[%s3 + $0x70] sm:$0xff]
      %v1252 = vld [vmem:[%s3 + $0x78] sm:$0xff]
      %v1253 = vld [vmem:[%s3 + $0x80] sm:$0xff]
      %v1254 = vld [vmem:[%s3 + $0x88] sm:$0xff]
      %v1255 = vld [vmem:[%s3 + $0x90] sm:$0xff]
      %v1256 = vld [vmem:[%s3 + $0x98] sm:$0xff]
      %v1257 = vld [vmem:[%s3 + $0xa0] sm:$0xff]
      %v1258 = vld [vmem:[%s3 + $0xa8] sm:$0xff]
      %v1259 = vld [vmem:[%s3 + $0xb0] sm:$0xff]
      %v1260 = vld [vmem:[%s3 + $0xb8] sm:$0xff]
      %v1261 = vld [vmem:[%s3 + $0xc0] sm:$0xff]
      %v1262 = vld [vmem:[%s3 + $0xc8] sm:$0xff]
      %v1263 = vld [vmem:[%s3 + $0xd0] sm:$0xff]
      %v1264 = vld [vmem:[%s3 + $0xd8] sm:$0xff]
      %v1265 = vld [vmem:[%s3 + $0xe0] sm:$0xff]
      %v1266 = vld [vmem:[%s3 + $0xe8] sm:$0xff]
      %v1267 = vld [vmem:[%s3 + $0xf0] sm:$0xff]
      %v1268 = vld [vmem:[%s3 + $0xf8] sm:$0xff]
      %v1269 = vld [vmem:[%s3 + $0x100] sm:$0xff]
      %v1270 = vld [vmem:[%s3 + $0x108] sm:$0xff]
      %v1271 = vld [vmem:[%s3 + $0x110] sm:$0xff]
      %v1272 = vld [vmem:[%s3 + $0x118] sm:$0xff]
      %v1273 = vld [vmem:[%s3 + $0x120] sm:$0xff]
      %v1274 = vld [vmem:[%s3 + $0x128] sm:$0xff]
      %v1275 = vld [vmem:[%s3 + $0x130] sm:$0xff]
      %v1276 = vld [vmem:[%s3 + $0x138] sm:$0xff]
      %v1277 = vld [vmem:[%s3 + $0x140] sm:$0xff]
      %v1278 = vld [vmem:[%s3 + $0x148] sm:$0xff]
      %v1279 = vld [vmem:[%s3 + $0x150] sm:$0xff]
      %v1280 = vld [vmem:[%s3 + $0x158] sm:$0xff]
      %v1281 = vld [vmem:[%s3 + $0x160] sm:$0xff]
      %v1282 = vld [vmem:[%s3 + $0x168] sm:$0xff]
      %v1283 = vld [vmem:[%s3 + $0x170] sm:$0xff]
      %v1284 = vld [vmem:[%s3 + $0x178] sm:$0xff]
      %v1285 = vld [vmem:[%s3 + $0x180] sm:$0xff]
      %v1286 = vld [vmem:[%s3 + $0x188] sm:$0xff]
      %v1287 = vld [vmem:[%s3 + $0x190] sm:$0xff]
      %v1288 = vld [vmem:[%s3 + $0x198] sm:$0xff]
      %v1289 = vld [vmem:[%s3 + $0x1a0] sm:$0xff]
      %v1290 = vld [vmem:[%s3 + $0x1a8] sm:$0xff]
      %v1291 = vld [vmem:[%s3 + $0x1b0] sm:$0xff]
      %v1292 = vld [vmem:[%s3 + $0x1b8] sm:$0xff]
      %v1293 = vld [vmem:[%s3 + $0x1c0] sm:$0xff]
      %v1294 = vld [vmem:[%s3 + $0x1c8] sm:$0xff]
      %v1295 = vld [vmem:[%s3 + $0x1d0] sm:$0xff]
      %v1296 = vld [vmem:[%s3 + $0x1d8] sm:$0xff]
      %v1297 = vld [vmem:[%s3 + $0x1e0] sm:$0xff]
      %v1298 = vld [vmem:[%s3 + $0x1e8] sm:$0xff]
      %v1299 = vld [vmem:[%s3 + $0x1f0] sm:$0xff]
      %v1300 = vld [vmem:[%s3 + $0x1f8] sm:$0xff]
      %v1301 = vld [vmem:[%s3 + $0x200] sm:$0xff]
      %v1302 = vld [vmem:[%s3 + $0x208] sm:$0xff]
      %v1303 = vld [vmem:[%s3 + $0x210] sm:$0xff]
      %v1304 = vld [vmem:[%s3 + $0x218] sm:$0xff]
      %v1305 = vld [vmem:[%s3 + $0x220] sm:$0xff]
      %v1306 = vld [vmem:[%s3 + $0x228] sm:$0xff]
      %v1307 = vld [vmem:[%s3 + $0x230] sm:$0xff]
      %v1308 = vld [vmem:[%s3 + $0x238] sm:$0xff]
      %v1309 = vld [vmem:[%s3 + $0x240] sm:$0xff]
      %v1310 = vld [vmem:[%s3 + $0x248] sm:$0xff]
      %v1311 = vld [vmem:[%s3 + $0x250] sm:$0xff]
      %v1312 = vld [vmem:[%s3 + $0x258] sm:$0xff]
      %v1313 = vld [vmem:[%s3 + $0x260] sm:$0xff]
      %v1314 = vld [vmem:[%s3 + $0x268] sm:$0xff]
      %v1315 = vld [vmem:[%s3 + $0x270] sm:$0xff]
      %v1316 = vld [vmem:[%s3 + $0x278] sm:$0xff]
      %v1317 = vld [vmem:[%s3 + $0x280] sm:$0xff]
      %v1318 = vld [vmem:[%s3 + $0x288] sm:$0xff]
      %v1319 = vld [vmem:[%s3 + $0x290] sm:$0xff]
      %v1320 = vld [vmem:[%s3 + $0x298] sm:$0xff]
      %v1321 = vld [vmem:[%s3 + $0x2a0] sm:$0xff]
      %v1322 = vld [vmem:[%s3 + $0x2a8] sm:$0xff]
      %v1323 = vld [vmem:[%s3 + $0x2b0] sm:$0xff]
      %v1324 = vld [vmem:[%s3 + $0x2b8] sm:$0xff]
      %v1325 = vld [vmem:[%s3 + $0x2c0] sm:$0xff]
      %v1326 = vld [vmem:[%s3 + $0x2c8] sm:$0xff]
      %v1327 = vld [vmem:[%s3 + $0x2d0] sm:$0xff]
      %v1328 = vld [vmem:[%s3 + $0x2d8] sm:$0xff]
      %v1329 = vld [vmem:[%s3 + $0x2e0] sm:$0xff]
      %v1330 = vld [vmem:[%s3 + $0x2e8] sm:$0xff]
      %v1331 = vld [vmem:[%s3 + $0x2f0] sm:$0xff]
      %v1332 = vld [vmem:[%s3 + $0x2f8] sm:$0xff]
      %v1333 = vld [vmem:[%s3 + $0x300] sm:$0xff]
      %v1334 = vld [vmem:[%s3 + $0x308] sm:$0xff]
      %v1335 = vld [vmem:[%s3 + $0x310] sm:$0xff]
      %v1336 = vld [vmem:[%s3 + $0x318] sm:$0xff]
      %v1337 = vld [vmem:[%s3 + $0x320] sm:$0xff]
      %v1338 = vld [vmem:[%s3 + $0x328] sm:$0xff]
      %v1339 = vld [vmem:[%s3 + $0x330] sm:$0xff]
      %v1340 = vld [vmem:[%s3 + $0x338] sm:$0xff]
      %v1341 = vld [vmem:[%s3 + $0x340] sm:$0xff]
      %v1342 = vld [vmem:[%s3 + $0x348] sm:$0xff]
      %v1343 = vld [vmem:[%s3 + $0x350] sm:$0xff]
      %v1344 = vld [vmem:[%s3 + $0x358] sm:$0xff]
      %v1345 = vld [vmem:[%s3 + $0x360] sm:$0xff]
      %v1346 = vld [vmem:[%s3 + $0x368] sm:$0xff]
      %v1347 = vld [vmem:[%s3 + $0x370] sm:$0xff]
      %v1348 = vld [vmem:[%s3 + $0x378] sm:$0xff]
      %v1349 = vld [vmem:[%s3 + $0x380] sm:$0xff]
      %v1350 = vld [vmem:[%s3 + $0x388] sm:$0xff]
      %v1351 = vld [vmem:[%s3 + $0x390] sm:$0xff]
      %v1352 = vld [vmem:[%s3 + $0x398] sm:$0xff]
      %v1353 = vld [vmem:[%s3 + $0x3a0] sm:$0xff]
      %v1354 = vld [vmem:[%s3 + $0x3a8] sm:$0xff]
      %v1355 = vld [vmem:[%s3 + $0x3b0] sm:$0xff]
      %v1356 = vld [vmem:[%s3 + $0x3b8] sm:$0xff]
      %v1357 = vld [vmem:[%s3 + $0x3c0] sm:$0xff]
      %v1358 = vld [vmem:[%s3 + $0x3c8] sm:$0xff]
      %v1359 = vld [vmem:[%s3 + $0x3d0] sm:$0xff]
      %v1360 = vld [vmem:[%s3 + $0x3d8] sm:$0xff]
      %v1361 = vld [vmem:[%s3 + $0x3e0] sm:$0xff]
      %v1362 = vld [vmem:[%s3 + $0x3e8] sm:$0xff]
      %v1363 = vld [vmem:[%s3 + $0x3f0] sm:$0xff]
      %v1364 = vld [vmem:[%s3 + $0x3f8] sm:$0xff]
      %v1365 = vld [vmem:[%s4] sm:$0x3]
      %v1367 = vlaneseq
      %v1368 = vshrl.u32 %v1367, 7
      %v1369 = vsub.s32 0, %v1368
      %v1370 = vrot.slane %v1365, %v1369
      %v1371 = vlaneseq
      %v1372 = vshrl.u32 %v1371, 7
      %v1373 = vsub.s32 1, %v1372
      %v1374 = vrot.slane %v1365, %v1373
      %v1505 = vunpack.c.l.b16 %v1237
      %v1506 = vunpack.c.h.b16 %v1237
      %v1507 = vunpack.c.l.b16 %v1238
      %v1508 = vunpack.c.h.b16 %v1238
      %v1509 = vunpack.c.l.b16 %v1239
      %v1510 = vunpack.c.h.b16 %v1239
      %v1511 = vunpack.c.l.b16 %v1240
      %v1512 = vunpack.c.h.b16 %v1240
      %v1513 = vunpack.c.l.b16 %v1241
      %v1514 = vunpack.c.h.b16 %v1241
      %v1515 = vunpack.c.l.b16 %v1242
      %v1516 = vunpack.c.h.b16 %v1242
      %v1517 = vunpack.c.l.b16 %v1243
      %v1518 = vunpack.c.h.b16 %v1243
      %v1519 = vunpack.c.l.b16 %v1244
      %v1520 = vunpack.c.h.b16 %v1244
      %v1521 = vunpack.c.l.b16 %v1245
      %v1522 = vunpack.c.h.b16 %v1245
      %v1523 = vunpack.c.l.b16 %v1246
      %v1524 = vunpack.c.h.b16 %v1246
      %v1525 = vunpack.c.l.b16 %v1247
      %v1526 = vunpack.c.h.b16 %v1247
      %v1527 = vunpack.c.l.b16 %v1248
      %v1528 = vunpack.c.h.b16 %v1248
      %v1529 = vunpack.c.l.b16 %v1249
      %v1530 = vunpack.c.h.b16 %v1249
      %v1531 = vunpack.c.l.b16 %v1250
      %v1532 = vunpack.c.h.b16 %v1250
      %v1533 = vunpack.c.l.b16 %v1251
      %v1534 = vunpack.c.h.b16 %v1251
      %v1535 = vunpack.c.l.b16 %v1252
      %v1536 = vunpack.c.h.b16 %v1252
      %v1537 = vunpack.c.l.b16 %v1253
      %v1538 = vunpack.c.h.b16 %v1253
      %v1539 = vunpack.c.l.b16 %v1254
      %v1540 = vunpack.c.h.b16 %v1254
      %v1541 = vunpack.c.l.b16 %v1255
      %v1542 = vunpack.c.h.b16 %v1255
      %v1543 = vunpack.c.l.b16 %v1256
      %v1544 = vunpack.c.h.b16 %v1256
      %v1545 = vunpack.c.l.b16 %v1257
      %v1546 = vunpack.c.h.b16 %v1257
      %v1547 = vunpack.c.l.b16 %v1258
      %v1548 = vunpack.c.h.b16 %v1258
      %v1549 = vunpack.c.l.b16 %v1259
      %v1550 = vunpack.c.h.b16 %v1259
      %v1551 = vunpack.c.l.b16 %v1260
      %v1552 = vunpack.c.h.b16 %v1260
      %v1553 = vunpack.c.l.b16 %v1261
      %v1554 = vunpack.c.h.b16 %v1261
      %v1555 = vunpack.c.l.b16 %v1262
      %v1556 = vunpack.c.h.b16 %v1262
      %v1557 = vunpack.c.l.b16 %v1263
      %v1558 = vunpack.c.h.b16 %v1263
      %v1559 = vunpack.c.l.b16 %v1264
      %v1560 = vunpack.c.h.b16 %v1264
      %v1561 = vunpack.c.l.b16 %v1265
      %v1562 = vunpack.c.h.b16 %v1265
      %v1563 = vunpack.c.l.b16 %v1266
      %v1564 = vunpack.c.h.b16 %v1266
      %v1565 = vunpack.c.l.b16 %v1267
      %v1566 = vunpack.c.h.b16 %v1267
      %v1567 = vunpack.c.l.b16 %v1268
      %v1568 = vunpack.c.h.b16 %v1268
      %v1569 = vunpack.c.l.b16 %v1269
      %v1570 = vunpack.c.h.b16 %v1269
      %v1571 = vunpack.c.l.b16 %v1270
      %v1572 = vunpack.c.h.b16 %v1270
      %v1573 = vunpack.c.l.b16 %v1271
      %v1574 = vunpack.c.h.b16 %v1271
      %v1575 = vunpack.c.l.b16 %v1272
      %v1576 = vunpack.c.h.b16 %v1272
      %v1577 = vunpack.c.l.b16 %v1273
      %v1578 = vunpack.c.h.b16 %v1273
      %v1579 = vunpack.c.l.b16 %v1274
      %v1580 = vunpack.c.h.b16 %v1274
      %v1581 = vunpack.c.l.b16 %v1275
      %v1582 = vunpack.c.h.b16 %v1275
      %v1583 = vunpack.c.l.b16 %v1276
      %v1584 = vunpack.c.h.b16 %v1276
      %v1585 = vunpack.c.l.b16 %v1277
      %v1586 = vunpack.c.h.b16 %v1277
      %v1587 = vunpack.c.l.b16 %v1278
      %v1588 = vunpack.c.h.b16 %v1278
      %v1589 = vunpack.c.l.b16 %v1279
      %v1590 = vunpack.c.h.b16 %v1279
      %v1591 = vunpack.c.l.b16 %v1280
      %v1592 = vunpack.c.h.b16 %v1280
      %v1593 = vunpack.c.l.b16 %v1281
      %v1594 = vunpack.c.h.b16 %v1281
      %v1595 = vunpack.c.l.b16 %v1282
      %v1596 = vunpack.c.h.b16 %v1282
      %v1597 = vunpack.c.l.b16 %v1283
      %v1598 = vunpack.c.h.b16 %v1283
      %v1599 = vunpack.c.l.b16 %v1284
      %v1600 = vunpack.c.h.b16 %v1284
      %v1601 = vunpack.c.l.b16 %v1285
      %v1602 = vunpack.c.h.b16 %v1285
      %v1603 = vunpack.c.l.b16 %v1286
      %v1604 = vunpack.c.h.b16 %v1286
      %v1605 = vunpack.c.l.b16 %v1287
      %v1606 = vunpack.c.h.b16 %v1287
      %v1607 = vunpack.c.l.b16 %v1288
      %v1608 = vunpack.c.h.b16 %v1288
      %v1609 = vunpack.c.l.b16 %v1289
      %v1610 = vunpack.c.h.b16 %v1289
      %v1611 = vunpack.c.l.b16 %v1290
      %v1612 = vunpack.c.h.b16 %v1290
      %v1613 = vunpack.c.l.b16 %v1291
      %v1614 = vunpack.c.h.b16 %v1291
      %v1615 = vunpack.c.l.b16 %v1292
      %v1616 = vunpack.c.h.b16 %v1292
      %v1617 = vunpack.c.l.b16 %v1293
      %v1618 = vunpack.c.h.b16 %v1293
      %v1619 = vunpack.c.l.b16 %v1294
      %v1620 = vunpack.c.h.b16 %v1294
      %v1621 = vunpack.c.l.b16 %v1295
      %v1622 = vunpack.c.h.b16 %v1295
      %v1623 = vunpack.c.l.b16 %v1296
      %v1624 = vunpack.c.h.b16 %v1296
      %v1625 = vunpack.c.l.b16 %v1297
      %v1626 = vunpack.c.h.b16 %v1297
      %v1627 = vunpack.c.l.b16 %v1298
      %v1628 = vunpack.c.h.b16 %v1298
      %v1629 = vunpack.c.l.b16 %v1299
      %v1630 = vunpack.c.h.b16 %v1299
      %v1631 = vunpack.c.l.b16 %v1300
      %v1632 = vunpack.c.h.b16 %v1300
      %v1633 = vunpack.c.l.b16 %v1301
      %v1634 = vunpack.c.h.b16 %v1301
      %v1635 = vunpack.c.l.b16 %v1302
      %v1636 = vunpack.c.h.b16 %v1302
      %v1637 = vunpack.c.l.b16 %v1303
      %v1638 = vunpack.c.h.b16 %v1303
      %v1639 = vunpack.c.l.b16 %v1304
      %v1640 = vunpack.c.h.b16 %v1304
      %v1641 = vunpack.c.l.b16 %v1305
      %v1642 = vunpack.c.h.b16 %v1305
      %v1643 = vunpack.c.l.b16 %v1306
      %v1644 = vunpack.c.h.b16 %v1306
      %v1645 = vunpack.c.l.b16 %v1307
      %v1646 = vunpack.c.h.b16 %v1307
      %v1647 = vunpack.c.l.b16 %v1308
      %v1648 = vunpack.c.h.b16 %v1308
      %v1649 = vunpack.c.l.b16 %v1309
      %v1650 = vunpack.c.h.b16 %v1309
      %v1651 = vunpack.c.l.b16 %v1310
      %v1652 = vunpack.c.h.b16 %v1310
      %v1653 = vunpack.c.l.b16 %v1311
      %v1654 = vunpack.c.h.b16 %v1311
      %v1655 = vunpack.c.l.b16 %v1312
      %v1656 = vunpack.c.h.b16 %v1312
      %v1657 = vunpack.c.l.b16 %v1313
      %v1658 = vunpack.c.h.b16 %v1313
      %v1659 = vunpack.c.l.b16 %v1314
      %v1660 = vunpack.c.h.b16 %v1314
      %v1661 = vunpack.c.l.b16 %v1315
      %v1662 = vunpack.c.h.b16 %v1315
      %v1663 = vunpack.c.l.b16 %v1316
      %v1664 = vunpack.c.h.b16 %v1316
      %v1665 = vunpack.c.l.b16 %v1317
      %v1666 = vunpack.c.h.b16 %v1317
      %v1667 = vunpack.c.l.b16 %v1318
      %v1668 = vunpack.c.h.b16 %v1318
      %v1669 = vunpack.c.l.b16 %v1319
      %v1670 = vunpack.c.h.b16 %v1319
      %v1671 = vunpack.c.l.b16 %v1320
      %v1672 = vunpack.c.h.b16 %v1320
      %v1673 = vunpack.c.l.b16 %v1321
      %v1674 = vunpack.c.h.b16 %v1321
      %v1675 = vunpack.c.l.b16 %v1322
      %v1676 = vunpack.c.h.b16 %v1322
      %v1677 = vunpack.c.l.b16 %v1323
      %v1678 = vunpack.c.h.b16 %v1323
      %v1679 = vunpack.c.l.b16 %v1324
      %v1680 = vunpack.c.h.b16 %v1324
      %v1681 = vunpack.c.l.b16 %v1325
      %v1682 = vunpack.c.h.b16 %v1325
      %v1683 = vunpack.c.l.b16 %v1326
      %v1684 = vunpack.c.h.b16 %v1326
      %v1685 = vunpack.c.l.b16 %v1327
      %v1686 = vunpack.c.h.b16 %v1327
      %v1687 = vunpack.c.l.b16 %v1328
      %v1688 = vunpack.c.h.b16 %v1328
      %v1689 = vunpack.c.l.b16 %v1329
      %v1690 = vunpack.c.h.b16 %v1329
      %v1691 = vunpack.c.l.b16 %v1330
      %v1692 = vunpack.c.h.b16 %v1330
      %v1693 = vunpack.c.l.b16 %v1331
      %v1694 = vunpack.c.h.b16 %v1331
      %v1695 = vunpack.c.l.b16 %v1332
      %v1696 = vunpack.c.h.b16 %v1332
      %v1697 = vunpack.c.l.b16 %v1333
      %v1698 = vunpack.c.h.b16 %v1333
      %v1699 = vunpack.c.l.b16 %v1334
      %v1700 = vunpack.c.h.b16 %v1334
      %v1701 = vunpack.c.l.b16 %v1335
      %v1702 = vunpack.c.h.b16 %v1335
      %v1703 = vunpack.c.l.b16 %v1336
      %v1704 = vunpack.c.h.b16 %v1336
      %v1705 = vunpack.c.l.b16 %v1337
      %v1706 = vunpack.c.h.b16 %v1337
      %v1707 = vunpack.c.l.b16 %v1338
      %v1708 = vunpack.c.h.b16 %v1338
      %v1709 = vunpack.c.l.b16 %v1339
      %v1710 = vunpack.c.h.b16 %v1339
      %v1711 = vunpack.c.l.b16 %v1340
      %v1712 = vunpack.c.h.b16 %v1340
      %v1713 = vunpack.c.l.b16 %v1341
      %v1714 = vunpack.c.h.b16 %v1341
      %v1715 = vunpack.c.l.b16 %v1342
      %v1716 = vunpack.c.h.b16 %v1342
      %v1717 = vunpack.c.l.b16 %v1343
      %v1718 = vunpack.c.h.b16 %v1343
      %v1719 = vunpack.c.l.b16 %v1344
      %v1720 = vunpack.c.h.b16 %v1344
      %v1721 = vunpack.c.l.b16 %v1345
      %v1722 = vunpack.c.h.b16 %v1345
      %v1723 = vunpack.c.l.b16 %v1346
      %v1724 = vunpack.c.h.b16 %v1346
      %v1725 = vunpack.c.l.b16 %v1347
      %v1726 = vunpack.c.h.b16 %v1347
      %v1727 = vunpack.c.l.b16 %v1348
      %v1728 = vunpack.c.h.b16 %v1348
      %v1729 = vunpack.c.l.b16 %v1349
      %v1730 = vunpack.c.h.b16 %v1349
      %v1731 = vunpack.c.l.b16 %v1350
      %v1732 = vunpack.c.h.b16 %v1350
      %v1733 = vunpack.c.l.b16 %v1351
      %v1734 = vunpack.c.h.b16 %v1351
      %v1735 = vunpack.c.l.b16 %v1352
      %v1736 = vunpack.c.h.b16 %v1352
      %v1737 = vunpack.c.l.b16 %v1353
      %v1738 = vunpack.c.h.b16 %v1353
      %v1739 = vunpack.c.l.b16 %v1354
      %v1740 = vunpack.c.h.b16 %v1354
      %v1741 = vunpack.c.l.b16 %v1355
      %v1742 = vunpack.c.h.b16 %v1355
      %v1743 = vunpack.c.l.b16 %v1356
      %v1744 = vunpack.c.h.b16 %v1356
      %v1745 = vunpack.c.l.b16 %v1357
      %v1746 = vunpack.c.h.b16 %v1357
      %v1747 = vunpack.c.l.b16 %v1358
      %v1748 = vunpack.c.h.b16 %v1358
      %v1749 = vunpack.c.l.b16 %v1359
      %v1750 = vunpack.c.h.b16 %v1359
      %v1751 = vunpack.c.l.b16 %v1360
      %v1752 = vunpack.c.h.b16 %v1360
      %v1753 = vunpack.c.l.b16 %v1361
      %v1754 = vunpack.c.h.b16 %v1361
      %v1755 = vunpack.c.l.b16 %v1362
      %v1756 = vunpack.c.h.b16 %v1362
      %v1757 = vunpack.c.l.b16 %v1363
      %v1758 = vunpack.c.h.b16 %v1363
      %v1759 = vunpack.c.l.b16 %v1364
      %v1760 = vunpack.c.h.b16 %v1364
      %v1761 = vpack.c.b16 %v1507, %v1505
      %v1762 = vpack.c.b16 %v1508, %v1506
      %v1763 = vpack.c.b16 %v1511, %v1509
      %v1764 = vpack.c.b16 %v1512, %v1510
      %v1765 = vpack.c.b16 %v1515, %v1513
      %v1766 = vpack.c.b16 %v1516, %v1514
      %v1767 = vpack.c.b16 %v1519, %v1517
      %v1768 = vpack.c.b16 %v1520, %v1518
      %v1769 = vpack.c.b16 %v1523, %v1521
      %v1770 = vpack.c.b16 %v1524, %v1522
      %v1771 = vpack.c.b16 %v1527, %v1525
      %v1772 = vpack.c.b16 %v1528, %v1526
      %v1773 = vpack.c.b16 %v1531, %v1529
      %v1774 = vpack.c.b16 %v1532, %v1530
      %v1775 = vpack.c.b16 %v1535, %v1533
      %v1776 = vpack.c.b16 %v1536, %v1534
      %v1777 = vpack.c.b16 %v1539, %v1537
      %v1778 = vpack.c.b16 %v1540, %v1538
      %v1779 = vpack.c.b16 %v1543, %v1541
      %v1780 = vpack.c.b16 %v1544, %v1542
      %v1781 = vpack.c.b16 %v1547, %v1545
      %v1782 = vpack.c.b16 %v1548, %v1546
      %v1783 = vpack.c.b16 %v1551, %v1549
      %v1784 = vpack.c.b16 %v1552, %v1550
      %v1785 = vpack.c.b16 %v1555, %v1553
      %v1786 = vpack.c.b16 %v1556, %v1554
      %v1787 = vpack.c.b16 %v1559, %v1557
      %v1788 = vpack.c.b16 %v1560, %v1558
      %v1789 = vpack.c.b16 %v1563, %v1561
      %v1790 = vpack.c.b16 %v1564, %v1562
      %v1791 = vpack.c.b16 %v1567, %v1565
      %v1792 = vpack.c.b16 %v1568, %v1566
      %v1793 = vpack.c.b16 %v1571, %v1569
      %v1794 = vpack.c.b16 %v1572, %v1570
      %v1795 = vpack.c.b16 %v1575, %v1573
      %v1796 = vpack.c.b16 %v1576, %v1574
      %v1797 = vpack.c.b16 %v1579, %v1577
      %v1798 = vpack.c.b16 %v1580, %v1578
      %v1799 = vpack.c.b16 %v1583, %v1581
      %v1800 = vpack.c.b16 %v1584, %v1582
      %v1801 = vpack.c.b16 %v1587, %v1585
      %v1802 = vpack.c.b16 %v1588, %v1586
      %v1803 = vpack.c.b16 %v1591, %v1589
      %v1804 = vpack.c.b16 %v1592, %v1590
      %v1805 = vpack.c.b16 %v1595, %v1593
      %v1806 = vpack.c.b16 %v1596, %v1594
      %v1807 = vpack.c.b16 %v1599, %v1597
      %v1808 = vpack.c.b16 %v1600, %v1598
      %v1809 = vpack.c.b16 %v1603, %v1601
      %v1810 = vpack.c.b16 %v1604, %v1602
      %v1811 = vpack.c.b16 %v1607, %v1605
      %v1812 = vpack.c.b16 %v1608, %v1606
      %v1813 = vpack.c.b16 %v1611, %v1609
      %v1814 = vpack.c.b16 %v1612, %v1610
      %v1815 = vpack.c.b16 %v1615, %v1613
      %v1816 = vpack.c.b16 %v1616, %v1614
      %v1817 = vpack.c.b16 %v1619, %v1617
      %v1818 = vpack.c.b16 %v1620, %v1618
      %v1819 = vpack.c.b16 %v1623, %v1621
      %v1820 = vpack.c.b16 %v1624, %v1622
      %v1821 = vpack.c.b16 %v1627, %v1625
      %v1822 = vpack.c.b16 %v1628, %v1626
      %v1823 = vpack.c.b16 %v1631, %v1629
      %v1824 = vpack.c.b16 %v1632, %v1630
      %v1825 = vpack.c.b16 %v1635, %v1633
      %v1826 = vpack.c.b16 %v1636, %v1634
      %v1827 = vpack.c.b16 %v1639, %v1637
      %v1828 = vpack.c.b16 %v1640, %v1638
      %v1829 = vpack.c.b16 %v1643, %v1641
      %v1830 = vpack.c.b16 %v1644, %v1642
      %v1831 = vpack.c.b16 %v1647, %v1645
      %v1832 = vpack.c.b16 %v1648, %v1646
      %v1833 = vpack.c.b16 %v1651, %v1649
      %v1834 = vpack.c.b16 %v1652, %v1650
      %v1835 = vpack.c.b16 %v1655, %v1653
      %v1836 = vpack.c.b16 %v1656, %v1654
      %v1837 = vpack.c.b16 %v1659, %v1657
      %v1838 = vpack.c.b16 %v1660, %v1658
      %v1839 = vpack.c.b16 %v1663, %v1661
      %v1840 = vpack.c.b16 %v1664, %v1662
      %v1841 = vpack.c.b16 %v1667, %v1665
      %v1842 = vpack.c.b16 %v1668, %v1666
      %v1843 = vpack.c.b16 %v1671, %v1669
      %v1844 = vpack.c.b16 %v1672, %v1670
      %v1845 = vpack.c.b16 %v1675, %v1673
      %v1846 = vpack.c.b16 %v1676, %v1674
      %v1847 = vpack.c.b16 %v1679, %v1677
      %v1848 = vpack.c.b16 %v1680, %v1678
      %v1849 = vpack.c.b16 %v1683, %v1681
      %v1850 = vpack.c.b16 %v1684, %v1682
      %v1851 = vpack.c.b16 %v1687, %v1685
      %v1852 = vpack.c.b16 %v1688, %v1686
      %v1853 = vpack.c.b16 %v1691, %v1689
      %v1854 = vpack.c.b16 %v1692, %v1690
      %v1855 = vpack.c.b16 %v1695, %v1693
      %v1856 = vpack.c.b16 %v1696, %v1694
      %v1857 = vpack.c.b16 %v1699, %v1697
      %v1858 = vpack.c.b16 %v1700, %v1698
      %v1859 = vpack.c.b16 %v1703, %v1701
      %v1860 = vpack.c.b16 %v1704, %v1702
      %v1861 = vpack.c.b16 %v1707, %v1705
      %v1862 = vpack.c.b16 %v1708, %v1706
      %v1863 = vpack.c.b16 %v1711, %v1709
      %v1864 = vpack.c.b16 %v1712, %v1710
      %v1865 = vpack.c.b16 %v1715, %v1713
      %v1866 = vpack.c.b16 %v1716, %v1714
      %v1867 = vpack.c.b16 %v1719, %v1717
      %v1868 = vpack.c.b16 %v1720, %v1718
      %v1869 = vpack.c.b16 %v1723, %v1721
      %v1870 = vpack.c.b16 %v1724, %v1722
      %v1871 = vpack.c.b16 %v1727, %v1725
      %v1872 = vpack.c.b16 %v1728, %v1726
      %v1873 = vpack.c.b16 %v1731, %v1729
      %v1874 = vpack.c.b16 %v1732, %v1730
      %v1875 = vpack.c.b16 %v1735, %v1733
      %v1876 = vpack.c.b16 %v1736, %v1734
      %v1877 = vpack.c.b16 %v1739, %v1737
      %v1878 = vpack.c.b16 %v1740, %v1738
      %v1879 = vpack.c.b16 %v1743, %v1741
      %v1880 = vpack.c.b16 %v1744, %v1742
      %v1881 = vpack.c.b16 %v1747, %v1745
      %v1882 = vpack.c.b16 %v1748, %v1746
      %v1883 = vpack.c.b16 %v1751, %v1749
      %v1884 = vpack.c.b16 %v1752, %v1750
      %v1885 = vpack.c.b16 %v1755, %v1753
      %v1886 = vpack.c.b16 %v1756, %v1754
      %v1887 = vpack.c.b16 %v1759, %v1757
      %v1888 = vpack.c.b16 %v1760, %v1758
      %2017 = vmatprep.subr.bf16.mxu0 %v1776
      %2018 = vmatpush1.bf16.msra.mxu0 %v1775
      %2019 = vmatprep.subr.bf16.mxu0 %v1774
      %2020 = vmatpush1.bf16.msra.mxu0 %v1773
      %2021 = vmatprep.subr.bf16.mxu0 %v1772
      %2022 = vmatpush1.bf16.msra.mxu0 %v1771
      %2023 = vmatprep.subr.bf16.mxu0 %v1770
      %2024 = vmatpush1.bf16.msra.mxu0 %v1769
      %2025 = vmatprep.subr.bf16.mxu0 %v1768
      %2026 = vmatpush1.bf16.msra.mxu0 %v1767
      %2027 = vmatprep.subr.bf16.mxu0 %v1766
      %2028 = vmatpush1.bf16.msra.mxu0 %v1765
      %2029 = vmatprep.subr.bf16.mxu0 %v1764
      %2030 = vmatpush1.bf16.msra.mxu0 %v1763
      %2031 = vmatprep.subr.bf16.mxu0 %v1762
      %2032 = vmatpush1.bf16.msra.mxu0 %v1761
      %2033 = vmatprep.subr.bf16.mxu0 %v1792
      %2034 = vmatpush2.bf16.msra.mxu0 %v1791
      %2035 = vmatprep.subr.bf16.mxu0 %v1790
      %2036 = vmatpush2.bf16.msra.mxu0 %v1789
      %2037 = vmatprep.subr.bf16.mxu0 %v1788
      %2038 = vmatpush2.bf16.msra.mxu0 %v1787
      %2039 = vmatprep.subr.bf16.mxu0 %v1786
      %2040 = vmatpush2.bf16.msra.mxu0 %v1785
      %2041 = vmatprep.subr.bf16.mxu0 %v1784
      %2042 = vmatpush2.bf16.msra.mxu0 %v1783
      %2043 = vmatprep.subr.bf16.mxu0 %v1782
      %2044 = vmatpush2.bf16.msra.mxu0 %v1781
      %2045 = vmatprep.subr.bf16.mxu0 %v1780
      %2046 = vmatpush2.bf16.msra.mxu0 %v1779
      %2047 = vmatprep.subr.bf16.mxu0 %v1778
      %2048 = vmatpush2.bf16.msra.mxu0 %v1777
      %2049 = vmatprep.mubr.bf16.mxu0 %v1222
      %2050 = vmatmul.mubr.bf16.gmra.mxu0 %v1221
      %v2051 = vpop.f32.mrf.mxu0
      %v2052 = vadd.f32 %v1370, %v2051
      %v2053 = vpop.f32.mrf.mxu0
      %v2054 = vadd.f32 %v1374, %v2053
      %v2055 = vpop.f32.mrf.mxu0
      %v2056 = vadd.f32 %v1370, %v2055
      %v2057 = vpop.f32.mrf.mxu0
      %v2058 = vadd.f32 %v1374, %v2057
      %2059 = vmatprep.mubr.bf16.mxu0 %v1230
      %2060 = vmatmul.mubr.bf16.gmra.mxu0 %v1229
      %v2061 = vpop.f32.mrf.mxu0
      %v2062 = vadd.f32 %v1370, %v2061
      %v2063 = vpop.f32.mrf.mxu0
      %v2064 = vadd.f32 %v1374, %v2063
      %v2065 = vpop.f32.mrf.mxu0
      %v2066 = vadd.f32 %v1370, %v2065
      %v2067 = vpop.f32.mrf.mxu0
      %v2068 = vadd.f32 %v1374, %v2067
      %2069 = vdwg.mxu0
      %2070 = vmatprep.subr.bf16.mxu0 %v1808
      %2071 = vmatpush1.bf16.msra.mxu0 %v1807
      %2072 = vmatprep.subr.bf16.mxu0 %v1806
      %2073 = vmatpush1.bf16.msra.mxu0 %v1805
      %2074 = vmatprep.subr.bf16.mxu0 %v1804
      %2075 = vmatpush1.bf16.msra.mxu0 %v1803
      %2076 = vmatprep.subr.bf16.mxu0 %v1802
      %2077 = vmatpush1.bf16.msra.mxu0 %v1801
      %2078 = vmatprep.subr.bf16.mxu0 %v1800
      %2079 = vmatpush1.bf16.msra.mxu0 %v1799
      %2080 = vmatprep.subr.bf16.mxu0 %v1798
      %2081 = vmatpush1.bf16.msra.mxu0 %v1797
      %2082 = vmatprep.subr.bf16.mxu0 %v1796
      %2083 = vmatpush1.bf16.msra.mxu0 %v1795
      %2084 = vmatprep.subr.bf16.mxu0 %v1794
      %2085 = vmatpush1.bf16.msra.mxu0 %v1793
      %2086 = vmatprep.subr.bf16.mxu0 %v1824
      %2087 = vmatpush2.bf16.msra.mxu0 %v1823
      %2088 = vmatprep.subr.bf16.mxu0 %v1822
      %2089 = vmatpush2.bf16.msra.mxu0 %v1821
      %2090 = vmatprep.subr.bf16.mxu0 %v1820
      %2091 = vmatpush2.bf16.msra.mxu0 %v1819
      %2092 = vmatprep.subr.bf16.mxu0 %v1818
      %2093 = vmatpush2.bf16.msra.mxu0 %v1817
      %2094 = vmatprep.subr.bf16.mxu0 %v1816
      %2095 = vmatpush2.bf16.msra.mxu0 %v1815
      %2096 = vmatprep.subr.bf16.mxu0 %v1814
      %2097 = vmatpush2.bf16.msra.mxu0 %v1813
      %2098 = vmatprep.subr.bf16.mxu0 %v1812
      %2099 = vmatpush2.bf16.msra.mxu0 %v1811
      %2100 = vmatprep.subr.bf16.mxu0 %v1810
      %2101 = vmatpush2.bf16.msra.mxu0 %v1809
      %2102 = vmatprep.mubr.bf16.mxu0 %v1224
      %2103 = vmatmul.mubr.bf16.gmra.mxu0 %v1223
      %v2104 = vpop.f32.mrf.mxu0
      %v2105 = vadd.f32 %v2052, %v2104
      %v2106 = vpop.f32.mrf.mxu0
      %v2107 = vadd.f32 %v2054, %v2106
      %v2108 = vpop.f32.mrf.mxu0
      %v2109 = vadd.f32 %v2056, %v2108
      %v2110 = vpop.f32.mrf.mxu0
      %v2111 = vadd.f32 %v2058, %v2110
      %2112 = vmatprep.mubr.bf16.mxu0 %v1232
      %2113 = vmatmul.mubr.bf16.gmra.mxu0 %v1231
      %v2114 = vpop.f32.mrf.mxu0
      %v2115 = vadd.f32 %v2062, %v2114
      %v2116 = vpop.f32.mrf.mxu0
      %v2117 = vadd.f32 %v2064, %v2116
      %v2118 = vpop.f32.mrf.mxu0
      %v2119 = vadd.f32 %v2066, %v2118
      %v2120 = vpop.f32.mrf.mxu0
      %v2121 = vadd.f32 %v2068, %v2120
      %2122 = vdwg.mxu0
      %2123 = vmatprep.subr.bf16.mxu0 %v1840
      %2124 = vmatpush1.bf16.msra.mxu0 %v1839
      %2125 = vmatprep.subr.bf16.mxu0 %v1838
      %2126 = vmatpush1.bf16.msra.mxu0 %v1837
      %2127 = vmatprep.subr.bf16.mxu0 %v1836
      %2128 = vmatpush1.bf16.msra.mxu0 %v1835
      %2129 = vmatprep.subr.bf16.mxu0 %v1834
      %2130 = vmatpush1.bf16.msra.mxu0 %v1833
      %2131 = vmatprep.subr.bf16.mxu0 %v1832
      %2132 = vmatpush1.bf16.msra.mxu0 %v1831
      %2133 = vmatprep.subr.bf16.mxu0 %v1830
      %2134 = vmatpush1.bf16.msra.mxu0 %v1829
      %2135 = vmatprep.subr.bf16.mxu0 %v1828
      %2136 = vmatpush1.bf16.msra.mxu0 %v1827
      %2137 = vmatprep.subr.bf16.mxu0 %v1826
      %2138 = vmatpush1.bf16.msra.mxu0 %v1825
      %2139 = vmatprep.subr.bf16.mxu0 %v1856
      %2140 = vmatpush2.bf16.msra.mxu0 %v1855
      %2141 = vmatprep.subr.bf16.mxu0 %v1854
      %2142 = vmatpush2.bf16.msra.mxu0 %v1853
      %2143 = vmatprep.subr.bf16.mxu0 %v1852
      %2144 = vmatpush2.bf16.msra.mxu0 %v1851
      %2145 = vmatprep.subr.bf16.mxu0 %v1850
      %2146 = vmatpush2.bf16.msra.mxu0 %v1849
      %2147 = vmatprep.subr.bf16.mxu0 %v1848
      %2148 = vmatpush2.bf16.msra.mxu0 %v1847
      %2149 = vmatprep.subr.bf16.mxu0 %v1846
      %2150 = vmatpush2.bf16.msra.mxu0 %v1845
      %2151 = vmatprep.subr.bf16.mxu0 %v1844
      %2152 = vmatpush2.bf16.msra.mxu0 %v1843
      %2153 = vmatprep.subr.bf16.mxu0 %v1842
      %2154 = vmatpush2.bf16.msra.mxu0 %v1841
      %2155 = vmatprep.mubr.bf16.mxu0 %v1226
      %2156 = vmatmul.mubr.bf16.gmra.mxu0 %v1225
      %v2157 = vpop.f32.mrf.mxu0
      %v2158 = vadd.f32 %v2105, %v2157
      %v2159 = vpop.f32.mrf.mxu0
      %v2160 = vadd.f32 %v2107, %v2159
      %v2161 = vpop.f32.mrf.mxu0
      %v2162 = vadd.f32 %v2109, %v2161
      %v2163 = vpop.f32.mrf.mxu0
      %v2164 = vadd.f32 %v2111, %v2163
      %2165 = vmatprep.mubr.bf16.mxu0 %v1234
      %2166 = vmatmul.mubr.bf16.gmra.mxu0 %v1233
      %v2167 = vpop.f32.mrf.mxu0
      %v2168 = vadd.f32 %v2115, %v2167
      %v2169 = vpop.f32.mrf.mxu0
      %v2170 = vadd.f32 %v2117, %v2169
      %v2171 = vpop.f32.mrf.mxu0
      %v2172 = vadd.f32 %v2119, %v2171
      %v2173 = vpop.f32.mrf.mxu0
      %v2174 = vadd.f32 %v2121, %v2173
      %2175 = vdwg.mxu0
      %2176 = vmatprep.subr.bf16.mxu0 %v1872
      %2177 = vmatpush1.bf16.msra.mxu0 %v1871
      %2178 = vmatprep.subr.bf16.mxu0 %v1870
      %2179 = vmatpush1.bf16.msra.mxu0 %v1869
      %2180 = vmatprep.subr.bf16.mxu0 %v1868
      %2181 = vmatpush1.bf16.msra.mxu0 %v1867
      %2182 = vmatprep.subr.bf16.mxu0 %v1866
      %2183 = vmatpush1.bf16.msra.mxu0 %v1865
      %2184 = vmatprep.subr.bf16.mxu0 %v1864
      %2185 = vmatpush1.bf16.msra.mxu0 %v1863
      %2186 = vmatprep.subr.bf16.mxu0 %v1862
      %2187 = vmatpush1.bf16.msra.mxu0 %v1861
      %2188 = vmatprep.subr.bf16.mxu0 %v1860
      %2189 = vmatpush1.bf16.msra.mxu0 %v1859
      %2190 = vmatprep.subr.bf16.mxu0 %v1858
      %2191 = vmatpush1.bf16.msra.mxu0 %v1857
      %2192 = vmatprep.subr.bf16.mxu0 %v1888
      %2193 = vmatpush2.bf16.msra.mxu0 %v1887
      %2194 = vmatprep.subr.bf16.mxu0 %v1886
      %2195 = vmatpush2.bf16.msra.mxu0 %v1885
      %2196 = vmatprep.subr.bf16.mxu0 %v1884
      %2197 = vmatpush2.bf16.msra.mxu0 %v1883
      %2198 = vmatprep.subr.bf16.mxu0 %v1882
      %2199 = vmatpush2.bf16.msra.mxu0 %v1881
      %2200 = vmatprep.subr.bf16.mxu0 %v1880
      %2201 = vmatpush2.bf16.msra.mxu0 %v1879
      %2202 = vmatprep.subr.bf16.mxu0 %v1878
      %2203 = vmatpush2.bf16.msra.mxu0 %v1877
      %2204 = vmatprep.subr.bf16.mxu0 %v1876
      %2205 = vmatpush2.bf16.msra.mxu0 %v1875
      %2206 = vmatprep.subr.bf16.mxu0 %v1874
      %2207 = vmatpush2.bf16.msra.mxu0 %v1873
      %2208 = vmatprep.mubr.bf16.mxu0 %v1228
      %2209 = vmatmul.mubr.bf16.gmra.mxu0 %v1227
      %v2210 = vpop.f32.mrf.mxu0
      %v2211 = vadd.f32 %v2158, %v2210
      %v2212 = vpop.f32.mrf.mxu0
      %v2213 = vadd.f32 %v2160, %v2212
      %v2214 = vpop.f32.mrf.mxu0
      %v2215 = vadd.f32 %v2162, %v2214
      %v2216 = vpop.f32.mrf.mxu0
      %v2217 = vadd.f32 %v2164, %v2216
      %2218 = vmatprep.mubr.bf16.mxu0 %v1236
      %2219 = vmatmul.mubr.bf16.gmra.mxu0 %v1235
      %v2220 = vpop.f32.mrf.mxu0
      %v2221 = vadd.f32 %v2168, %v2220
      %v2222 = vpop.f32.mrf.mxu0
      %v2223 = vadd.f32 %v2170, %v2222
      %v2224 = vpop.f32.mrf.mxu0
      %v2225 = vadd.f32 %v2172, %v2224
      %v2226 = vpop.f32.mrf.mxu0
      %v2227 = vadd.f32 %v2174, %v2226
      %2228 = vdwg.mxu0
      %v2229 = vmax.f32 %v2211, 0.0
      %v2230 = vmax.f32 %v2213, 0.0
      %v2231 = vmax.f32 %v2215, 0.0
      %v2232 = vmax.f32 %v2217, 0.0
      %v2233 = vmax.f32 %v2221, 0.0
      %v2234 = vmax.f32 %v2223, 0.0
      %v2235 = vmax.f32 %v2225, 0.0
      %v2236 = vmax.f32 %v2227, 0.0
      %v2237 = vpack.c.bf16 %v2231, %v2229
      %v2238 = vpack.c.bf16 %v2232, %v2230
      %v2239 = vpack.c.bf16 %v2235, %v2233
      %v2240 = vpack.c.bf16 %v2236, %v2234
      %v2241 = vld [vmem:[%s5] sm:$0xf]
      %v2242 = vld [vmem:[%s5 + $0x4] sm:$0xf]
      %v2243 = vld [vmem:[%s5 + $0x8] sm:$0xf]
      %v2244 = vld [vmem:[%s5 + $0xc] sm:$0xf]
      %v2245 = vld [vmem:[%s5 + $0x10] sm:$0xf]
      %v2246 = vld [vmem:[%s5 + $0x14] sm:$0xf]
      %v2247 = vld [vmem:[%s5 + $0x18] sm:$0xf]
      %v2248 = vld [vmem:[%s5 + $0x1c] sm:$0xf]
      %v2249 = vld [vmem:[%s5 + $0x20] sm:$0xf]
      %v2250 = vld [vmem:[%s5 + $0x24] sm:$0xf]
      %v2251 = vld [vmem:[%s5 + $0x28] sm:$0xf]
      %v2252 = vld [vmem:[%s5 + $0x2c] sm:$0xf]
      %v2253 = vld [vmem:[%s5 + $0x30] sm:$0xf]
      %v2254 = vld [vmem:[%s5 + $0x34] sm:$0xf]
      %v2255 = vld [vmem:[%s5 + $0x38] sm:$0xf]
      %v2256 = vld [vmem:[%s5 + $0x3c] sm:$0xf]
      %v2257 = vld [vmem:[%s5 + $0x40] sm:$0xf]
      %v2258 = vld [vmem:[%s5 + $0x44] sm:$0xf]
      %v2259 = vld [vmem:[%s5 + $0x48] sm:$0xf]
      %v2260 = vld [vmem:[%s5 + $0x4c] sm:$0xf]
      %v2261 = vld [vmem:[%s5 + $0x50] sm:$0xf]
      %v2262 = vld [vmem:[%s5 + $0x54] sm:$0xf]
      %v2263 = vld [vmem:[%s5 + $0x58] sm:$0xf]
      %v2264 = vld [vmem:[%s5 + $0x5c] sm:$0xf]
      %v2265 = vld [vmem:[%s5 + $0x60] sm:$0xf]
      %v2266 = vld [vmem:[%s5 + $0x64] sm:$0xf]
      %v2267 = vld [vmem:[%s5 + $0x68] sm:$0xf]
      %v2268 = vld [vmem:[%s5 + $0x6c] sm:$0xf]
      %v2269 = vld [vmem:[%s5 + $0x70] sm:$0xf]
      %v2270 = vld [vmem:[%s5 + $0x74] sm:$0xf]
      %v2271 = vld [vmem:[%s5 + $0x78] sm:$0xf]
      %v2272 = vld [vmem:[%s5 + $0x7c] sm:$0xf]
      %v2273 = vld [vmem:[%s6] sm:$0x1]
      %v2275 = vlaneseq
      %v2276 = vshrl.u32 %v2275, 7
      %v2277 = vsub.s32 0, %v2276
      %v2278 = vrot.slane %v2273, %v2277
      %v2312 = vunpack.c.l.b16 %v2241
      %v2313 = vunpack.c.l.b16 %v2242
      %v2314 = vunpack.c.l.b16 %v2243
      %v2315 = vunpack.c.l.b16 %v2244
      %v2316 = vunpack.c.l.b16 %v2245
      %v2317 = vunpack.c.l.b16 %v2246
      %v2318 = vunpack.c.l.b16 %v2247
      %v2319 = vunpack.c.l.b16 %v2248
      %v2320 = vunpack.c.l.b16 %v2249
      %v2321 = vunpack.c.l.b16 %v2250
      %v2322 = vunpack.c.l.b16 %v2251
      %v2323 = vunpack.c.l.b16 %v2252
      %v2324 = vunpack.c.l.b16 %v2253
      %v2325 = vunpack.c.l.b16 %v2254
      %v2326 = vunpack.c.l.b16 %v2255
      %v2327 = vunpack.c.l.b16 %v2256
      %v2328 = vunpack.c.l.b16 %v2257
      %v2329 = vunpack.c.l.b16 %v2258
      %v2330 = vunpack.c.l.b16 %v2259
      %v2331 = vunpack.c.l.b16 %v2260
      %v2332 = vunpack.c.l.b16 %v2261
      %v2333 = vunpack.c.l.b16 %v2262
      %v2334 = vunpack.c.l.b16 %v2263
      %v2335 = vunpack.c.l.b16 %v2264
      %v2336 = vunpack.c.l.b16 %v2265
      %v2337 = vunpack.c.l.b16 %v2266
      %v2338 = vunpack.c.l.b16 %v2267
      %v2339 = vunpack.c.l.b16 %v2268
      %v2340 = vunpack.c.l.b16 %v2269
      %v2341 = vunpack.c.l.b16 %v2270
      %v2342 = vunpack.c.l.b16 %v2271
      %v2343 = vunpack.c.l.b16 %v2272
      %v2344 = vpack.c.b16 %v2313, %v2312
      %v2345 = vpack.c.b16 %v2315, %v2314
      %v2346 = vpack.c.b16 %v2317, %v2316
      %v2347 = vpack.c.b16 %v2319, %v2318
      %v2348 = vpack.c.b16 %v2321, %v2320
      %v2349 = vpack.c.b16 %v2323, %v2322
      %v2350 = vpack.c.b16 %v2325, %v2324
      %v2351 = vpack.c.b16 %v2327, %v2326
      %v2352 = vpack.c.b16 %v2329, %v2328
      %v2353 = vpack.c.b16 %v2331, %v2330
      %v2354 = vpack.c.b16 %v2333, %v2332
      %v2355 = vpack.c.b16 %v2335, %v2334
      %v2356 = vpack.c.b16 %v2337, %v2336
      %v2357 = vpack.c.b16 %v2339, %v2338
      %v2358 = vpack.c.b16 %v2341, %v2340
      %v2359 = vpack.c.b16 %v2343, %v2342
      %2376 = vmatprep.subr.bf16.mxu0 0
      %2377 = vmatpush1.bf16.msra.mxu0 %v2351
      %2378 = vmatprep.subr.bf16.mxu0 0
      %2379 = vmatpush1.bf16.msra.mxu0 %v2350
      %2380 = vmatprep.subr.bf16.mxu0 0
      %2381 = vmatpush1.bf16.msra.mxu0 %v2349
      %2382 = vmatprep.subr.bf16.mxu0 0
      %2383 = vmatpush1.bf16.msra.mxu0 %v2348
      %2384 = vmatprep.subr.bf16.mxu0 0
      %2385 = vmatpush1.bf16.msra.mxu0 %v2347
      %2386 = vmatprep.subr.bf16.mxu0 0
      %2387 = vmatpush1.bf16.msra.mxu0 %v2346
      %2388 = vmatprep.subr.bf16.mxu0 0
      %2389 = vmatpush1.bf16.msra.mxu0 %v2345
      %2390 = vmatprep.subr.bf16.mxu0 0
      %2391 = vmatpush1.bf16.msra.mxu0 %v2344
      %2392 = vmatprep.subr.bf16.mxu0 0
      %2393 = vmatpush2.bf16.msra.mxu0 %v2359
      %2394 = vmatprep.subr.bf16.mxu0 0
      %2395 = vmatpush2.bf16.msra.mxu0 %v2358
      %2396 = vmatprep.subr.bf16.mxu0 0
      %2397 = vmatpush2.bf16.msra.mxu0 %v2357
      %2398 = vmatprep.subr.bf16.mxu0 0
      %2399 = vmatpush2.bf16.msra.mxu0 %v2356
      %2400 = vmatprep.subr.bf16.mxu0 0
      %2401 = vmatpush2.bf16.msra.mxu0 %v2355
      %2402 = vmatprep.subr.bf16.mxu0 0
      %2403 = vmatpush2.bf16.msra.mxu0 %v2354
      %2404 = vmatprep.subr.bf16.mxu0 0
      %2405 = vmatpush2.bf16.msra.mxu0 %v2353
      %2406 = vmatprep.subr.bf16.mxu0 0
      %2407 = vmatpush2.bf16.msra.mxu0 %v2352
      %2408 = vmatprep.mubr.bf16.mxu0 %v2238
      %2409 = vmatmul.mubr.bf16.gmra.mxu0 %v2237
      %v2410 = vpop.f32.mrf.mxu0
      %v2411 = vadd.f32 %v2278, %v2410
      %v2412 = vpop.f32.mrf.mxu0
      %v2413 = vpop.f32.mrf.mxu0
      %v2414 = vadd.f32 %v2278, %v2413
      %v2415 = vpop.f32.mrf.mxu0
      %2416 = vmatprep.mubr.bf16.mxu0 %v2240
      %2417 = vmatmul.mubr.bf16.gmra.mxu0 %v2239
      %v2418 = vpop.f32.mrf.mxu0
      %v2419 = vadd.f32 %v2278, %v2418
      %v2420 = vpop.f32.mrf.mxu0
      %v2421 = vpop.f32.mrf.mxu0
      %v2422 = vadd.f32 %v2278, %v2421
      %v2423 = vpop.f32.mrf.mxu0
      %2424 = vdwg.mxu0
      %v2425 = vmax.f32 %v2411, 0.0
      %v2426 = vmax.f32 %v2414, 0.0
      %v2427 = vmax.f32 %v2419, 0.0
      %v2428 = vmax.f32 %v2422, 0.0
      %v2429 = vpack.c.bf16 %v2426, %v2425
      %v2430 = vpack.c.bf16 %v2428, %v2427
      %v2431 = vld [vmem:[%s7] sm:$0xf]
      %v2432 = vld [vmem:[%s7 + $0x4] sm:$0xf]
      %v2433 = vld [vmem:[%s7 + $0x8] sm:$0xf]
      %v2434 = vld [vmem:[%s7 + $0xc] sm:$0xf]
      %v2435 = vld [vmem:[%s7 + $0x10] sm:$0xf]
      %v2436 = vld [vmem:[%s7 + $0x14] sm:$0xf]
      %v2437 = vld [vmem:[%s7 + $0x18] sm:$0xf]
      %v2438 = vld [vmem:[%s7 + $0x1c] sm:$0xf]
      %v2439 = vld [vmem:[%s7 + $0x20] sm:$0xf]
      %v2440 = vld [vmem:[%s7 + $0x24] sm:$0xf]
      %v2441 = vld [vmem:[%s7 + $0x28] sm:$0xf]
      %v2442 = vld [vmem:[%s7 + $0x2c] sm:$0xf]
      %v2443 = vld [vmem:[%s7 + $0x30] sm:$0xf]
      %v2444 = vld [vmem:[%s7 + $0x34] sm:$0xf]
      %v2445 = vld [vmem:[%s7 + $0x38] sm:$0xf]
      %v2446 = vld [vmem:[%s7 + $0x3c] sm:$0xf]
      %v2447 = vld [vmem:[%s8] sm:$0x1]
      %v2449 = vlaneseq
      %v2450 = vshrl.u32 %v2449, 7
      %v2451 = vsub.s32 0, %v2450
      %v2452 = vrot.slane %v2447, %v2451
      %v2470 = vunpack.c.l.b16 %v2431
      %v2471 = vunpack.c.l.b16 %v2432
      %v2472 = vunpack.c.l.b16 %v2433
      %v2473 = vunpack.c.l.b16 %v2434
      %v2474 = vunpack.c.l.b16 %v2435
      %v2475 = vunpack.c.l.b16 %v2436
      %v2476 = vunpack.c.l.b16 %v2437
      %v2477 = vunpack.c.l.b16 %v2438
      %v2478 = vunpack.c.l.b16 %v2439
      %v2479 = vunpack.c.l.b16 %v2440
      %v2480 = vunpack.c.l.b16 %v2441
      %v2481 = vunpack.c.l.b16 %v2442
      %v2482 = vunpack.c.l.b16 %v2443
      %v2483 = vunpack.c.l.b16 %v2444
      %v2484 = vunpack.c.l.b16 %v2445
      %v2485 = vunpack.c.l.b16 %v2446
      %v2486 = vpack.c.b16 %v2471, %v2470
      %v2487 = vpack.c.b16 %v2473, %v2472
      %v2488 = vpack.c.b16 %v2475, %v2474
      %v2489 = vpack.c.b16 %v2477, %v2476
      %v2490 = vpack.c.b16 %v2479, %v2478
      %v2491 = vpack.c.b16 %v2481, %v2480
      %v2492 = vpack.c.b16 %v2483, %v2482
      %v2493 = vpack.c.b16 %v2485, %v2484
      %2502 = vmatprep.subr.bf16.mxu0 0
      %2503 = vmatpush1.bf16.msra.mxu0 %v2493
      %2504 = vmatprep.subr.bf16.mxu0 0
      %2505 = vmatpush1.bf16.msra.mxu0 %v2492
      %2506 = vmatprep.subr.bf16.mxu0 0
      %2507 = vmatpush1.bf16.msra.mxu0 %v2491
      %2508 = vmatprep.subr.bf16.mxu0 0
      %2509 = vmatpush1.bf16.msra.mxu0 %v2490
      %2510 = vmatprep.subr.bf16.mxu0 0
      %2511 = vmatpush1.bf16.msra.mxu0 %v2489
      %2512 = vmatprep.subr.bf16.mxu0 0
      %2513 = vmatpush1.bf16.msra.mxu0 %v2488
      %2514 = vmatprep.subr.bf16.mxu0 0
      %2515 = vmatpush1.bf16.msra.mxu0 %v2487
      %2516 = vmatprep.subr.bf16.mxu0 0
      %2517 = vmatpush1.bf16.msra.mxu0 %v2486
      %2518 = vmatprep.subr.bf16.mxu0 0
      %2519 = vmatpush2.bf16.msra.mxu0 0
      %2520 = vmatprep.subr.bf16.mxu0 0
      %2521 = vmatpush2.bf16.msra.mxu0 0
      %2522 = vmatprep.subr.bf16.mxu0 0
      %2523 = vmatpush2.bf16.msra.mxu0 0
      %2524 = vmatprep.subr.bf16.mxu0 0
      %2525 = vmatpush2.bf16.msra.mxu0 0
      %2526 = vmatprep.subr.bf16.mxu0 0
      %2527 = vmatpush2.bf16.msra.mxu0 0
      %2528 = vmatprep.subr.bf16.mxu0 0
      %2529 = vmatpush2.bf16.msra.mxu0 0
      %2530 = vmatprep.subr.bf16.mxu0 0
      %2531 = vmatpush2.bf16.msra.mxu0 0
      %2532 = vmatprep.subr.bf16.mxu0 0
      %2533 = vmatpush2.bf16.msra.mxu0 0
      %2534 = vmatprep.mubr.bf16.mxu0 0
      %2535 = vmatmul.mubr.bf16.gmra.mxu0 %v2429
      %v2536 = vpop.f32.mrf.mxu0
      %v2537 = vadd.f32 %v2452, %v2536
      %v2538 = vpop.f32.mrf.mxu0
      %v2539 = vpop.f32.mrf.mxu0
      %v2540 = vadd.f32 %v2452, %v2539
      %v2541 = vpop.f32.mrf.mxu0
      %2542 = vmatprep.mubr.bf16.mxu0 0
      %2543 = vmatmul.mubr.bf16.gmra.mxu0 %v2430
      %v2544 = vpop.f32.mrf.mxu0
      %v2545 = vadd.f32 %v2452, %v2544
      %v2546 = vpop.f32.mrf.mxu0
      %v2547 = vpop.f32.mrf.mxu0
      %v2548 = vadd.f32 %v2452, %v2547
      %v2549 = vpop.f32.mrf.mxu0
      %2550 = vdwg.mxu0
      %2551 = vmax.xlane.f32.xlu0 %v2537
      %v2552 = vpop.xlane.xlu0 %2551
      %2553 = vmax.xlane.f32.xlu0 %v2540
      %v2554 = vpop.xlane.xlu0 %2553
      %2555 = vmax.xlane.f32.xlu0 %v2545
      %v2556 = vpop.xlane.xlu0 %2555
      %2557 = vmax.xlane.f32.xlu0 %v2548
      %v2558 = vpop.xlane.xlu0 %2557
      %v2559 = vsub.f32 %v2537, %v2552
      %v2560 = vsub.f32 %v2540, %v2554
      %v2561 = vsub.f32 %v2545, %v2556
      %v2562 = vsub.f32 %v2548, %v2558
      %v2563 = vmul.f32 %v2559, 1.442695
      %v2564 = vpow.pop %v2563
      %v2565 = vmul.f32 %v2560, 1.442695
      %v2566 = vpow.pop %v2565
      %v2567 = vmul.f32 %v2561, 1.442695
      %v2568 = vpow.pop %v2567
      %v2569 = vmul.f32 %v2562, 1.442695
      %v2570 = vpow.pop %v2569
      %2571 = vadd.xlane.f32.xlu0 %v2564
      %v2572 = vpop.xlane.xlu0 %2571
      %2573 = vadd.xlane.f32.xlu0 %v2566
      %v2574 = vpop.xlane.xlu0 %2573
      %2575 = vadd.xlane.f32.xlu0 %v2568
      %v2576 = vpop.xlane.xlu0 %2575
      %2577 = vadd.xlane.f32.xlu0 %v2570
      %v2578 = vpop.xlane.xlu0 %2577
      %v2579 = vlog2.pop %v2572
      %v2580 = vmul.f32 %v2579, 0.6931472
      %v2581 = vlog2.pop %v2574
      %v2582 = vmul.f32 %v2581, 0.6931472
      %v2583 = vlog2.pop %v2576
      %v2584 = vmul.f32 %v2583, 0.6931472
      %v2585 = vlog2.pop %v2578
      %v2586 = vmul.f32 %v2585, 0.6931472
      %v2587 = vsub.f32 %v2559, %v2580
      %v2588 = vsub.f32 %v2560, %v2582
      %v2589 = vsub.f32 %v2561, %v2584
      %v2590 = vsub.f32 %v2562, %v2586
      %2591 = vst [vmem:[%s337] sm:$0xff] %v2587
      %2592 = vst [vmem:[%s337 + $0x8] sm:$0xff] %v2588
      %2593 = vst [vmem:[%s337 + $0x10] sm:$0xff] %v2589
      %2594 = vst [vmem:[%s337 + $0x18] sm:$0xff] %v2590
      %s2595 = smul.u32 4, %s20
      %p2596 = scmp.lt.s32.totalorder %s2595, 7
      %s2597 = scalar_select %p2596, %s2595, 7
      %s2598 = smul.addr %s2597, 8
      %s2599 = scalar_lea.vmem %s9, %s2598
      // Predicated region
      $region57: #{dgcnn_forward.7} parent=55 // pred_check
        %p2600 = pneg %p232
      $region58: #{dgcnn_forward.7} parent=55 // pred_check_branch
        %2602 = sbr.rel (%p2600) target = $region60
      $region59: #{dgcnn_forward.7} parent=55 // pred_region
        %s2603 = smul.u32 4, %s20
      $region60: #{dgcnn_forward.7} parent=55 // pred_fallthru
        _
    $region56: #{dgcnn_forward.7} parent=5 // pred_fallthru
      _
    %p2604 = scmp.le.s32.totalorder 2, %s15
    // Predicated region
    $region61: #{dgcnn_forward.7} parent=5 // pred_check
      %p2605 = pneg %p2604
    $region62: #{dgcnn_forward.7} parent=5 // pred_check_branch
      %2607 = sbr.rel (%p2605) target = $region64
    $region63: #{dgcnn_forward.7} parent=5 // pred_region
      %s2608 = ssub.s32 %s15, 2
      // Predicated region
      $region65: #{dgcnn_forward.7} parent=63 // pred_check
        %p2609 = pneg %p238
      $region66: #{dgcnn_forward.7} parent=63 // pred_check_branch
        %2611 = sbr.rel (%p2609) target = $region68
      $region67: #{dgcnn_forward.7} parent=63 // pred_region
        %s2612 = smul.u32 4, %s21
        %p2613 = scmp.lt.s32.totalorder %s2612, 7
        %s2614 = scalar_select %p2613, %s2612, 7
        %s2615 = smul.addr %s2614, 8
        %s2616 = scalar_lea.vmem %s9, %s2615
      $region68: #{dgcnn_forward.7} parent=63 // pred_fallthru
        _
    $region64: #{dgcnn_forward.7} parent=5 // pred_fallthru
      _
  $region6: #{dgcnn_forward.7} parent=0 // loop_footer
    %s19 = sadd.s32 1, %s15
  $region7: #{dgcnn_forward.7} parent=0 // loop_footer_branch
    %14 = sbr.rel target = $region3
  $region8: #{dgcnn_forward.7} parent=0 // loop_exit
    _

</llo_original>
